<compile_context>
chip_gen: v5e
topology: v5e:2x2
jax: 0.10.0
libtpu: 0.0.40
codegen_flags: <defaults>
</compile_context>

<pallas_src>
import functools

import jax
import jax.numpy as jnp
from jax import lax
from jax.experimental import pallas as pl
from jax.experimental.pallas import tpu as pltpu


# MXU operands in bf16 (~3x MXU throughput on v6e/v7x, half the operand bytes /
# VMEM residency); accumulation stays f32 via preferred_element_type.
# Elementwise math stays f32 (v5e has no bf16 VPU/EUP).
MXU_DTYPE = jnp.bfloat16

_SQRT_2_OVER_PI = 0.7978845608028654


# ----------------------------------------------------------------------------
# small in-kernel helpers
# ----------------------------------------------------------------------------
def _mm(a, b):
    return jnp.dot(a.astype(MXU_DTYPE), b.astype(MXU_DTYPE),
                   preferred_element_type=jnp.float32)


def _dg(a, b, dims):
    return lax.dot_general(a.astype(MXU_DTYPE), b.astype(MXU_DTYPE), dims,
                           preferred_element_type=jnp.float32)


def _gelu(x):
    # tanh-approx GELU: the transcendental goes to the (otherwise idle) EUP slot.
    return 0.5 * x * (1.0 + jnp.tanh(_SQRT_2_OVER_PI * (x + 0.044715 * x * x * x)))


def _layernorm(x, gamma, beta):
    mu = jnp.mean(x, axis=-1, keepdims=True)
    xc = x - mu
    var = jnp.mean(xc * xc, axis=-1, keepdims=True)
    return xc * lax.rsqrt(var + 1e-5) * gamma + beta


def _const_spec(shape):
    nd = len(shape)
    return pl.BlockSpec(tuple(shape), lambda *_, _nd=nd: (0,) * _nd)


def _layer_spec(shape):
    # Stream dim 0 over the grid axis (one layer's weights per step, squeezed
    # out of the kernel Ref); Pallas double-buffers the DMA behind compute.
    nd = len(shape)
    return pl.BlockSpec((None,) + tuple(shape[1:]),
                        lambda l, _nd=nd: (l,) + (0,) * (_nd - 1))


_TC_COUNT = None


def _num_tensorcores():
    """Best-effort TensorCore count (2 on v7x, 1 on v5e/v6e)."""
    global _TC_COUNT
    if _TC_COUNT is not None:
        return _TC_COUNT
    n = 1
    try:
        info = pltpu.get_tpu_info()
        for attr in ("num_tensorcores", "tensorcores_per_chip", "num_cores",
                     "core_count"):
            v = getattr(info, attr, None)
            if isinstance(v, int) and v >= 1:
                n = v
                break
    except Exception:
        n = 1
    _TC_COUNT = n
    return n


def _vmem_limit_bytes(arrays):
    need = sum(int(a.size) * a.dtype.itemsize for a in arrays)
    # 2x for double-buffered streamed operands + scratch headroom; cap below
    # v7x's 64 MiB physical VMEM, never below the 16 MiB v5e scoped default.
    return int(max(16 << 20, min(2 * need + (8 << 20), 56 << 20)))


# ----------------------------------------------------------------------------
# kernel 1: layer1 conv-mixer stack + 1x1 down conv   (lane-dense (C, N*H*W))
# ----------------------------------------------------------------------------
def _convmixer_stack_kernel(x_ref, wm1_ref, wm2_ref,
                            bn1s_ref, bn1t_ref, bn2s_ref, bn2t_ref,
                            pww_ref, pwb_ref, bn3s_ref, bn3t_ref,
                            dnw_ref, dnb_ref, o_ref, *, depth1, K, W, Lb):
    h = x_ref[...]                                   # (C, Lb)  lanes = batch*spatial
    pad = K // 2

    def depthwise_bn_gelu(z, wm, s, t):
        # z: (C, Lb); wm: (K*K, C, Lb) = tap_weight * in-bounds mask; s/t: (C, 1)
        acc = jnp.zeros_like(z)
        for ki in range(K):
            for kj in range(K):
                kk = ki * K + kj
                shift = (ki - pad) * W + (kj - pad)  # flat offset of this tap
                src = z if shift == 0 else pltpu.roll(z, shift=(-shift) % Lb, axis=1)
                acc = acc + src * wm[kk]             # 2 VALU ops per tap
        return _gelu(acc * s + t)                    # Conv(+bias) -> BN(eval) -> GELU

    # TODO(synk): at production depth1 / spot counts stream layers over a grid
    # axis (as kernel 2 does) and tile the L axis instead of Python-unrolling.
    for l in range(depth1):
        y = depthwise_bn_gelu(h, wm1_ref[l], bn1s_ref[l], bn1t_ref[l])
        y = depthwise_bn_gelu(y, wm2_ref[l], bn2s_ref[l], bn2t_ref[l])
        z = y + h                                    # residual: dw(x) + x
        # pointwise: 1x1 Conv -> GELU -> BN(eval)
        h = _gelu(_mm(pww_ref[l], z) + pwb_ref[l]) * bn3s_ref[l] + bn3t_ref[l]

    # down: 1x1 conv C -> C//8 (flatten order handled by the wrapper)
    o_ref[...] = _mm(dnw_ref[...], h) + dnb_ref[...]


def _conv_masks(K, H, W, n_imgs):
    """(K*K, n_imgs*H*W) 0/1 masks marking in-bounds taps of a KxK 'same' conv."""
    HW = H * W
    pos = jnp.arange(n_imgs * HW) % HW
    hh, ww = pos // W, pos % W
    pad = K // 2
    rows = []
    for ki in range(K):
        for kj in range(K):
            dh, dw = ki - pad, kj - pad
            valid = ((hh + dh >= 0) & (hh + dh < H) & (ww + dw >= 0) & (ww + dw < W))
            rows.append(valid.astype(jnp.float32))
    return jnp.stack(rows, 0)


def convmixer_layer1_down(x_nchw, p, K):
    N, C, H, W = x_nchw.shape
    HW = H * W
    L = N * HW
    D1 = p['dw1_w'].shape[0]
    Cp = p['down_w'].shape[0]

    # Shard the batch across TensorCores only where a second core exists (v7x);
    # on single-TC chips keep one full-width lane-dense block (bigger DMAs).
    cores = _num_tensorcores()
    G = cores if (cores > 1 and N % cores == 0 and (L // cores) % 128 == 0) else 1
    Lb = L // G

    xf = jnp.transpose(x_nchw, (1, 0, 2, 3)).reshape(C, L)   # channels on sublanes
    masks = _conv_masks(K, H, W, N // G)                     # (KK, Lb), same per block

    # Fold the boundary mask into the depthwise tap weights (no f32 FMA on
    # v6e/v7x -> saves 1 VALU op per tap) and the conv bias into the BN shift.
    wm1 = p['dw1_w'][:, :, :, None] * masks[None, :, None, :]        # (D1, KK, C, Lb)
    wm2 = p['dw2_w'][:, :, :, None] * masks[None, :, None, :]
    bn1_t = (p['dw1_b'] * p['bn1_scale'] + p['bn1_shift']).reshape(D1, C, 1)
    bn2_t = (p['dw2_b'] * p['bn2_scale'] + p['bn2_shift']).reshape(D1, C, 1)

    args = [
        xf, wm1, wm2,
        p['bn1_scale'].reshape(D1, C, 1), bn1_t,
        p['bn2_scale'].reshape(D1, C, 1), bn2_t,
        p['pw_w'], p['pw_b'].reshape(D1, C, 1),
        p['bn3_scale'].reshape(D1, C, 1), p['bn3_shift'].reshape(D1, C, 1),
        p['down_w'], p['down_b'].reshape(Cp, 1),
    ]
    in_specs = ([pl.BlockSpec((C, Lb), lambda g: (0, g))]
                + [_const_spec(a.shape) for a in args[1:]])

    out = pl.pallas_call(
        functools.partial(_convmixer_stack_kernel, depth1=D1, K=K, W=W, Lb=Lb),
        out_shape=jax.ShapeDtypeStruct((Cp, L), jnp.float32),
        grid=(G,),
        in_specs=in_specs,
        out_specs=pl.BlockSpec((Cp, Lb), lambda g: (0, g)),
        compiler_params=pltpu.CompilerParams(
            dimension_semantics=("parallel",),
            vmem_limit_bytes=_vmem_limit_bytes(args)),
    )(*args)
    # nn.Flatten() order on (N, Cp, H, W) -> (N, Cp*H*W)
    # TODO(synk): for Cp > 1 emit this layout directly from the kernel (einshape).
    return out.reshape(Cp, N, HW).transpose(1, 0, 2).reshape(N, Cp * HW)


# ----------------------------------------------------------------------------
# kernel 2 (fused): layer2 transformer (depth streamed over the grid)
#                   + layer3 GraphSAGE stack + jknet LSTM + mean  (epilogue)
# ----------------------------------------------------------------------------
def _transformer_gs_lstm_kernel(x_ref, ct_ref, adj_ref,
                                ln1g_ref, ln1b_ref, qkvw_ref, outw_ref, outb_ref,
                                ln2g_ref, ln2b_ref,
                                ffw1_ref, ffb1_ref, ffw2_ref, ffb2_ref,
                                gsw_ref, wih_ref, whh_ref, lstmb_ref,
                                o_ref, g_scr,
                                *, depth2, depth3, heads, dim_head):
    l = pl.program_id(0)
    n, dim = o_ref.shape
    inner = heads * dim_head
    scale = dim_head ** -0.5

    @pl.when(l == 0)
    def _():
        g_scr[...] = x_ref[...] + ct_ref[...]            # g = x + ct (fused)

    # ---- one pre-norm transformer block; its weights are streamed per step ----
    g = g_scr[...]

    xn = _layernorm(g, ln1g_ref[...], ln1b_ref[...])
    # one MXU op for q,k,v of all heads: (3*inner, dim) x (n, dim)^T -> (3*inner, n)
    qkvw = qkvw_ref[...].reshape(3 * inner, dim)
    qkv_t = _dg(qkvw, xn, (((1,), (1,)), ((), ()))).reshape(3, heads, dim_head, n)
    q, k, v = qkv_t[0], qkv_t[1], qkv_t[2]               # each (heads, dim_head, n)

    # batched over heads -> no per-head Python loop, no 16-lane slices
    s = _dg(q, k, (((1,), (1,)), ((0,), (0,)))) * scale          # (heads, n, n)
    s = s - jnp.max(s, axis=-1, keepdims=True)
    e = jnp.exp(s)
    p = e * pl.reciprocal(jnp.sum(e, axis=-1, keepdims=True), approx=False)
    out2 = _dg(v, p, (((2,), (2,)), ((0,), (0,))))               # (heads, dim_head, n)
    attn = _dg(out2.reshape(inner, n), outw_ref[...].reshape(inner, dim),
               (((0,), (0,)), ((), ())))                         # (n, dim)
    g = g + attn + outb_ref[...]

    xn2 = _layernorm(g, ln2g_ref[...], ln2b_ref[...])
    f = _gelu(_mm(xn2, ffw1_ref[...]) + ffb1_ref[...])
    g = g + _mm(f, ffw2_ref[...]) + ffb2_ref[...]
    g_scr[...] = g

    # ---- epilogue: GraphSAGE stack + jknet LSTM; JK states never touch HBM ----
    @pl.when(l == depth2 - 1)
    def _():
        gg = g_scr[...]
        adj = adj_ref[...]
        deg = jnp.sum(adj, axis=1, keepdims=True)
        # mean aggregation; clamp degree so isolated nodes don't produce NaN/Inf.
        agg = adj * pl.reciprocal(jnp.maximum(deg, 1e-12), approx=False)

        jk = []
        for d in range(depth3):
            neigh = _mm(agg, gg)                              # (n, dim)
            hpos = jnp.maximum(_mm(neigh, gsw_ref[d]), 0.0)   # relu(neigh @ W.T)
            ssq = jnp.sum(hpos * hpos, axis=1, keepdims=True)
            gg = hpos * lax.rsqrt(jnp.maximum(ssq, 1e-24))    # row L2 normalize
            jk.append(gg)

        # jknet: 2-layer LSTM over the depth3 JK states, output[0].mean(0)
        hs = [jnp.zeros((n, dim), jnp.float32) for _ in range(2)]
        cs = [jnp.zeros((n, dim), jnp.float32) for _ in range(2)]
        acc = jnp.zeros((n, dim), jnp.float32)
        for t in range(depth3):
            xt = jk[t]
            for layer in range(2):
                gates = (_mm(xt, wih_ref[layer]) + _mm(hs[layer], whh_ref[layer])
                         + lstmb_ref[layer])
                i_g = jax.nn.sigmoid(gates[:, 0 * dim:1 * dim])
                f_g = jax.nn.sigmoid(gates[:, 1 * dim:2 * dim])
                g_g = jnp.tanh(gates[:, 2 * dim:3 * dim])
                o_g = jax.nn.sigmoid(gates[:, 3 * dim:4 * dim])
                cs[layer] = f_g * cs[layer] + i_g * g_g
                hs[layer] = o_g * jnp.tanh(cs[layer])
                xt = hs[layer]
            acc = acc + xt
        o_ref[...] = acc * (1.0 / depth3)


def transformer_gs_lstm(x, ct, adj, p2, p3, pj, heads, dim_head):
    n, dim = x.shape
    D2 = p2['qkv_w'].shape[0]
    D3 = p3['wT'].shape[0]
    mlp = p2['ff_w1'].shape[2]

    # wrapper-side re-layout so q/k/v land per-head without in-kernel shuffles
    qkvw = jnp.transpose(p2['qkv_w'], (0, 2, 1)).reshape(D2, 3, heads, dim_head, dim)
    outw = p2['out_w'].reshape(D2, heads, dim_head, dim)

    streamed = [                                 # one transformer layer per grid step
        p2['ln1_g'].reshape(D2, 1, dim), p2['ln1_b'].reshape(D2, 1, dim),
        qkvw, outw, p2['out_b'].reshape(D2, 1, dim),
        p2['ln2_g'].reshape(D2, 1, dim), p2['ln2_b'].reshape(D2, 1, dim),
        p2['ff_w1'], p2['ff_b1'].reshape(D2, 1, mlp),
        p2['ff_w2'], p2['ff_b2'].reshape(D2, 1, dim),
    ]
    resident = [                                 # small, kept resident in VMEM
        p3['wT'],                                # (D3, dim, dim)
        pj['wih'], pj['whh'], pj['b'].reshape(2, 1, 4 * dim),
    ]
    args = [x, ct, adj] + streamed + resident
    in_specs = ([_const_spec(a.shape) for a in (x, ct, adj)]
                + [_layer_spec(a.shape) for a in streamed]
                + [_const_spec(a.shape) for a in resident])

    return pl.pallas_call(
        functools.partial(_transformer_gs_lstm_kernel, depth2=D2, depth3=D3,
                          heads=heads, dim_head=dim_head),
        out_shape=jax.ShapeDtypeStruct((n, dim), jnp.float32),
        grid=(D2,),
        in_specs=in_specs,
        out_specs=_const_spec((n, dim)),
        scratch_shapes=[pltpu.VMEM((n, dim), jnp.float32)],
        compiler_params=pltpu.CompilerParams(
            dimension_semantics=("arbitrary",),
            vmem_limit_bytes=_vmem_limit_bytes(args)),
    )(*args)


# ----------------------------------------------------------------------------
# parameter init (deterministic, synthetic) -- stacked per-layer weights
# ----------------------------------------------------------------------------
class _KeyGen:
    def __init__(self, seed):
        self.key = jax.random.PRNGKey(seed)

    def __call__(self):
        self.key, sub = jax.random.split(self.key)
        return sub


def init_params(cfg):
    kg = _KeyGen(42)
    C, K, dim = cfg['channel'], cfg['kernel_size'], cfg['dim']
    D1, D2, D3 = cfg['depth1'], cfg['depth2'], cfg['depth3']
    heads, dh, mlp = cfg['heads'], cfg['dim_head'], cfg['mlp_dim']
    inner = heads * dh
    KK = K * K
    Cp = C // 8

    def nrm(shape, s=0.1):
        return (s * jax.random.normal(kg(), shape)).astype(jnp.float32)

    def bn_fold(shape):
        gamma = 1.0 + nrm(shape)
        beta = nrm(shape)
        mean = nrm(shape)
        var = 1.0 + jnp.abs(nrm(shape))
        scale = gamma / jnp.sqrt(var + 1e-5)
        shift = beta - mean * scale
        return scale, shift

    bn1_s, bn1_t = bn_fold((D1, C))
    bn2_s, bn2_t = bn_fold((D1, C))
    bn3_s, bn3_t = bn_fold((D1, C))
    layer1 = dict(
        dw1_w=nrm((D1, KK, C)), dw1_b=nrm((D1, C)),
        dw2_w=nrm((D1, KK, C)), dw2_b=nrm((D1, C)),
        pw_w=nrm((D1, C, C)), pw_b=nrm((D1, C)),           # pw_w[l] is (out_ch, in_ch)
        bn1_scale=bn1_s, bn1_shift=bn1_t,
        bn2_scale=bn2_s, bn2_shift=bn2_t,
        bn3_scale=bn3_s, bn3_shift=bn3_t,
        down_w=nrm((Cp, C)), down_b=nrm((Cp,)),            # (out_ch, in_ch)
    )

    layer2 = dict(
        ln1_g=jnp.ones((D2, dim), jnp.float32), ln1_b=jnp.zeros((D2, dim), jnp.float32),
        qkv_w=nrm((D2, dim, 3 * inner)),
        out_w=nrm((D2, inner, dim)), out_b=nrm((D2, dim)),
        ln2_g=jnp.ones((D2, dim), jnp.float32), ln2_b=jnp.zeros((D2, dim), jnp.float32),
        ff_w1=nrm((D2, dim, mlp)), ff_b1=nrm((D2, mlp)),
        ff_w2=nrm((D2, mlp, dim)), ff_b2=nrm((D2, dim)),
    )

    layer3 = dict(wT=nrm((D3, dim, dim)))
    jknet = dict(wih=nrm((2, dim, 4 * dim)), whh=nrm((2, dim, 4 * dim)),
                 b=nrm((2, 4 * dim)))
    return dict(layer1=layer1, layer2=layer2, layer3=layer3, jknet=jknet)


# ----------------------------------------------------------------------------
# ViT forward (thin JAX glue between the 2 fused Pallas kernels)
# ----------------------------------------------------------------------------
def vit_forward(params, cfg, x_nchw, ct, adj):
    # nn.Dropout(p=0.0) is the identity.
    d = convmixer_layer1_down(x_nchw, params['layer1'], cfg['kernel_size'])   # (N, dim)
    return transformer_gs_lstm(d, ct[0], adj,
                               params['layer2'], params['layer3'], params['jknet'],
                               cfg['heads'], cfg['dim_head'])                 # (N, dim)


# ----------------------------------------------------------------------------
if __name__ == "__main__":
    cfg = dict(channel=8, kernel_size=3, H=8, W=8, dim=64,
               depth1=2, depth2=2, depth3=2, heads=4, dim_head=16, mlp_dim=64)
    assert cfg['dim'] == (cfg['channel'] // 8) * cfg['H'] * cfg['W']

    params = init_params(cfg)

    key = jax.random.PRNGKey(0)
    k1, k2 = jax.random.split(key)
    n_spots = 8
    x = jax.random.normal(k1, (n_spots, cfg['channel'], cfg['H'], cfg['W']), jnp.float32)
    ct = 0.1 * jax.random.normal(k2, (1, n_spots, cfg['dim']), jnp.float32)
    eye = jnp.eye(n_spots, dtype=jnp.float32)
    adj = eye + jnp.roll(eye, 1, axis=1) + jnp.roll(eye, -1, axis=1)   # ring graph + self loops

    fwd = jax.jit(lambda p, a, b, c: vit_forward(p, cfg, a, b, c))
    out = jax.block_until_ready(fwd(params, x, ct, adj))
    assert out.shape == (n_spots, cfg['dim'])
    assert bool(jnp.all(jnp.isfinite(out)))
    print("KERNEL_OK")
</pallas_src>

<mosaic_0001>
module attributes {stable_mosaic.version = 11 : i64} {
  func.func @_convmixer_stack_kernel(%arg0: i32, %arg1: memref<8x512xf32, #tpu.memory_space<vmem>>, %arg2: memref<2x9x8x512xf32, #tpu.memory_space<vmem>>, %arg3: memref<2x9x8x512xf32, #tpu.memory_space<vmem>>, %arg4: memref<2x8x1xf32, #tpu.memory_space<vmem>>, %arg5: memref<2x8x1xf32, #tpu.memory_space<vmem>>, %arg6: memref<2x8x1xf32, #tpu.memory_space<vmem>>, %arg7: memref<2x8x1xf32, #tpu.memory_space<vmem>>, %arg8: memref<2x8x8xf32, #tpu.memory_space<vmem>>, %arg9: memref<2x8x1xf32, #tpu.memory_space<vmem>>, %arg10: memref<2x8x1xf32, #tpu.memory_space<vmem>>, %arg11: memref<2x8x1xf32, #tpu.memory_space<vmem>>, %arg12: memref<1x8xf32, #tpu.memory_space<vmem>>, %arg13: memref<1x1xf32, #tpu.memory_space<vmem>>, %arg14: memref<1x512xf32, #tpu.memory_space<vmem>>) attributes {dimension_semantics = [#tpu.dimension_semantics<parallel>], iteration_bounds = array<i64: 1>, scalar_prefetch = 0 : i64, scratch_operands = 0 : i64, tpu.core_type = #tpu.core_type<tc>, window_params = [{transform_indices = @transform_0, window_bounds = array<i64: 8, 512>}, {pipeline_mode = #tpu.pipeline_mode<synchronous>, transform_indices = @transform_1, window_bounds = array<i64: 2, 9, 8, 512>}, {pipeline_mode = #tpu.pipeline_mode<synchronous>, transform_indices = @transform_2, window_bounds = array<i64: 2, 9, 8, 512>}, {pipeline_mode = #tpu.pipeline_mode<synchronous>, transform_indices = @transform_3, window_bounds = array<i64: 2, 8, 1>}, {pipeline_mode = #tpu.pipeline_mode<synchronous>, transform_indices = @transform_4, window_bounds = array<i64: 2, 8, 1>}, {pipeline_mode = #tpu.pipeline_mode<synchronous>, transform_indices = @transform_5, window_bounds = array<i64: 2, 8, 1>}, {pipeline_mode = #tpu.pipeline_mode<synchronous>, transform_indices = @transform_6, window_bounds = array<i64: 2, 8, 1>}, {pipeline_mode = #tpu.pipeline_mode<synchronous>, transform_indices = @transform_7, window_bounds = array<i64: 2, 8, 8>}, {pipeline_mode = #tpu.pipeline_mode<synchronous>, transform_indices = @transform_8, window_bounds = array<i64: 2, 8, 1>}, {pipeline_mode = #tpu.pipeline_mode<synchronous>, transform_indices = @transform_9, window_bounds = array<i64: 2, 8, 1>}, {pipeline_mode = #tpu.pipeline_mode<synchronous>, transform_indices = @transform_10, window_bounds = array<i64: 2, 8, 1>}, {pipeline_mode = #tpu.pipeline_mode<synchronous>, transform_indices = @transform_11, window_bounds = array<i64: 1, 8>}, {pipeline_mode = #tpu.pipeline_mode<synchronous>, transform_indices = @transform_12, window_bounds = array<i64: 1, 1>}, {transform_indices = @transform_13, window_bounds = array<i64: 1, 512>}]} {
    %c0 = arith.constant 0 : index
    %c0_0 = arith.constant 0 : index
    %0 = vector.load %arg1[%c0, %c0_0] : memref<8x512xf32, #tpu.memory_space<vmem>>, vector<8x512xf32>
    %c0_1 = arith.constant 0 : index
    %c0_2 = arith.constant 0 : index
    %c0_3 = arith.constant 0 : index
    %c0_4 = arith.constant 0 : index
    %1 = vector.load %arg2[%c0_1, %c0_2, %c0_3, %c0_4] : memref<2x9x8x512xf32, #tpu.memory_space<vmem>>, vector<1x9x8x512xf32>
    %2 = vector.shape_cast %1 : vector<1x9x8x512xf32> to vector<9x8x512xf32>
    %c0_5 = arith.constant 0 : index
    %c0_6 = arith.constant 0 : index
    %c0_7 = arith.constant 0 : index
    %3 = vector.load %arg4[%c0_5, %c0_6, %c0_7] : memref<2x8x1xf32, #tpu.memory_space<vmem>>, vector<1x8x1xf32>
    %4 = vector.shape_cast %3 : vector<1x8x1xf32> to vector<8x1xf32>
    %c0_8 = arith.constant 0 : index
    %c0_9 = arith.constant 0 : index
    %c0_10 = arith.constant 0 : index
    %5 = vector.load %arg5[%c0_8, %c0_9, %c0_10] : memref<2x8x1xf32, #tpu.memory_space<vmem>>, vector<1x8x1xf32>
    %6 = vector.shape_cast %5 : vector<1x8x1xf32> to vector<8x1xf32>
    %cst = arith.constant 0.000000e+00 : f32
    %7 = vector.broadcast %cst : f32 to vector<8x512xf32>
    %c9_i32 = arith.constant 9 : i32
    %8 = tpu.dynamic_rotate %0 by %c9_i32 dim 1 : vector<8x512xf32>, i32 -> vector<8x512xf32>
    %9 = vector.extract_strided_slice %2 {offsets = [0, 0, 0], sizes = [1, 8, 512], strides = [1, 1, 1]} : vector<9x8x512xf32> to vector<1x8x512xf32>
    %10 = vector.shape_cast %9 : vector<1x8x512xf32> to vector<8x512xf32>
    %11 = arith.mulf %8, %10 : vector<8x512xf32>
    %12 = arith.addf %7, %11 : vector<8x512xf32>
    %c8_i32 = arith.constant 8 : i32
    %13 = tpu.dynamic_rotate %0 by %c8_i32 dim 1 : vector<8x512xf32>, i32 -> vector<8x512xf32>
    %14 = vector.extract_strided_slice %2 {offsets = [1, 0, 0], sizes = [1, 8, 512], strides = [1, 1, 1]} : vector<9x8x512xf32> to vector<1x8x512xf32>
    %15 = vector.shape_cast %14 : vector<1x8x512xf32> to vector<8x512xf32>
    %16 = arith.mulf %13, %15 : vector<8x512xf32>
    %17 = arith.addf %12, %16 : vector<8x512xf32>
    %c7_i32 = arith.constant 7 : i32
    %18 = tpu.dynamic_rotate %0 by %c7_i32 dim 1 : vector<8x512xf32>, i32 -> vector<8x512xf32>
    %19 = vector.extract_strided_slice %2 {offsets = [2, 0, 0], sizes = [1, 8, 512], strides = [1, 1, 1]} : vector<9x8x512xf32> to vector<1x8x512xf32>
    %20 = vector.shape_cast %19 : vector<1x8x512xf32> to vector<8x512xf32>
    %21 = arith.mulf %18, %20 : vector<8x512xf32>
    %22 = arith.addf %17, %21 : vector<8x512xf32>
    %c1_i32 = arith.constant 1 : i32
    %23 = tpu.dynamic_rotate %0 by %c1_i32 dim 1 : vector<8x512xf32>, i32 -> vector<8x512xf32>
    %24 = vector.extract_strided_slice %2 {offsets = [3, 0, 0], sizes = [1, 8, 512], strides = [1, 1, 1]} : vector<9x8x512xf32> to vector<1x8x512xf32>
    %25 = vector.shape_cast %24 : vector<1x8x512xf32> to vector<8x512xf32>
    %26 = arith.mulf %23, %25 : vector<8x512xf32>
    %27 = arith.addf %22, %26 : vector<8x512xf32>
    %28 = vector.extract_strided_slice %2 {offsets = [4, 0, 0], sizes = [1, 8, 512], strides = [1, 1, 1]} : vector<9x8x512xf32> to vector<1x8x512xf32>
    %29 = vector.shape_cast %28 : vector<1x8x512xf32> to vector<8x512xf32>
    %30 = arith.mulf %0, %29 : vector<8x512xf32>
    %31 = arith.addf %27, %30 : vector<8x512xf32>
    %c511_i32 = arith.constant 511 : i32
    %32 = tpu.dynamic_rotate %0 by %c511_i32 dim 1 : vector<8x512xf32>, i32 -> vector<8x512xf32>
    %33 = vector.extract_strided_slice %2 {offsets = [5, 0, 0], sizes = [1, 8, 512], strides = [1, 1, 1]} : vector<9x8x512xf32> to vector<1x8x512xf32>
    %34 = vector.shape_cast %33 : vector<1x8x512xf32> to vector<8x512xf32>
    %35 = arith.mulf %32, %34 : vector<8x512xf32>
    %36 = arith.addf %31, %35 : vector<8x512xf32>
    %c505_i32 = arith.constant 505 : i32
    %37 = tpu.dynamic_rotate %0 by %c505_i32 dim 1 : vector<8x512xf32>, i32 -> vector<8x512xf32>
    %38 = vector.extract_strided_slice %2 {offsets = [6, 0, 0], sizes = [1, 8, 512], strides = [1, 1, 1]} : vector<9x8x512xf32> to vector<1x8x512xf32>
    %39 = vector.shape_cast %38 : vector<1x8x512xf32> to vector<8x512xf32>
    %40 = arith.mulf %37, %39 : vector<8x512xf32>
    %41 = arith.addf %36, %40 : vector<8x512xf32>
    %c504_i32 = arith.constant 504 : i32
    %42 = tpu.dynamic_rotate %0 by %c504_i32 dim 1 : vector<8x512xf32>, i32 -> vector<8x512xf32>
    %43 = vector.extract_strided_slice %2 {offsets = [7, 0, 0], sizes = [1, 8, 512], strides = [1, 1, 1]} : vector<9x8x512xf32> to vector<1x8x512xf32>
    %44 = vector.shape_cast %43 : vector<1x8x512xf32> to vector<8x512xf32>
    %45 = arith.mulf %42, %44 : vector<8x512xf32>
    %46 = arith.addf %41, %45 : vector<8x512xf32>
    %c503_i32 = arith.constant 503 : i32
    %47 = tpu.dynamic_rotate %0 by %c503_i32 dim 1 : vector<8x512xf32>, i32 -> vector<8x512xf32>
    %48 = vector.extract_strided_slice %2 {offsets = [8, 0, 0], sizes = [1, 8, 512], strides = [1, 1, 1]} : vector<9x8x512xf32> to vector<1x8x512xf32>
    %49 = vector.shape_cast %48 : vector<1x8x512xf32> to vector<8x512xf32>
    %50 = arith.mulf %47, %49 : vector<8x512xf32>
    %51 = arith.addf %46, %50 : vector<8x512xf32>
    %52 = vector.broadcast %4 : vector<8x1xf32> to vector<8x512xf32>
    %53 = arith.mulf %51, %52 : vector<8x512xf32>
    %54 = vector.broadcast %6 : vector<8x1xf32> to vector<8x512xf32>
    %55 = arith.addf %53, %54 : vector<8x512xf32>
    %cst_11 = arith.constant 5.000000e-01 : f32
    %56 = vector.broadcast %cst_11 : f32 to vector<8x512xf32>
    %57 = arith.mulf %56, %55 : vector<8x512xf32>
    %cst_12 = arith.constant 4.471500e-02 : f32
    %58 = vector.broadcast %cst_12 : f32 to vector<8x512xf32>
    %59 = arith.mulf %58, %55 : vector<8x512xf32>
    %60 = arith.mulf %59, %55 : vector<8x512xf32>
    %61 = arith.mulf %60, %55 : vector<8x512xf32>
    %62 = arith.addf %55, %61 : vector<8x512xf32>
    %cst_13 = arith.constant 0.797884583 : f32
    %63 = vector.broadcast %cst_13 : f32 to vector<8x512xf32>
    %64 = arith.mulf %63, %62 : vector<8x512xf32>
    %65 = math.tanh %64 : vector<8x512xf32>
    %cst_14 = arith.constant 1.000000e+00 : f32
    %66 = vector.broadcast %cst_14 : f32 to vector<8x512xf32>
    %67 = arith.addf %66, %65 : vector<8x512xf32>
    %68 = arith.mulf %57, %67 : vector<8x512xf32>
    %c0_15 = arith.constant 0 : index
    %c0_16 = arith.constant 0 : index
    %c0_17 = arith.constant 0 : index
    %c0_18 = arith.constant 0 : index
    %69 = vector.load %arg3[%c0_15, %c0_16, %c0_17, %c0_18] : memref<2x9x8x512xf32, #tpu.memory_space<vmem>>, vector<1x9x8x512xf32>
    %70 = vector.shape_cast %69 : vector<1x9x8x512xf32> to vector<9x8x512xf32>
    %c0_19 = arith.constant 0 : index
    %c0_20 = arith.constant 0 : index
    %c0_21 = arith.constant 0 : index
    %71 = vector.load %arg6[%c0_19, %c0_20, %c0_21] : memref<2x8x1xf32, #tpu.memory_space<vmem>>, vector<1x8x1xf32>
    %72 = vector.shape_cast %71 : vector<1x8x1xf32> to vector<8x1xf32>
    %c0_22 = arith.constant 0 : index
    %c0_23 = arith.constant 0 : index
    %c0_24 = arith.constant 0 : index
    %73 = vector.load %arg7[%c0_22, %c0_23, %c0_24] : memref<2x8x1xf32, #tpu.memory_space<vmem>>, vector<1x8x1xf32>
    %74 = vector.shape_cast %73 : vector<1x8x1xf32> to vector<8x1xf32>
    %cst_25 = arith.constant 0.000000e+00 : f32
    %75 = vector.broadcast %cst_25 : f32 to vector<8x512xf32>
    %c9_i32_26 = arith.constant 9 : i32
    %76 = tpu.dynamic_rotate %68 by %c9_i32_26 dim 1 : vector<8x512xf32>, i32 -> vector<8x512xf32>
    %77 = vector.extract_strided_slice %70 {offsets = [0, 0, 0], sizes = [1, 8, 512], strides = [1, 1, 1]} : vector<9x8x512xf32> to vector<1x8x512xf32>
    %78 = vector.shape_cast %77 : vector<1x8x512xf32> to vector<8x512xf32>
    %79 = arith.mulf %76, %78 : vector<8x512xf32>
    %80 = arith.addf %75, %79 : vector<8x512xf32>
    %c8_i32_27 = arith.constant 8 : i32
    %81 = tpu.dynamic_rotate %68 by %c8_i32_27 dim 1 : vector<8x512xf32>, i32 -> vector<8x512xf32>
    %82 = vector.extract_strided_slice %70 {offsets = [1, 0, 0], sizes = [1, 8, 512], strides = [1, 1, 1]} : vector<9x8x512xf32> to vector<1x8x512xf32>
    %83 = vector.shape_cast %82 : vector<1x8x512xf32> to vector<8x512xf32>
    %84 = arith.mulf %81, %83 : vector<8x512xf32>
    %85 = arith.addf %80, %84 : vector<8x512xf32>
    %c7_i32_28 = arith.constant 7 : i32
    %86 = tpu.dynamic_rotate %68 by %c7_i32_28 dim 1 : vector<8x512xf32>, i32 -> vector<8x512xf32>
    %87 = vector.extract_strided_slice %70 {offsets = [2, 0, 0], sizes = [1, 8, 512], strides = [1, 1, 1]} : vector<9x8x512xf32> to vector<1x8x512xf32>
    %88 = vector.shape_cast %87 : vector<1x8x512xf32> to vector<8x512xf32>
    %89 = arith.mulf %86, %88 : vector<8x512xf32>
    %90 = arith.addf %85, %89 : vector<8x512xf32>
    %c1_i32_29 = arith.constant 1 : i32
    %91 = tpu.dynamic_rotate %68 by %c1_i32_29 dim 1 : vector<8x512xf32>, i32 -> vector<8x512xf32>
    %92 = vector.extract_strided_slice %70 {offsets = [3, 0, 0], sizes = [1, 8, 512], strides = [1, 1, 1]} : vector<9x8x512xf32> to vector<1x8x512xf32>
    %93 = vector.shape_cast %92 : vector<1x8x512xf32> to vector<8x512xf32>
    %94 = arith.mulf %91, %93 : vector<8x512xf32>
    %95 = arith.addf %90, %94 : vector<8x512xf32>
    %96 = vector.extract_strided_slice %70 {offsets = [4, 0, 0], sizes = [1, 8, 512], strides = [1, 1, 1]} : vector<9x8x512xf32> to vector<1x8x512xf32>
    %97 = vector.shape_cast %96 : vector<1x8x512xf32> to vector<8x512xf32>
    %98 = arith.mulf %68, %97 : vector<8x512xf32>
    %99 = arith.addf %95, %98 : vector<8x512xf32>
    %c511_i32_30 = arith.constant 511 : i32
    %100 = tpu.dynamic_rotate %68 by %c511_i32_30 dim 1 : vector<8x512xf32>, i32 -> vector<8x512xf32>
    %101 = vector.extract_strided_slice %70 {offsets = [5, 0, 0], sizes = [1, 8, 512], strides = [1, 1, 1]} : vector<9x8x512xf32> to vector<1x8x512xf32>
    %102 = vector.shape_cast %101 : vector<1x8x512xf32> to vector<8x512xf32>
    %103 = arith.mulf %100, %102 : vector<8x512xf32>
    %104 = arith.addf %99, %103 : vector<8x512xf32>
    %c505_i32_31 = arith.constant 505 : i32
    %105 = tpu.dynamic_rotate %68 by %c505_i32_31 dim 1 : vector<8x512xf32>, i32 -> vector<8x512xf32>
    %106 = vector.extract_strided_slice %70 {offsets = [6, 0, 0], sizes = [1, 8, 512], strides = [1, 1, 1]} : vector<9x8x512xf32> to vector<1x8x512xf32>
    %107 = vector.shape_cast %106 : vector<1x8x512xf32> to vector<8x512xf32>
    %108 = arith.mulf %105, %107 : vector<8x512xf32>
    %109 = arith.addf %104, %108 : vector<8x512xf32>
    %c504_i32_32 = arith.constant 504 : i32
    %110 = tpu.dynamic_rotate %68 by %c504_i32_32 dim 1 : vector<8x512xf32>, i32 -> vector<8x512xf32>
    %111 = vector.extract_strided_slice %70 {offsets = [7, 0, 0], sizes = [1, 8, 512], strides = [1, 1, 1]} : vector<9x8x512xf32> to vector<1x8x512xf32>
    %112 = vector.shape_cast %111 : vector<1x8x512xf32> to vector<8x512xf32>
    %113 = arith.mulf %110, %112 : vector<8x512xf32>
    %114 = arith.addf %109, %113 : vector<8x512xf32>
    %c503_i32_33 = arith.constant 503 : i32
    %115 = tpu.dynamic_rotate %68 by %c503_i32_33 dim 1 : vector<8x512xf32>, i32 -> vector<8x512xf32>
    %116 = vector.extract_strided_slice %70 {offsets = [8, 0, 0], sizes = [1, 8, 512], strides = [1, 1, 1]} : vector<9x8x512xf32> to vector<1x8x512xf32>
    %117 = vector.shape_cast %116 : vector<1x8x512xf32> to vector<8x512xf32>
    %118 = arith.mulf %115, %117 : vector<8x512xf32>
    %119 = arith.addf %114, %118 : vector<8x512xf32>
    %120 = vector.broadcast %72 : vector<8x1xf32> to vector<8x512xf32>
    %121 = arith.mulf %119, %120 : vector<8x512xf32>
    %122 = vector.broadcast %74 : vector<8x1xf32> to vector<8x512xf32>
    %123 = arith.addf %121, %122 : vector<8x512xf32>
    %cst_34 = arith.constant 5.000000e-01 : f32
    %124 = vector.broadcast %cst_34 : f32 to vector<8x512xf32>
    %125 = arith.mulf %124, %123 : vector<8x512xf32>
    %cst_35 = arith.constant 4.471500e-02 : f32
    %126 = vector.broadcast %cst_35 : f32 to vector<8x512xf32>
    %127 = arith.mulf %126, %123 : vector<8x512xf32>
    %128 = arith.mulf %127, %123 : vector<8x512xf32>
    %129 = arith.mulf %128, %123 : vector<8x512xf32>
    %130 = arith.addf %123, %129 : vector<8x512xf32>
    %cst_36 = arith.constant 0.797884583 : f32
    %131 = vector.broadcast %cst_36 : f32 to vector<8x512xf32>
    %132 = arith.mulf %131, %130 : vector<8x512xf32>
    %133 = math.tanh %132 : vector<8x512xf32>
    %cst_37 = arith.constant 1.000000e+00 : f32
    %134 = vector.broadcast %cst_37 : f32 to vector<8x512xf32>
    %135 = arith.addf %134, %133 : vector<8x512xf32>
    %136 = arith.mulf %125, %135 : vector<8x512xf32>
    %137 = arith.addf %136, %0 : vector<8x512xf32>
    %c0_38 = arith.constant 0 : index
    %c0_39 = arith.constant 0 : index
    %c0_40 = arith.constant 0 : index
    %138 = vector.load %arg8[%c0_38, %c0_39, %c0_40] : memref<2x8x8xf32, #tpu.memory_space<vmem>>, vector<1x8x8xf32>
    %139 = vector.shape_cast %138 : vector<1x8x8xf32> to vector<8x8xf32>
    %140 = arith.truncf %139 : vector<8x8xf32> to vector<8x8xbf16>
    %141 = arith.truncf %137 : vector<8x512xf32> to vector<8x512xbf16>
    %cst_41 = arith.constant dense<0.000000e+00> : vector<8x512xf32>
    %142 = tpu.matmul %140, %141, %cst_41 {dimension_numbers = #tpu.dot_dimension_numbers<[1], [0], [0], [1], [0, 0, 1, 1], [], []>} : vector<8x8xbf16>, vector<8x512xbf16>, vector<8x512xf32> -> vector<8x512xf32>
    %c0_42 = arith.constant 0 : index
    %c0_43 = arith.constant 0 : index
    %c0_44 = arith.constant 0 : index
    %143 = vector.load %arg9[%c0_42, %c0_43, %c0_44] : memref<2x8x1xf32, #tpu.memory_space<vmem>>, vector<1x8x1xf32>
    %144 = vector.shape_cast %143 : vector<1x8x1xf32> to vector<8x1xf32>
    %145 = vector.broadcast %144 : vector<8x1xf32> to vector<8x512xf32>
    %146 = arith.addf %142, %145 : vector<8x512xf32>
    %cst_45 = arith.constant 5.000000e-01 : f32
    %147 = vector.broadcast %cst_45 : f32 to vector<8x512xf32>
    %148 = arith.mulf %147, %146 : vector<8x512xf32>
    %cst_46 = arith.constant 4.471500e-02 : f32
    %149 = vector.broadcast %cst_46 : f32 to vector<8x512xf32>
    %150 = arith.mulf %149, %146 : vector<8x512xf32>
    %151 = arith.mulf %150, %146 : vector<8x512xf32>
    %152 = arith.mulf %151, %146 : vector<8x512xf32>
    %153 = arith.addf %146, %152 : vector<8x512xf32>
    %cst_47 = arith.constant 0.797884583 : f32
    %154 = vector.broadcast %cst_47 : f32 to vector<8x512xf32>
    %155 = arith.mulf %154, %153 : vector<8x512xf32>
    %156 = math.tanh %155 : vector<8x512xf32>
    %cst_48 = arith.constant 1.000000e+00 : f32
    %157 = vector.broadcast %cst_48 : f32 to vector<8x512xf32>
    %158 = arith.addf %157, %156 : vector<8x512xf32>
    %159 = arith.mulf %148, %158 : vector<8x512xf32>
    %c0_49 = arith.constant 0 : index
    %c0_50 = arith.constant 0 : index
    %c0_51 = arith.constant 0 : index
    %160 = vector.load %arg10[%c0_49, %c0_50, %c0_51] : memref<2x8x1xf32, #tpu.memory_space<vmem>>, vector<1x8x1xf32>
    %161 = vector.shape_cast %160 : vector<1x8x1xf32> to vector<8x1xf32>
    %162 = vector.broadcast %161 : vector<8x1xf32> to vector<8x512xf32>
    %163 = arith.mulf %159, %162 : vector<8x512xf32>
    %c0_52 = arith.constant 0 : index
    %c0_53 = arith.constant 0 : index
    %c0_54 = arith.constant 0 : index
    %164 = vector.load %arg11[%c0_52, %c0_53, %c0_54] : memref<2x8x1xf32, #tpu.memory_space<vmem>>, vector<1x8x1xf32>
    %165 = vector.shape_cast %164 : vector<1x8x1xf32> to vector<8x1xf32>
    %166 = vector.broadcast %165 : vector<8x1xf32> to vector<8x512xf32>
    %167 = arith.addf %163, %166 : vector<8x512xf32>
    %c1 = arith.constant 1 : index
    %c0_55 = arith.constant 0 : index
    %c0_56 = arith.constant 0 : index
    %c0_57 = arith.constant 0 : index
    %168 = vector.load %arg2[%c1, %c0_55, %c0_56, %c0_57] : memref<2x9x8x512xf32, #tpu.memory_space<vmem>>, vector<1x9x8x512xf32>
    %169 = vector.shape_cast %168 : vector<1x9x8x512xf32> to vector<9x8x512xf32>
    %c1_58 = arith.constant 1 : index
    %c0_59 = arith.constant 0 : index
    %c0_60 = arith.constant 0 : index
    %170 = vector.load %arg4[%c1_58, %c0_59, %c0_60] : memref<2x8x1xf32, #tpu.memory_space<vmem>>, vector<1x8x1xf32>
    %171 = vector.shape_cast %170 : vector<1x8x1xf32> to vector<8x1xf32>
    %c1_61 = arith.constant 1 : index
    %c0_62 = arith.constant 0 : index
    %c0_63 = arith.constant 0 : index
    %172 = vector.load %arg5[%c1_61, %c0_62, %c0_63] : memref<2x8x1xf32, #tpu.memory_space<vmem>>, vector<1x8x1xf32>
    %173 = vector.shape_cast %172 : vector<1x8x1xf32> to vector<8x1xf32>
    %cst_64 = arith.constant 0.000000e+00 : f32
    %174 = vector.broadcast %cst_64 : f32 to vector<8x512xf32>
    %c9_i32_65 = arith.constant 9 : i32
    %175 = tpu.dynamic_rotate %167 by %c9_i32_65 dim 1 : vector<8x512xf32>, i32 -> vector<8x512xf32>
    %176 = vector.extract_strided_slice %169 {offsets = [0, 0, 0], sizes = [1, 8, 512], strides = [1, 1, 1]} : vector<9x8x512xf32> to vector<1x8x512xf32>
    %177 = vector.shape_cast %176 : vector<1x8x512xf32> to vector<8x512xf32>
    %178 = arith.mulf %175, %177 : vector<8x512xf32>
    %179 = arith.addf %174, %178 : vector<8x512xf32>
    %c8_i32_66 = arith.constant 8 : i32
    %180 = tpu.dynamic_rotate %167 by %c8_i32_66 dim 1 : vector<8x512xf32>, i32 -> vector<8x512xf32>
    %181 = vector.extract_strided_slice %169 {offsets = [1, 0, 0], sizes = [1, 8, 512], strides = [1, 1, 1]} : vector<9x8x512xf32> to vector<1x8x512xf32>
    %182 = vector.shape_cast %181 : vector<1x8x512xf32> to vector<8x512xf32>
    %183 = arith.mulf %180, %182 : vector<8x512xf32>
    %184 = arith.addf %179, %183 : vector<8x512xf32>
    %c7_i32_67 = arith.constant 7 : i32
    %185 = tpu.dynamic_rotate %167 by %c7_i32_67 dim 1 : vector<8x512xf32>, i32 -> vector<8x512xf32>
    %186 = vector.extract_strided_slice %169 {offsets = [2, 0, 0], sizes = [1, 8, 512], strides = [1, 1, 1]} : vector<9x8x512xf32> to vector<1x8x512xf32>
    %187 = vector.shape_cast %186 : vector<1x8x512xf32> to vector<8x512xf32>
    %188 = arith.mulf %185, %187 : vector<8x512xf32>
    %189 = arith.addf %184, %188 : vector<8x512xf32>
    %c1_i32_68 = arith.constant 1 : i32
    %190 = tpu.dynamic_rotate %167 by %c1_i32_68 dim 1 : vector<8x512xf32>, i32 -> vector<8x512xf32>
    %191 = vector.extract_strided_slice %169 {offsets = [3, 0, 0], sizes = [1, 8, 512], strides = [1, 1, 1]} : vector<9x8x512xf32> to vector<1x8x512xf32>
    %192 = vector.shape_cast %191 : vector<1x8x512xf32> to vector<8x512xf32>
    %193 = arith.mulf %190, %192 : vector<8x512xf32>
    %194 = arith.addf %189, %193 : vector<8x512xf32>
    %195 = vector.extract_strided_slice %169 {offsets = [4, 0, 0], sizes = [1, 8, 512], strides = [1, 1, 1]} : vector<9x8x512xf32> to vector<1x8x512xf32>
    %196 = vector.shape_cast %195 : vector<1x8x512xf32> to vector<8x512xf32>
    %197 = arith.mulf %167, %196 : vector<8x512xf32>
    %198 = arith.addf %194, %197 : vector<8x512xf32>
    %c511_i32_69 = arith.constant 511 : i32
    %199 = tpu.dynamic_rotate %167 by %c511_i32_69 dim 1 : vector<8x512xf32>, i32 -> vector<8x512xf32>
    %200 = vector.extract_strided_slice %169 {offsets = [5, 0, 0], sizes = [1, 8, 512], strides = [1, 1, 1]} : vector<9x8x512xf32> to vector<1x8x512xf32>
    %201 = vector.shape_cast %200 : vector<1x8x512xf32> to vector<8x512xf32>
    %202 = arith.mulf %199, %201 : vector<8x512xf32>
    %203 = arith.addf %198, %202 : vector<8x512xf32>
    %c505_i32_70 = arith.constant 505 : i32
    %204 = tpu.dynamic_rotate %167 by %c505_i32_70 dim 1 : vector<8x512xf32>, i32 -> vector<8x512xf32>
    %205 = vector.extract_strided_slice %169 {offsets = [6, 0, 0], sizes = [1, 8, 512], strides = [1, 1, 1]} : vector<9x8x512xf32> to vector<1x8x512xf32>
    %206 = vector.shape_cast %205 : vector<1x8x512xf32> to vector<8x512xf32>
    %207 = arith.mulf %204, %206 : vector<8x512xf32>
    %208 = arith.addf %203, %207 : vector<8x512xf32>
    %c504_i32_71 = arith.constant 504 : i32
    %209 = tpu.dynamic_rotate %167 by %c504_i32_71 dim 1 : vector<8x512xf32>, i32 -> vector<8x512xf32>
    %210 = vector.extract_strided_slice %169 {offsets = [7, 0, 0], sizes = [1, 8, 512], strides = [1, 1, 1]} : vector<9x8x512xf32> to vector<1x8x512xf32>
    %211 = vector.shape_cast %210 : vector<1x8x512xf32> to vector<8x512xf32>
    %212 = arith.mulf %209, %211 : vector<8x512xf32>
    %213 = arith.addf %208, %212 : vector<8x512xf32>
    %c503_i32_72 = arith.constant 503 : i32
    %214 = tpu.dynamic_rotate %167 by %c503_i32_72 dim 1 : vector<8x512xf32>, i32 -> vector<8x512xf32>
    %215 = vector.extract_strided_slice %169 {offsets = [8, 0, 0], sizes = [1, 8, 512], strides = [1, 1, 1]} : vector<9x8x512xf32> to vector<1x8x512xf32>
    %216 = vector.shape_cast %215 : vector<1x8x512xf32> to vector<8x512xf32>
    %217 = arith.mulf %214, %216 : vector<8x512xf32>
    %218 = arith.addf %213, %217 : vector<8x512xf32>
    %219 = vector.broadcast %171 : vector<8x1xf32> to vector<8x512xf32>
    %220 = arith.mulf %218, %219 : vector<8x512xf32>
    %221 = vector.broadcast %173 : vector<8x1xf32> to vector<8x512xf32>
    %222 = arith.addf %220, %221 : vector<8x512xf32>
    %cst_73 = arith.constant 5.000000e-01 : f32
    %223 = vector.broadcast %cst_73 : f32 to vector<8x512xf32>
    %224 = arith.mulf %223, %222 : vector<8x512xf32>
    %cst_74 = arith.constant 4.471500e-02 : f32
    %225 = vector.broadcast %cst_74 : f32 to vector<8x512xf32>
    %226 = arith.mulf %225, %222 : vector<8x512xf32>
    %227 = arith.mulf %226, %222 : vector<8x512xf32>
    %228 = arith.mulf %227, %222 : vector<8x512xf32>
    %229 = arith.addf %222, %228 : vector<8x512xf32>
    %cst_75 = arith.constant 0.797884583 : f32
    %230 = vector.broadcast %cst_75 : f32 to vector<8x512xf32>
    %231 = arith.mulf %230, %229 : vector<8x512xf32>
    %232 = math.tanh %231 : vector<8x512xf32>
    %cst_76 = arith.constant 1.000000e+00 : f32
    %233 = vector.broadcast %cst_76 : f32 to vector<8x512xf32>
    %234 = arith.addf %233, %232 : vector<8x512xf32>
    %235 = arith.mulf %224, %234 : vector<8x512xf32>
    %c1_77 = arith.constant 1 : index
    %c0_78 = arith.constant 0 : index
    %c0_79 = arith.constant 0 : index
    %c0_80 = arith.constant 0 : index
    %236 = vector.load %arg3[%c1_77, %c0_78, %c0_79, %c0_80] : memref<2x9x8x512xf32, #tpu.memory_space<vmem>>, vector<1x9x8x512xf32>
    %237 = vector.shape_cast %236 : vector<1x9x8x512xf32> to vector<9x8x512xf32>
    %c1_81 = arith.constant 1 : index
    %c0_82 = arith.constant 0 : index
    %c0_83 = arith.constant 0 : index
    %238 = vector.load %arg6[%c1_81, %c0_82, %c0_83] : memref<2x8x1xf32, #tpu.memory_space<vmem>>, vector<1x8x1xf32>
    %239 = vector.shape_cast %238 : vector<1x8x1xf32> to vector<8x1xf32>
    %c1_84 = arith.constant 1 : index
    %c0_85 = arith.constant 0 : index
    %c0_86 = arith.constant 0 : index
    %240 = vector.load %arg7[%c1_84, %c0_85, %c0_86] : memref<2x8x1xf32, #tpu.memory_space<vmem>>, vector<1x8x1xf32>
    %241 = vector.shape_cast %240 : vector<1x8x1xf32> to vector<8x1xf32>
    %cst_87 = arith.constant 0.000000e+00 : f32
    %242 = vector.broadcast %cst_87 : f32 to vector<8x512xf32>
    %c9_i32_88 = arith.constant 9 : i32
    %243 = tpu.dynamic_rotate %235 by %c9_i32_88 dim 1 : vector<8x512xf32>, i32 -> vector<8x512xf32>
    %244 = vector.extract_strided_slice %237 {offsets = [0, 0, 0], sizes = [1, 8, 512], strides = [1, 1, 1]} : vector<9x8x512xf32> to vector<1x8x512xf32>
    %245 = vector.shape_cast %244 : vector<1x8x512xf32> to vector<8x512xf32>
    %246 = arith.mulf %243, %245 : vector<8x512xf32>
    %247 = arith.addf %242, %246 : vector<8x512xf32>
    %c8_i32_89 = arith.constant 8 : i32
    %248 = tpu.dynamic_rotate %235 by %c8_i32_89 dim 1 : vector<8x512xf32>, i32 -> vector<8x512xf32>
    %249 = vector.extract_strided_slice %237 {offsets = [1, 0, 0], sizes = [1, 8, 512], strides = [1, 1, 1]} : vector<9x8x512xf32> to vector<1x8x512xf32>
    %250 = vector.shape_cast %249 : vector<1x8x512xf32> to vector<8x512xf32>
    %251 = arith.mulf %248, %250 : vector<8x512xf32>
    %252 = arith.addf %247, %251 : vector<8x512xf32>
    %c7_i32_90 = arith.constant 7 : i32
    %253 = tpu.dynamic_rotate %235 by %c7_i32_90 dim 1 : vector<8x512xf32>, i32 -> vector<8x512xf32>
    %254 = vector.extract_strided_slice %237 {offsets = [2, 0, 0], sizes = [1, 8, 512], strides = [1, 1, 1]} : vector<9x8x512xf32> to vector<1x8x512xf32>
    %255 = vector.shape_cast %254 : vector<1x8x512xf32> to vector<8x512xf32>
    %256 = arith.mulf %253, %255 : vector<8x512xf32>
    %257 = arith.addf %252, %256 : vector<8x512xf32>
    %c1_i32_91 = arith.constant 1 : i32
    %258 = tpu.dynamic_rotate %235 by %c1_i32_91 dim 1 : vector<8x512xf32>, i32 -> vector<8x512xf32>
    %259 = vector.extract_strided_slice %237 {offsets = [3, 0, 0], sizes = [1, 8, 512], strides = [1, 1, 1]} : vector<9x8x512xf32> to vector<1x8x512xf32>
    %260 = vector.shape_cast %259 : vector<1x8x512xf32> to vector<8x512xf32>
    %261 = arith.mulf %258, %260 : vector<8x512xf32>
    %262 = arith.addf %257, %261 : vector<8x512xf32>
    %263 = vector.extract_strided_slice %237 {offsets = [4, 0, 0], sizes = [1, 8, 512], strides = [1, 1, 1]} : vector<9x8x512xf32> to vector<1x8x512xf32>
    %264 = vector.shape_cast %263 : vector<1x8x512xf32> to vector<8x512xf32>
    %265 = arith.mulf %235, %264 : vector<8x512xf32>
    %266 = arith.addf %262, %265 : vector<8x512xf32>
    %c511_i32_92 = arith.constant 511 : i32
    %267 = tpu.dynamic_rotate %235 by %c511_i32_92 dim 1 : vector<8x512xf32>, i32 -> vector<8x512xf32>
    %268 = vector.extract_strided_slice %237 {offsets = [5, 0, 0], sizes = [1, 8, 512], strides = [1, 1, 1]} : vector<9x8x512xf32> to vector<1x8x512xf32>
    %269 = vector.shape_cast %268 : vector<1x8x512xf32> to vector<8x512xf32>
    %270 = arith.mulf %267, %269 : vector<8x512xf32>
    %271 = arith.addf %266, %270 : vector<8x512xf32>
    %c505_i32_93 = arith.constant 505 : i32
    %272 = tpu.dynamic_rotate %235 by %c505_i32_93 dim 1 : vector<8x512xf32>, i32 -> vector<8x512xf32>
    %273 = vector.extract_strided_slice %237 {offsets = [6, 0, 0], sizes = [1, 8, 512], strides = [1, 1, 1]} : vector<9x8x512xf32> to vector<1x8x512xf32>
    %274 = vector.shape_cast %273 : vector<1x8x512xf32> to vector<8x512xf32>
    %275 = arith.mulf %272, %274 : vector<8x512xf32>
    %276 = arith.addf %271, %275 : vector<8x512xf32>
    %c504_i32_94 = arith.constant 504 : i32
    %277 = tpu.dynamic_rotate %235 by %c504_i32_94 dim 1 : vector<8x512xf32>, i32 -> vector<8x512xf32>
    %278 = vector.extract_strided_slice %237 {offsets = [7, 0, 0], sizes = [1, 8, 512], strides = [1, 1, 1]} : vector<9x8x512xf32> to vector<1x8x512xf32>
    %279 = vector.shape_cast %278 : vector<1x8x512xf32> to vector<8x512xf32>
    %280 = arith.mulf %277, %279 : vector<8x512xf32>
    %281 = arith.addf %276, %280 : vector<8x512xf32>
    %c503_i32_95 = arith.constant 503 : i32
    %282 = tpu.dynamic_rotate %235 by %c503_i32_95 dim 1 : vector<8x512xf32>, i32 -> vector<8x512xf32>
    %283 = vector.extract_strided_slice %237 {offsets = [8, 0, 0], sizes = [1, 8, 512], strides = [1, 1, 1]} : vector<9x8x512xf32> to vector<1x8x512xf32>
    %284 = vector.shape_cast %283 : vector<1x8x512xf32> to vector<8x512xf32>
    %285 = arith.mulf %282, %284 : vector<8x512xf32>
    %286 = arith.addf %281, %285 : vector<8x512xf32>
    %287 = vector.broadcast %239 : vector<8x1xf32> to vector<8x512xf32>
    %288 = arith.mulf %286, %287 : vector<8x512xf32>
    %289 = vector.broadcast %241 : vector<8x1xf32> to vector<8x512xf32>
    %290 = arith.addf %288, %289 : vector<8x512xf32>
    %cst_96 = arith.constant 5.000000e-01 : f32
    %291 = vector.broadcast %cst_96 : f32 to vector<8x512xf32>
    %292 = arith.mulf %291, %290 : vector<8x512xf32>
    %cst_97 = arith.constant 4.471500e-02 : f32
    %293 = vector.broadcast %cst_97 : f32 to vector<8x512xf32>
    %294 = arith.mulf %293, %290 : vector<8x512xf32>
    %295 = arith.mulf %294, %290 : vector<8x512xf32>
    %296 = arith.mulf %295, %290 : vector<8x512xf32>
    %297 = arith.addf %290, %296 : vector<8x512xf32>
    %cst_98 = arith.constant 0.797884583 : f32
    %298 = vector.broadcast %cst_98 : f32 to vector<8x512xf32>
    %299 = arith.mulf %298, %297 : vector<8x512xf32>
    %300 = math.tanh %299 : vector<8x512xf32>
    %cst_99 = arith.constant 1.000000e+00 : f32
    %301 = vector.broadcast %cst_99 : f32 to vector<8x512xf32>
    %302 = arith.addf %301, %300 : vector<8x512xf32>
    %303 = arith.mulf %292, %302 : vector<8x512xf32>
    %304 = arith.addf %303, %167 : vector<8x512xf32>
    %c1_100 = arith.constant 1 : index
    %c0_101 = arith.constant 0 : index
    %c0_102 = arith.constant 0 : index
    %305 = vector.load %arg8[%c1_100, %c0_101, %c0_102] : memref<2x8x8xf32, #tpu.memory_space<vmem>>, vector<1x8x8xf32>
    %306 = vector.shape_cast %305 : vector<1x8x8xf32> to vector<8x8xf32>
    %307 = arith.truncf %306 : vector<8x8xf32> to vector<8x8xbf16>
    %308 = arith.truncf %304 : vector<8x512xf32> to vector<8x512xbf16>
    %cst_103 = arith.constant dense<0.000000e+00> : vector<8x512xf32>
    %309 = tpu.matmul %307, %308, %cst_103 {dimension_numbers = #tpu.dot_dimension_numbers<[1], [0], [0], [1], [0, 0, 1, 1], [], []>} : vector<8x8xbf16>, vector<8x512xbf16>, vector<8x512xf32> -> vector<8x512xf32>
    %c1_104 = arith.constant 1 : index
    %c0_105 = arith.constant 0 : index
    %c0_106 = arith.constant 0 : index
    %310 = vector.load %arg9[%c1_104, %c0_105, %c0_106] : memref<2x8x1xf32, #tpu.memory_space<vmem>>, vector<1x8x1xf32>
    %311 = vector.shape_cast %310 : vector<1x8x1xf32> to vector<8x1xf32>
    %312 = vector.broadcast %311 : vector<8x1xf32> to vector<8x512xf32>
    %313 = arith.addf %309, %312 : vector<8x512xf32>
    %cst_107 = arith.constant 5.000000e-01 : f32
    %314 = vector.broadcast %cst_107 : f32 to vector<8x512xf32>
    %315 = arith.mulf %314, %313 : vector<8x512xf32>
    %cst_108 = arith.constant 4.471500e-02 : f32
    %316 = vector.broadcast %cst_108 : f32 to vector<8x512xf32>
    %317 = arith.mulf %316, %313 : vector<8x512xf32>
    %318 = arith.mulf %317, %313 : vector<8x512xf32>
    %319 = arith.mulf %318, %313 : vector<8x512xf32>
    %320 = arith.addf %313, %319 : vector<8x512xf32>
    %cst_109 = arith.constant 0.797884583 : f32
    %321 = vector.broadcast %cst_109 : f32 to vector<8x512xf32>
    %322 = arith.mulf %321, %320 : vector<8x512xf32>
    %323 = math.tanh %322 : vector<8x512xf32>
    %cst_110 = arith.constant 1.000000e+00 : f32
    %324 = vector.broadcast %cst_110 : f32 to vector<8x512xf32>
    %325 = arith.addf %324, %323 : vector<8x512xf32>
    %326 = arith.mulf %315, %325 : vector<8x512xf32>
    %c1_111 = arith.constant 1 : index
    %c0_112 = arith.constant 0 : index
    %c0_113 = arith.constant 0 : index
    %327 = vector.load %arg10[%c1_111, %c0_112, %c0_113] : memref<2x8x1xf32, #tpu.memory_space<vmem>>, vector<1x8x1xf32>
    %328 = vector.shape_cast %327 : vector<1x8x1xf32> to vector<8x1xf32>
    %329 = vector.broadcast %328 : vector<8x1xf32> to vector<8x512xf32>
    %330 = arith.mulf %326, %329 : vector<8x512xf32>
    %c1_114 = arith.constant 1 : index
    %c0_115 = arith.constant 0 : index
    %c0_116 = arith.constant 0 : index
    %331 = vector.load %arg11[%c1_114, %c0_115, %c0_116] : memref<2x8x1xf32, #tpu.memory_space<vmem>>, vector<1x8x1xf32>
    %332 = vector.shape_cast %331 : vector<1x8x1xf32> to vector<8x1xf32>
    %333 = vector.broadcast %332 : vector<8x1xf32> to vector<8x512xf32>
    %334 = arith.addf %330, %333 : vector<8x512xf32>
    %c0_117 = arith.constant 0 : index
    %c0_118 = arith.constant 0 : index
    %335 = vector.load %arg12[%c0_117, %c0_118] : memref<1x8xf32, #tpu.memory_space<vmem>>, vector<1x8xf32>
    %336 = arith.truncf %335 : vector<1x8xf32> to vector<1x8xbf16>
    %337 = arith.truncf %334 : vector<8x512xf32> to vector<8x512xbf16>
    %cst_119 = arith.constant dense<0.000000e+00> : vector<1x512xf32>
    %338 = tpu.matmul %336, %337, %cst_119 {dimension_numbers = #tpu.dot_dimension_numbers<[1], [0], [0], [1], [0, 0, 1, 1], [], []>} : vector<1x8xbf16>, vector<8x512xbf16>, vector<1x512xf32> -> vector<1x512xf32>
    %c0_120 = arith.constant 0 : index
    %c0_121 = arith.constant 0 : index
    %339 = vector.load %arg13[%c0_120, %c0_121] : memref<1x1xf32, #tpu.memory_space<vmem>>, vector<1x1xf32>
    %340 = vector.broadcast %339 : vector<1x1xf32> to vector<1x512xf32>
    %341 = arith.addf %338, %340 : vector<1x512xf32>
    %c0_122 = arith.constant 0 : index
    %c0_123 = arith.constant 0 : index
    %342 = vector.load %arg14[%c0_122, %c0_123] : memref<1x512xf32, #tpu.memory_space<vmem>>, vector<1x512xf32>
    tpu.vector_store %arg14[%c0_122, %c0_123], %341 {strides = array<i32>} : memref<1x512xf32, #tpu.memory_space<vmem>>, vector<1x512xf32>,
    return
  }
  func.func @transform_0(%arg0: i32) -> (i32, i32) {
    %c0_i32 = arith.constant 0 : i32
    %c0_i32_0 = arith.constant 0 : i32
    return %c0_i32, %arg0 : i32, i32
  }
  func.func @transform_1(%arg0: i32) -> (i32, i32, i32, i32) {
    %c0_i32 = arith.constant 0 : i32
    %c0_i32_0 = arith.constant 0 : i32
    %c0_i32_1 = arith.constant 0 : i32
    %c0_i32_2 = arith.constant 0 : i32
    %c0_i32_3 = arith.constant 0 : i32
    return %c0_i32, %c0_i32_0, %c0_i32_1, %c0_i32_2 : i32, i32, i32, i32
  }
  func.func @transform_2(%arg0: i32) -> (i32, i32, i32, i32) {
    %c0_i32 = arith.constant 0 : i32
    %c0_i32_0 = arith.constant 0 : i32
    %c0_i32_1 = arith.constant 0 : i32
    %c0_i32_2 = arith.constant 0 : i32
    %c0_i32_3 = arith.constant 0 : i32
    return %c0_i32, %c0_i32_0, %c0_i32_1, %c0_i32_2 : i32, i32, i32, i32
  }
  func.func @transform_3(%arg0: i32) -> (i32, i32, i32) {
    %c0_i32 = arith.constant 0 : i32
    %c0_i32_0 = arith.constant 0 : i32
    %c0_i32_1 = arith.constant 0 : i32
    %c0_i32_2 = arith.constant 0 : i32
    return %c0_i32, %c0_i32_0, %c0_i32_1 : i32, i32, i32
  }
  func.func @transform_4(%arg0: i32) -> (i32, i32, i32) {
    %c0_i32 = arith.constant 0 : i32
    %c0_i32_0 = arith.constant 0 : i32
    %c0_i32_1 = arith.constant 0 : i32
    %c0_i32_2 = arith.constant 0 : i32
    return %c0_i32, %c0_i32_0, %c0_i32_1 : i32, i32, i32
  }
  func.func @transform_5(%arg0: i32) -> (i32, i32, i32) {
    %c0_i32 = arith.constant 0 : i32
    %c0_i32_0 = arith.constant 0 : i32
    %c0_i32_1 = arith.constant 0 : i32
    %c0_i32_2 = arith.constant 0 : i32
    return %c0_i32, %c0_i32_0, %c0_i32_1 : i32, i32, i32
  }
  func.func @transform_6(%arg0: i32) -> (i32, i32, i32) {
    %c0_i32 = arith.constant 0 : i32
    %c0_i32_0 = arith.constant 0 : i32
    %c0_i32_1 = arith.constant 0 : i32
    %c0_i32_2 = arith.constant 0 : i32
    return %c0_i32, %c0_i32_0, %c0_i32_1 : i32, i32, i32
  }
  func.func @transform_7(%arg0: i32) -> (i32, i32, i32) {
    %c0_i32 = arith.constant 0 : i32
    %c0_i32_0 = arith.constant 0 : i32
    %c0_i32_1 = arith.constant 0 : i32
    %c0_i32_2 = arith.constant 0 : i32
    return %c0_i32, %c0_i32_0, %c0_i32_1 : i32, i32, i32
  }
  func.func @transform_8(%arg0: i32) -> (i32, i32, i32) {
    %c0_i32 = arith.constant 0 : i32
    %c0_i32_0 = arith.constant 0 : i32
    %c0_i32_1 = arith.constant 0 : i32
    %c0_i32_2 = arith.constant 0 : i32
    return %c0_i32, %c0_i32_0, %c0_i32_1 : i32, i32, i32
  }
  func.func @transform_9(%arg0: i32) -> (i32, i32, i32) {
    %c0_i32 = arith.constant 0 : i32
    %c0_i32_0 = arith.constant 0 : i32
    %c0_i32_1 = arith.constant 0 : i32
    %c0_i32_2 = arith.constant 0 : i32
    return %c0_i32, %c0_i32_0, %c0_i32_1 : i32, i32, i32
  }
  func.func @transform_10(%arg0: i32) -> (i32, i32, i32) {
    %c0_i32 = arith.constant 0 : i32
    %c0_i32_0 = arith.constant 0 : i32
    %c0_i32_1 = arith.constant 0 : i32
    %c0_i32_2 = arith.constant 0 : i32
    return %c0_i32, %c0_i32_0, %c0_i32_1 : i32, i32, i32
  }
  func.func @transform_11(%arg0: i32) -> (i32, i32) {
    %c0_i32 = arith.constant 0 : i32
    %c0_i32_0 = arith.constant 0 : i32
    %c0_i32_1 = arith.constant 0 : i32
    return %c0_i32, %c0_i32_0 : i32, i32
  }
  func.func @transform_12(%arg0: i32) -> (i32, i32) {
    %c0_i32 = arith.constant 0 : i32
    %c0_i32_0 = arith.constant 0 : i32
    %c0_i32_1 = arith.constant 0 : i32
    return %c0_i32, %c0_i32_0 : i32, i32
  }
  func.func @transform_13(%arg0: i32) -> (i32, i32) {
    %c0_i32 = arith.constant 0 : i32
    %c0_i32_0 = arith.constant 0 : i32
    return %c0_i32, %arg0 : i32, i32
  }
}

module attributes {stable_mosaic.version = 11 : i64} {
  func.func @_transformer_gs_lstm_kernel(%arg0: i32, %arg1: memref<8x64xf32, #tpu.memory_space<vmem>>, %arg2: memref<8x64xf32, #tpu.memory_space<vmem>>, %arg3: memref<8x8xf32, #tpu.memory_space<vmem>>, %arg4: memref<1x1x64xf32, #tpu.memory_space<vmem>>, %arg5: memref<1x1x64xf32, #tpu.memory_space<vmem>>, %arg6: memref<1x3x4x16x64xf32, #tpu.memory_space<vmem>>, %arg7: memref<1x4x16x64xf32, #tpu.memory_space<vmem>>, %arg8: memref<1x1x64xf32, #tpu.memory_space<vmem>>, %arg9: memref<1x1x64xf32, #tpu.memory_space<vmem>>, %arg10: memref<1x1x64xf32, #tpu.memory_space<vmem>>, %arg11: memref<1x64x64xf32, #tpu.memory_space<vmem>>, %arg12: memref<1x1x64xf32, #tpu.memory_space<vmem>>, %arg13: memref<1x64x64xf32, #tpu.memory_space<vmem>>, %arg14: memref<1x1x64xf32, #tpu.memory_space<vmem>>, %arg15: memref<2x64x64xf32, #tpu.memory_space<vmem>>, %arg16: memref<2x64x256xf32, #tpu.memory_space<vmem>>, %arg17: memref<2x64x256xf32, #tpu.memory_space<vmem>>, %arg18: memref<2x1x256xf32, #tpu.memory_space<vmem>>, %arg19: memref<8x64xf32, #tpu.memory_space<vmem>>, %arg20: memref<8x64xf32, #tpu.memory_space<vmem>>) attributes {dimension_semantics = [#tpu.dimension_semantics<arbitrary>], iteration_bounds = array<i64: 2>, scalar_prefetch = 0 : i64, scratch_operands = 1 : i64, tpu.core_type = #tpu.core_type<tc>, window_params = [{pipeline_mode = #tpu.pipeline_mode<synchronous>, transform_indices = @transform_0, window_bounds = array<i64: 8, 64>}, {pipeline_mode = #tpu.pipeline_mode<synchronous>, transform_indices = @transform_1, window_bounds = array<i64: 8, 64>}, {pipeline_mode = #tpu.pipeline_mode<synchronous>, transform_indices = @transform_2, window_bounds = array<i64: 8, 8>}, {transform_indices = @transform_3, window_bounds = array<i64: 1, 1, 64>}, {transform_indices = @transform_4, window_bounds = array<i64: 1, 1, 64>}, {transform_indices = @transform_5, window_bounds = array<i64: 1, 3, 4, 16, 64>}, {transform_indices = @transform_6, window_bounds = array<i64: 1, 4, 16, 64>}, {transform_indices = @transform_7, window_bounds = array<i64: 1, 1, 64>}, {transform_indices = @transform_8, window_bounds = array<i64: 1, 1, 64>}, {transform_indices = @transform_9, window_bounds = array<i64: 1, 1, 64>}, {transform_indices = @transform_10, window_bounds = array<i64: 1, 64, 64>}, {transform_indices = @transform_11, window_bounds = array<i64: 1, 1, 64>}, {transform_indices = @transform_12, window_bounds = array<i64: 1, 64, 64>}, {transform_indices = @transform_13, window_bounds = array<i64: 1, 1, 64>}, {pipeline_mode = #tpu.pipeline_mode<synchronous>, transform_indices = @transform_14, window_bounds = array<i64: 2, 64, 64>}, {pipeline_mode = #tpu.pipeline_mode<synchronous>, transform_indices = @transform_15, window_bounds = array<i64: 2, 64, 256>}, {pipeline_mode = #tpu.pipeline_mode<synchronous>, transform_indices = @transform_16, window_bounds = array<i64: 2, 64, 256>}, {pipeline_mode = #tpu.pipeline_mode<synchronous>, transform_indices = @transform_17, window_bounds = array<i64: 2, 1, 256>}, {pipeline_mode = #tpu.pipeline_mode<synchronous>, transform_indices = @transform_18, window_bounds = array<i64: 8, 64>}]} {
    %c0_i32 = arith.constant 0 : i32
    %0 = arith.cmpi eq, %arg0, %c0_i32 : i32
    %1 = arith.extui %0 : i1 to i32
    %c0_i32_0 = arith.constant 0 : i32
    %2 = arith.cmpi ne, %1, %c0_i32_0 : i32
    scf.if %2 {
      %c0_63 = arith.constant 0 : index
      %c0_64 = arith.constant 0 : index
      %131 = vector.load %arg1[%c0_63, %c0_64] : memref<8x64xf32, #tpu.memory_space<vmem>>, vector<8x64xf32>
      %c0_65 = arith.constant 0 : index
      %c0_66 = arith.constant 0 : index
      %132 = vector.load %arg2[%c0_65, %c0_66] : memref<8x64xf32, #tpu.memory_space<vmem>>, vector<8x64xf32>
      %133 = arith.addf %131, %132 : vector<8x64xf32>
      %c0_67 = arith.constant 0 : index
      %c0_68 = arith.constant 0 : index
      %134 = vector.load %arg20[%c0_67, %c0_68] : memref<8x64xf32, #tpu.memory_space<vmem>>, vector<8x64xf32>
      tpu.vector_store %arg20[%c0_67, %c0_68], %133 {strides = array<i32>} : memref<8x64xf32, #tpu.memory_space<vmem>>, vector<8x64xf32>,
    } else {
    }
    %c0 = arith.constant 0 : index
    %c0_1 = arith.constant 0 : index
    %3 = vector.load %arg20[%c0, %c0_1] : memref<8x64xf32, #tpu.memory_space<vmem>>, vector<8x64xf32>
    %c0_2 = arith.constant 0 : index
    %c0_3 = arith.constant 0 : index
    %c0_4 = arith.constant 0 : index
    %4 = vector.load %arg4[%c0_2, %c0_3, %c0_4] : memref<1x1x64xf32, #tpu.memory_space<vmem>>, vector<1x1x64xf32>
    %5 = vector.shape_cast %4 : vector<1x1x64xf32> to vector<1x64xf32>
    %c0_5 = arith.constant 0 : index
    %c0_6 = arith.constant 0 : index
    %c0_7 = arith.constant 0 : index
    %6 = vector.load %arg5[%c0_5, %c0_6, %c0_7] : memref<1x1x64xf32, #tpu.memory_space<vmem>>, vector<1x1x64xf32>
    %7 = vector.shape_cast %6 : vector<1x1x64xf32> to vector<1x64xf32>
    %cst = arith.constant dense<0.000000e+00> : vector<8xf32>
    %8 = vector.multi_reduction <add>, %3, %cst [1] : vector<8x64xf32> to vector<8xf32>
    %9 = vector.shape_cast %8 : vector<8xf32> to vector<8x1xf32>
    %cst_8 = arith.constant 6.400000e+01 : f32
    %10 = vector.broadcast %cst_8 : f32 to vector<8x1xf32>
    %11 = arith.divf %9, %10 : vector<8x1xf32>
    %12 = vector.broadcast %11 : vector<8x1xf32> to vector<8x64xf32>
    %13 = arith.subf %3, %12 : vector<8x64xf32>
    %14 = arith.mulf %13, %13 : vector<8x64xf32>
    %cst_9 = arith.constant dense<0.000000e+00> : vector<8xf32>
    %15 = vector.multi_reduction <add>, %14, %cst_9 [1] : vector<8x64xf32> to vector<8xf32>
    %16 = vector.shape_cast %15 : vector<8xf32> to vector<8x1xf32>
    %cst_10 = arith.constant 6.400000e+01 : f32
    %17 = vector.broadcast %cst_10 : f32 to vector<8x1xf32>
    %18 = arith.divf %16, %17 : vector<8x1xf32>
    %cst_11 = arith.constant 9.99999974E-6 : f32
    %19 = vector.broadcast %cst_11 : f32 to vector<8x1xf32>
    %20 = arith.addf %18, %19 : vector<8x1xf32>
    %21 = math.rsqrt %20 : vector<8x1xf32>
    %22 = vector.broadcast %21 : vector<8x1xf32> to vector<8x64xf32>
    %23 = arith.mulf %13, %22 : vector<8x64xf32>
    %24 = vector.broadcast %5 : vector<1x64xf32> to vector<8x64xf32>
    %25 = arith.mulf %23, %24 : vector<8x64xf32>
    %26 = vector.broadcast %7 : vector<1x64xf32> to vector<8x64xf32>
    %27 = arith.addf %25, %26 : vector<8x64xf32>
    %c0_12 = arith.constant 0 : index
    %c0_13 = arith.constant 0 : index
    %c0_14 = arith.constant 0 : index
    %c0_15 = arith.constant 0 : index
    %c0_16 = arith.constant 0 : index
    %28 = vector.load %arg6[%c0_12, %c0_13, %c0_14, %c0_15, %c0_16] : memref<1x3x4x16x64xf32, #tpu.memory_space<vmem>>, vector<1x3x4x16x64xf32>
    %29 = vector.shape_cast %28 : vector<1x3x4x16x64xf32> to vector<3x4x16x64xf32>
    %30 = vector.shape_cast %29 : vector<3x4x16x64xf32> to vector<192x64xf32>
    %31 = arith.truncf %30 : vector<192x64xf32> to vector<192x64xbf16>
    %32 = arith.truncf %27 : vector<8x64xf32> to vector<8x64xbf16>
    %cst_17 = arith.constant dense<0.000000e+00> : vector<192x8xf32>
    %33 = tpu.matmul %31, %32, %cst_17 {dimension_numbers = #tpu.dot_dimension_numbers<[1], [1], [0], [0], [0, 0, 1, 0], [], []>} : vector<192x64xbf16>, vector<8x64xbf16>, vector<192x8xf32> -> vector<192x8xf32>
    %34 = vector.shape_cast %33 : vector<192x8xf32> to vector<3x4x16x8xf32>
    %35 = vector.extract_strided_slice %34 {offsets = [0, 0, 0, 0], sizes = [1, 4, 16, 8], strides = [1, 1, 1, 1]} : vector<3x4x16x8xf32> to vector<1x4x16x8xf32>
    %36 = vector.shape_cast %35 : vector<1x4x16x8xf32> to vector<4x16x8xf32>
    %37 = vector.extract_strided_slice %34 {offsets = [1, 0, 0, 0], sizes = [1, 4, 16, 8], strides = [1, 1, 1, 1]} : vector<3x4x16x8xf32> to vector<1x4x16x8xf32>
    %38 = vector.shape_cast %37 : vector<1x4x16x8xf32> to vector<4x16x8xf32>
    %39 = vector.extract_strided_slice %34 {offsets = [2, 0, 0, 0], sizes = [1, 4, 16, 8], strides = [1, 1, 1, 1]} : vector<3x4x16x8xf32> to vector<1x4x16x8xf32>
    %40 = vector.shape_cast %39 : vector<1x4x16x8xf32> to vector<4x16x8xf32>
    %41 = arith.truncf %36 : vector<4x16x8xf32> to vector<4x16x8xbf16>
    %42 = arith.truncf %38 : vector<4x16x8xf32> to vector<4x16x8xbf16>
    %cst_18 = arith.constant dense<0.000000e+00> : vector<4x8x8xf32>
    %43 = tpu.matmul %41, %42, %cst_18 {dimension_numbers = #tpu.dot_dimension_numbers<[1], [1], [2], [2], [0, 0, 0, 2, 1, 2], [0], [0]>} : vector<4x16x8xbf16>, vector<4x16x8xbf16>, vector<4x8x8xf32> -> vector<4x8x8xf32>
    %cst_19 = arith.constant 2.500000e-01 : f32
    %44 = vector.broadcast %cst_19 : f32 to vector<4x8x8xf32>
    %45 = arith.mulf %43, %44 : vector<4x8x8xf32>
    %cst_20 = arith.constant dense<0xFF800000> : vector<4x8xf32>
    %46 = vector.multi_reduction <maximumf>, %45, %cst_20 [2] : vector<4x8x8xf32> to vector<4x8xf32>
    %47 = vector.shape_cast %46 : vector<4x8xf32> to vector<4x8x1xf32>
    %48 = vector.broadcast %47 : vector<4x8x1xf32> to vector<4x8x8xf32>
    %49 = arith.subf %45, %48 : vector<4x8x8xf32>
    %50 = math.exp %49 : vector<4x8x8xf32>
    %cst_21 = arith.constant dense<0.000000e+00> : vector<4x8xf32>
    %51 = vector.multi_reduction <add>, %50, %cst_21 [2] : vector<4x8x8xf32> to vector<4x8xf32>
    %52 = vector.shape_cast %51 : vector<4x8xf32> to vector<4x8x1xf32>
    %53 = tpu.reciprocal %52 : vector<4x8x1xf32> -> vector<4x8x1xf32>
    %54 = vector.broadcast %53 : vector<4x8x1xf32> to vector<4x8x8xf32>
    %55 = arith.mulf %50, %54 : vector<4x8x8xf32>
    %56 = arith.truncf %40 : vector<4x16x8xf32> to vector<4x16x8xbf16>
    %57 = arith.truncf %55 : vector<4x8x8xf32> to vector<4x8x8xbf16>
    %cst_22 = arith.constant dense<0.000000e+00> : vector<4x16x8xf32>
    %58 = tpu.matmul %56, %57, %cst_22 {dimension_numbers = #tpu.dot_dimension_numbers<[2], [2], [1], [1], [0, 0, 0, 1, 1, 1], [0], [0]>} : vector<4x16x8xbf16>, vector<4x8x8xbf16>, vector<4x16x8xf32> -> vector<4x16x8xf32>
    %59 = vector.shape_cast %58 : vector<4x16x8xf32> to vector<64x8xf32>
    %c0_23 = arith.constant 0 : index
    %c0_24 = arith.constant 0 : index
    %c0_25 = arith.constant 0 : index
    %c0_26 = arith.constant 0 : index
    %60 = vector.load %arg7[%c0_23, %c0_24, %c0_25, %c0_26] : memref<1x4x16x64xf32, #tpu.memory_space<vmem>>, vector<1x4x16x64xf32>
    %61 = vector.shape_cast %60 : vector<1x4x16x64xf32> to vector<4x16x64xf32>
    %62 = vector.shape_cast %61 : vector<4x16x64xf32> to vector<64x64xf32>
    %63 = arith.truncf %59 : vector<64x8xf32> to vector<64x8xbf16>
    %64 = arith.truncf %62 : vector<64x64xf32> to vector<64x64xbf16>
    %cst_27 = arith.constant dense<0.000000e+00> : vector<8x64xf32>
    %65 = tpu.matmul %63, %64, %cst_27 {dimension_numbers = #tpu.dot_dimension_numbers<[0], [0], [1], [1], [0, 1, 1, 1], [], []>} : vector<64x8xbf16>, vector<64x64xbf16>, vector<8x64xf32> -> vector<8x64xf32>
    %66 = arith.addf %3, %65 : vector<8x64xf32>
    %c0_28 = arith.constant 0 : index
    %c0_29 = arith.constant 0 : index
    %c0_30 = arith.constant 0 : index
    %67 = vector.load %arg8[%c0_28, %c0_29, %c0_30] : memref<1x1x64xf32, #tpu.memory_space<vmem>>, vector<1x1x64xf32>
    %68 = vector.shape_cast %67 : vector<1x1x64xf32> to vector<1x64xf32>
    %69 = vector.broadcast %68 : vector<1x64xf32> to vector<8x64xf32>
    %70 = arith.addf %66, %69 : vector<8x64xf32>
    %c0_31 = arith.constant 0 : index
    %c0_32 = arith.constant 0 : index
    %c0_33 = arith.constant 0 : index
    %71 = vector.load %arg9[%c0_31, %c0_32, %c0_33] : memref<1x1x64xf32, #tpu.memory_space<vmem>>, vector<1x1x64xf32>
    %72 = vector.shape_cast %71 : vector<1x1x64xf32> to vector<1x64xf32>
    %c0_34 = arith.constant 0 : index
    %c0_35 = arith.constant 0 : index
    %c0_36 = arith.constant 0 : index
    %73 = vector.load %arg10[%c0_34, %c0_35, %c0_36] : memref<1x1x64xf32, #tpu.memory_space<vmem>>, vector<1x1x64xf32>
    %74 = vector.shape_cast %73 : vector<1x1x64xf32> to vector<1x64xf32>
    %cst_37 = arith.constant dense<0.000000e+00> : vector<8xf32>
    %75 = vector.multi_reduction <add>, %70, %cst_37 [1] : vector<8x64xf32> to vector<8xf32>
    %76 = vector.shape_cast %75 : vector<8xf32> to vector<8x1xf32>
    %cst_38 = arith.constant 6.400000e+01 : f32
    %77 = vector.broadcast %cst_38 : f32 to vector<8x1xf32>
    %78 = arith.divf %76, %77 : vector<8x1xf32>
    %79 = vector.broadcast %78 : vector<8x1xf32> to vector<8x64xf32>
    %80 = arith.subf %70, %79 : vector<8x64xf32>
    %81 = arith.mulf %80, %80 : vector<8x64xf32>
    %cst_39 = arith.constant dense<0.000000e+00> : vector<8xf32>
    %82 = vector.multi_reduction <add>, %81, %cst_39 [1] : vector<8x64xf32> to vector<8xf32>
    %83 = vector.shape_cast %82 : vector<8xf32> to vector<8x1xf32>
    %cst_40 = arith.constant 6.400000e+01 : f32
    %84 = vector.broadcast %cst_40 : f32 to vector<8x1xf32>
    %85 = arith.divf %83, %84 : vector<8x1xf32>
    %cst_41 = arith.constant 9.99999974E-6 : f32
    %86 = vector.broadcast %cst_41 : f32 to vector<8x1xf32>
    %87 = arith.addf %85, %86 : vector<8x1xf32>
    %88 = math.rsqrt %87 : vector<8x1xf32>
    %89 = vector.broadcast %88 : vector<8x1xf32> to vector<8x64xf32>
    %90 = arith.mulf %80, %89 : vector<8x64xf32>
    %91 = vector.broadcast %72 : vector<1x64xf32> to vector<8x64xf32>
    %92 = arith.mulf %90, %91 : vector<8x64xf32>
    %93 = vector.broadcast %74 : vector<1x64xf32> to vector<8x64xf32>
    %94 = arith.addf %92, %93 : vector<8x64xf32>
    %c0_42 = arith.constant 0 : index
    %c0_43 = arith.constant 0 : index
    %c0_44 = arith.constant 0 : index
    %95 = vector.load %arg11[%c0_42, %c0_43, %c0_44] : memref<1x64x64xf32, #tpu.memory_space<vmem>>, vector<1x64x64xf32>
    %96 = vector.shape_cast %95 : vector<1x64x64xf32> to vector<64x64xf32>
    %97 = arith.truncf %94 : vector<8x64xf32> to vector<8x64xbf16>
    %98 = arith.truncf %96 : vector<64x64xf32> to vector<64x64xbf16>
    %cst_45 = arith.constant dense<0.000000e+00> : vector<8x64xf32>
    %99 = tpu.matmul %97, %98, %cst_45 {dimension_numbers = #tpu.dot_dimension_numbers<[1], [0], [0], [1], [0, 0, 1, 1], [], []>} : vector<8x64xbf16>, vector<64x64xbf16>, vector<8x64xf32> -> vector<8x64xf32>
    %c0_46 = arith.constant 0 : index
    %c0_47 = arith.constant 0 : index
    %c0_48 = arith.constant 0 : index
    %100 = vector.load %arg12[%c0_46, %c0_47, %c0_48] : memref<1x1x64xf32, #tpu.memory_space<vmem>>, vector<1x1x64xf32>
    %101 = vector.shape_cast %100 : vector<1x1x64xf32> to vector<1x64xf32>
    %102 = vector.broadcast %101 : vector<1x64xf32> to vector<8x64xf32>
    %103 = arith.addf %99, %102 : vector<8x64xf32>
    %cst_49 = arith.constant 5.000000e-01 : f32
    %104 = vector.broadcast %cst_49 : f32 to vector<8x64xf32>
    %105 = arith.mulf %104, %103 : vector<8x64xf32>
    %cst_50 = arith.constant 4.471500e-02 : f32
    %106 = vector.broadcast %cst_50 : f32 to vector<8x64xf32>
    %107 = arith.mulf %106, %103 : vector<8x64xf32>
    %108 = arith.mulf %107, %103 : vector<8x64xf32>
    %109 = arith.mulf %108, %103 : vector<8x64xf32>
    %110 = arith.addf %103, %109 : vector<8x64xf32>
    %cst_51 = arith.constant 0.797884583 : f32
    %111 = vector.broadcast %cst_51 : f32 to vector<8x64xf32>
    %112 = arith.mulf %111, %110 : vector<8x64xf32>
    %113 = math.tanh %112 : vector<8x64xf32>
    %cst_52 = arith.constant 1.000000e+00 : f32
    %114 = vector.broadcast %cst_52 : f32 to vector<8x64xf32>
    %115 = arith.addf %114, %113 : vector<8x64xf32>
    %116 = arith.mulf %105, %115 : vector<8x64xf32>
    %c0_53 = arith.constant 0 : index
    %c0_54 = arith.constant 0 : index
    %c0_55 = arith.constant 0 : index
    %117 = vector.load %arg13[%c0_53, %c0_54, %c0_55] : memref<1x64x64xf32, #tpu.memory_space<vmem>>, vector<1x64x64xf32>
    %118 = vector.shape_cast %117 : vector<1x64x64xf32> to vector<64x64xf32>
    %119 = arith.truncf %116 : vector<8x64xf32> to vector<8x64xbf16>
    %120 = arith.truncf %118 : vector<64x64xf32> to vector<64x64xbf16>
    %cst_56 = arith.constant dense<0.000000e+00> : vector<8x64xf32>
    %121 = tpu.matmul %119, %120, %cst_56 {dimension_numbers = #tpu.dot_dimension_numbers<[1], [0], [0], [1], [0, 0, 1, 1], [], []>} : vector<8x64xbf16>, vector<64x64xbf16>, vector<8x64xf32> -> vector<8x64xf32>
    %122 = arith.addf %70, %121 : vector<8x64xf32>
    %c0_57 = arith.constant 0 : index
    %c0_58 = arith.constant 0 : index
    %c0_59 = arith.constant 0 : index
    %123 = vector.load %arg14[%c0_57, %c0_58, %c0_59] : memref<1x1x64xf32, #tpu.memory_space<vmem>>, vector<1x1x64xf32>
    %124 = vector.shape_cast %123 : vector<1x1x64xf32> to vector<1x64xf32>
    %125 = vector.broadcast %124 : vector<1x64xf32> to vector<8x64xf32>
    %126 = arith.addf %122, %125 : vector<8x64xf32>
    %c0_60 = arith.constant 0 : index
    %c0_61 = arith.constant 0 : index
    %127 = vector.load %arg20[%c0_60, %c0_61] : memref<8x64xf32, #tpu.memory_space<vmem>>, vector<8x64xf32>
    tpu.vector_store %arg20[%c0_60, %c0_61], %126 {strides = array<i32>} : memref<8x64xf32, #tpu.memory_space<vmem>>, vector<8x64xf32>,
    %c1_i32 = arith.constant 1 : i32
    %128 = arith.cmpi eq, %arg0, %c1_i32 : i32
    %129 = arith.extui %128 : i1 to i32
    %c0_i32_62 = arith.constant 0 : i32
    %130 = arith.cmpi ne, %129, %c0_i32_62 : i32
    scf.if %130 {
      %c0_63 = arith.constant 0 : index
      %c0_64 = arith.constant 0 : index
      %131 = vector.load %arg20[%c0_63, %c0_64] : memref<8x64xf32, #tpu.memory_space<vmem>>, vector<8x64xf32>
      %c0_65 = arith.constant 0 : index
      %c0_66 = arith.constant 0 : index
      %132 = vector.load %arg3[%c0_65, %c0_66] : memref<8x8xf32, #tpu.memory_space<vmem>>, vector<8x8xf32>
      %cst_67 = arith.constant dense<0.000000e+00> : vector<8xf32>
      %133 = vector.multi_reduction <add>, %132, %cst_67 [1] : vector<8x8xf32> to vector<8xf32>
      %134 = vector.shape_cast %133 : vector<8xf32> to vector<8x1xf32>
      %cst_68 = arith.constant 9.99999996E-13 : f32
      %135 = vector.broadcast %cst_68 : f32 to vector<8x1xf32>
      %136 = arith.maximumf %134, %135 : vector<8x1xf32>
      %137 = tpu.reciprocal %136 : vector<8x1xf32> -> vector<8x1xf32>
      %138 = vector.broadcast %137 : vector<8x1xf32> to vector<8x8xf32>
      %139 = arith.mulf %132, %138 : vector<8x8xf32>
      %140 = arith.truncf %139 : vector<8x8xf32> to vector<8x8xbf16>
      %141 = arith.truncf %131 : vector<8x64xf32> to vector<8x64xbf16>
      %cst_69 = arith.constant dense<0.000000e+00> : vector<8x64xf32>
      %142 = tpu.matmul %140, %141, %cst_69 {dimension_numbers = #tpu.dot_dimension_numbers<[1], [0], [0], [1], [0, 0, 1, 1], [], []>} : vector<8x8xbf16>, vector<8x64xbf16>, vector<8x64xf32> -> vector<8x64xf32>
      %c0_70 = arith.constant 0 : index
      %c0_71 = arith.constant 0 : index
      %c0_72 = arith.constant 0 : index
      %143 = vector.load %arg15[%c0_70, %c0_71, %c0_72] : memref<2x64x64xf32, #tpu.memory_space<vmem>>, vector<1x64x64xf32>
      %144 = vector.shape_cast %143 : vector<1x64x64xf32> to vector<64x64xf32>
      %145 = arith.truncf %142 : vector<8x64xf32> to vector<8x64xbf16>
      %146 = arith.truncf %144 : vector<64x64xf32> to vector<64x64xbf16>
      %cst_73 = arith.constant dense<0.000000e+00> : vector<8x64xf32>
      %147 = tpu.matmul %145, %146, %cst_73 {dimension_numbers = #tpu.dot_dimension_numbers<[1], [0], [0], [1], [0, 0, 1, 1], [], []>} : vector<8x64xbf16>, vector<64x64xbf16>, vector<8x64xf32> -> vector<8x64xf32>
      %cst_74 = arith.constant 0.000000e+00 : f32
      %148 = vector.broadcast %cst_74 : f32 to vector<8x64xf32>
      %149 = arith.maximumf %147, %148 : vector<8x64xf32>
      %150 = arith.mulf %149, %149 : vector<8x64xf32>
      %cst_75 = arith.constant dense<0.000000e+00> : vector<8xf32>
      %151 = vector.multi_reduction <add>, %150, %cst_75 [1] : vector<8x64xf32> to vector<8xf32>
      %152 = vector.shape_cast %151 : vector<8xf32> to vector<8x1xf32>
      %cst_76 = arith.constant 1.000000e-24 : f32
      %153 = vector.broadcast %cst_76 : f32 to vector<8x1xf32>
      %154 = arith.maximumf %152, %153 : vector<8x1xf32>
      %155 = math.rsqrt %154 : vector<8x1xf32>
      %156 = vector.broadcast %155 : vector<8x1xf32> to vector<8x64xf32>
      %157 = arith.mulf %149, %156 : vector<8x64xf32>
      %158 = arith.truncf %139 : vector<8x8xf32> to vector<8x8xbf16>
      %159 = arith.truncf %157 : vector<8x64xf32> to vector<8x64xbf16>
      %cst_77 = arith.constant dense<0.000000e+00> : vector<8x64xf32>
      %160 = tpu.matmul %158, %159, %cst_77 {dimension_numbers = #tpu.dot_dimension_numbers<[1], [0], [0], [1], [0, 0, 1, 1], [], []>} : vector<8x8xbf16>, vector<8x64xbf16>, vector<8x64xf32> -> vector<8x64xf32>
      %c1 = arith.constant 1 : index
      %c0_78 = arith.constant 0 : index
      %c0_79 = arith.constant 0 : index
      %161 = vector.load %arg15[%c1, %c0_78, %c0_79] : memref<2x64x64xf32, #tpu.memory_space<vmem>>, vector<1x64x64xf32>
      %162 = vector.shape_cast %161 : vector<1x64x64xf32> to vector<64x64xf32>
      %163 = arith.truncf %160 : vector<8x64xf32> to vector<8x64xbf16>
      %164 = arith.truncf %162 : vector<64x64xf32> to vector<64x64xbf16>
      %cst_80 = arith.constant dense<0.000000e+00> : vector<8x64xf32>
      %165 = tpu.matmul %163, %164, %cst_80 {dimension_numbers = #tpu.dot_dimension_numbers<[1], [0], [0], [1], [0, 0, 1, 1], [], []>} : vector<8x64xbf16>, vector<64x64xbf16>, vector<8x64xf32> -> vector<8x64xf32>
      %cst_81 = arith.constant 0.000000e+00 : f32
      %166 = vector.broadcast %cst_81 : f32 to vector<8x64xf32>
      %167 = arith.maximumf %165, %166 : vector<8x64xf32>
      %168 = arith.mulf %167, %167 : vector<8x64xf32>
      %cst_82 = arith.constant dense<0.000000e+00> : vector<8xf32>
      %169 = vector.multi_reduction <add>, %168, %cst_82 [1] : vector<8x64xf32> to vector<8xf32>
      %170 = vector.shape_cast %169 : vector<8xf32> to vector<8x1xf32>
      %cst_83 = arith.constant 1.000000e-24 : f32
      %171 = vector.broadcast %cst_83 : f32 to vector<8x1xf32>
      %172 = arith.maximumf %170, %171 : vector<8x1xf32>
      %173 = math.rsqrt %172 : vector<8x1xf32>
      %174 = vector.broadcast %173 : vector<8x1xf32> to vector<8x64xf32>
      %175 = arith.mulf %167, %174 : vector<8x64xf32>
      %cst_84 = arith.constant 0.000000e+00 : f32
      %176 = vector.broadcast %cst_84 : f32 to vector<8x64xf32>
      %cst_85 = arith.constant 0.000000e+00 : f32
      %177 = vector.broadcast %cst_85 : f32 to vector<8x64xf32>
      %cst_86 = arith.constant 0.000000e+00 : f32
      %178 = vector.broadcast %cst_86 : f32 to vector<8x64xf32>
      %cst_87 = arith.constant 0.000000e+00 : f32
      %179 = vector.broadcast %cst_87 : f32 to vector<8x64xf32>
      %cst_88 = arith.constant 0.000000e+00 : f32
      %180 = vector.broadcast %cst_88 : f32 to vector<8x64xf32>
      %c0_89 = arith.constant 0 : index
      %c0_90 = arith.constant 0 : index
      %c0_91 = arith.constant 0 : index
      %181 = vector.load %arg16[%c0_89, %c0_90, %c0_91] : memref<2x64x256xf32, #tpu.memory_space<vmem>>, vector<1x64x256xf32>
      %182 = vector.shape_cast %181 : vector<1x64x256xf32> to vector<64x256xf32>
      %183 = arith.truncf %157 : vector<8x64xf32> to vector<8x64xbf16>
      %184 = arith.truncf %182 : vector<64x256xf32> to vector<64x256xbf16>
      %cst_92 = arith.constant dense<0.000000e+00> : vector<8x256xf32>
      %185 = tpu.matmul %183, %184, %cst_92 {dimension_numbers = #tpu.dot_dimension_numbers<[1], [0], [0], [1], [0, 0, 1, 1], [], []>} : vector<8x64xbf16>, vector<64x256xbf16>, vector<8x256xf32> -> vector<8x256xf32>
      %c0_93 = arith.constant 0 : index
      %c0_94 = arith.constant 0 : index
      %c0_95 = arith.constant 0 : index
      %186 = vector.load %arg17[%c0_93, %c0_94, %c0_95] : memref<2x64x256xf32, #tpu.memory_space<vmem>>, vector<1x64x256xf32>
      %187 = vector.shape_cast %186 : vector<1x64x256xf32> to vector<64x256xf32>
      %188 = arith.truncf %176 : vector<8x64xf32> to vector<8x64xbf16>
      %189 = arith.truncf %187 : vector<64x256xf32> to vector<64x256xbf16>
      %cst_96 = arith.constant dense<0.000000e+00> : vector<8x256xf32>
      %190 = tpu.matmul %188, %189, %cst_96 {dimension_numbers = #tpu.dot_dimension_numbers<[1], [0], [0], [1], [0, 0, 1, 1], [], []>} : vector<8x64xbf16>, vector<64x256xbf16>, vector<8x256xf32> -> vector<8x256xf32>
      %191 = arith.addf %185, %190 : vector<8x256xf32>
      %c0_97 = arith.constant 0 : index
      %c0_98 = arith.constant 0 : index
      %c0_99 = arith.constant 0 : index
      %192 = vector.load %arg18[%c0_97, %c0_98, %c0_99] : memref<2x1x256xf32, #tpu.memory_space<vmem>>, vector<1x1x256xf32>
      %193 = vector.shape_cast %192 : vector<1x1x256xf32> to vector<1x256xf32>
      %194 = vector.broadcast %193 : vector<1x256xf32> to vector<8x256xf32>
      %195 = arith.addf %191, %194 : vector<8x256xf32>
      %196 = vector.extract_strided_slice %195 {offsets = [0, 0], sizes = [8, 64], strides = [1, 1]} : vector<8x256xf32> to vector<8x64xf32>
      %197 = arith.negf %196 : vector<8x64xf32>
      %198 = math.exp %197 : vector<8x64xf32>
      %cst_100 = arith.constant 1.000000e+00 : f32
      %199 = vector.broadcast %cst_100 : f32 to vector<8x64xf32>
      %200 = arith.addf %199, %198 : vector<8x64xf32>
      %201 = arith.divf %199, %200 : vector<8x64xf32>
      %202 = vector.extract_strided_slice %195 {offsets = [0, 64], sizes = [8, 64], strides = [1, 1]} : vector<8x256xf32> to vector<8x64xf32>
      %203 = arith.negf %202 : vector<8x64xf32>
      %204 = math.exp %203 : vector<8x64xf32>
      %cst_101 = arith.constant 1.000000e+00 : f32
      %205 = vector.broadcast %cst_101 : f32 to vector<8x64xf32>
      %206 = arith.addf %205, %204 : vector<8x64xf32>
      %207 = arith.divf %205, %206 : vector<8x64xf32>
      %208 = vector.extract_strided_slice %195 {offsets = [0, 128], sizes = [8, 64], strides = [1, 1]} : vector<8x256xf32> to vector<8x64xf32>
      %209 = math.tanh %208 : vector<8x64xf32>
      %210 = vector.extract_strided_slice %195 {offsets = [0, 192], sizes = [8, 64], strides = [1, 1]} : vector<8x256xf32> to vector<8x64xf32>
      %211 = arith.negf %210 : vector<8x64xf32>
      %212 = math.exp %211 : vector<8x64xf32>
      %cst_102 = arith.constant 1.000000e+00 : f32
      %213 = vector.broadcast %cst_102 : f32 to vector<8x64xf32>
      %214 = arith.addf %213, %212 : vector<8x64xf32>
      %215 = arith.divf %213, %214 : vector<8x64xf32>
      %216 = arith.mulf %207, %178 : vector<8x64xf32>
      %217 = arith.mulf %201, %209 : vector<8x64xf32>
      %218 = arith.addf %216, %217 : vector<8x64xf32>
      %219 = math.tanh %218 : vector<8x64xf32>
      %220 = arith.mulf %215, %219 : vector<8x64xf32>
      %c1_103 = arith.constant 1 : index
      %c0_104 = arith.constant 0 : index
      %c0_105 = arith.constant 0 : index
      %221 = vector.load %arg16[%c1_103, %c0_104, %c0_105] : memref<2x64x256xf32, #tpu.memory_space<vmem>>, vector<1x64x256xf32>
      %222 = vector.shape_cast %221 : vector<1x64x256xf32> to vector<64x256xf32>
      %223 = arith.truncf %220 : vector<8x64xf32> to vector<8x64xbf16>
      %224 = arith.truncf %222 : vector<64x256xf32> to vector<64x256xbf16>
      %cst_106 = arith.constant dense<0.000000e+00> : vector<8x256xf32>
      %225 = tpu.matmul %223, %224, %cst_106 {dimension_numbers = #tpu.dot_dimension_numbers<[1], [0], [0], [1], [0, 0, 1, 1], [], []>} : vector<8x64xbf16>, vector<64x256xbf16>, vector<8x256xf32> -> vector<8x256xf32>
      %c1_107 = arith.constant 1 : index
      %c0_108 = arith.constant 0 : index
      %c0_109 = arith.constant 0 : index
      %226 = vector.load %arg17[%c1_107, %c0_108, %c0_109] : memref<2x64x256xf32, #tpu.memory_space<vmem>>, vector<1x64x256xf32>
      %227 = vector.shape_cast %226 : vector<1x64x256xf32> to vector<64x256xf32>
      %228 = arith.truncf %177 : vector<8x64xf32> to vector<8x64xbf16>
      %229 = arith.truncf %227 : vector<64x256xf32> to vector<64x256xbf16>
      %cst_110 = arith.constant dense<0.000000e+00> : vector<8x256xf32>
      %230 = tpu.matmul %228, %229, %cst_110 {dimension_numbers = #tpu.dot_dimension_numbers<[1], [0], [0], [1], [0, 0, 1, 1], [], []>} : vector<8x64xbf16>, vector<64x256xbf16>, vector<8x256xf32> -> vector<8x256xf32>
      %231 = arith.addf %225, %230 : vector<8x256xf32>
      %c1_111 = arith.constant 1 : index
      %c0_112 = arith.constant 0 : index
      %c0_113 = arith.constant 0 : index
      %232 = vector.load %arg18[%c1_111, %c0_112, %c0_113] : memref<2x1x256xf32, #tpu.memory_space<vmem>>, vector<1x1x256xf32>
      %233 = vector.shape_cast %232 : vector<1x1x256xf32> to vector<1x256xf32>
      %234 = vector.broadcast %233 : vector<1x256xf32> to vector<8x256xf32>
      %235 = arith.addf %231, %234 : vector<8x256xf32>
      %236 = vector.extract_strided_slice %235 {offsets = [0, 0], sizes = [8, 64], strides = [1, 1]} : vector<8x256xf32> to vector<8x64xf32>
      %237 = arith.negf %236 : vector<8x64xf32>
      %238 = math.exp %237 : vector<8x64xf32>
      %cst_114 = arith.constant 1.000000e+00 : f32
      %239 = vector.broadcast %cst_114 : f32 to vector<8x64xf32>
      %240 = arith.addf %239, %238 : vector<8x64xf32>
      %241 = arith.divf %239, %240 : vector<8x64xf32>
      %242 = vector.extract_strided_slice %235 {offsets = [0, 64], sizes = [8, 64], strides = [1, 1]} : vector<8x256xf32> to vector<8x64xf32>
      %243 = arith.negf %242 : vector<8x64xf32>
      %244 = math.exp %243 : vector<8x64xf32>
      %cst_115 = arith.constant 1.000000e+00 : f32
      %245 = vector.broadcast %cst_115 : f32 to vector<8x64xf32>
      %246 = arith.addf %245, %244 : vector<8x64xf32>
      %247 = arith.divf %245, %246 : vector<8x64xf32>
      %248 = vector.extract_strided_slice %235 {offsets = [0, 128], sizes = [8, 64], strides = [1, 1]} : vector<8x256xf32> to vector<8x64xf32>
      %249 = math.tanh %248 : vector<8x64xf32>
      %250 = vector.extract_strided_slice %235 {offsets = [0, 192], sizes = [8, 64], strides = [1, 1]} : vector<8x256xf32> to vector<8x64xf32>
      %251 = arith.negf %250 : vector<8x64xf32>
      %252 = math.exp %251 : vector<8x64xf32>
      %cst_116 = arith.constant 1.000000e+00 : f32
      %253 = vector.broadcast %cst_116 : f32 to vector<8x64xf32>
      %254 = arith.addf %253, %252 : vector<8x64xf32>
      %255 = arith.divf %253, %254 : vector<8x64xf32>
      %256 = arith.mulf %247, %179 : vector<8x64xf32>
      %257 = arith.mulf %241, %249 : vector<8x64xf32>
      %258 = arith.addf %256, %257 : vector<8x64xf32>
      %259 = math.tanh %258 : vector<8x64xf32>
      %260 = arith.mulf %255, %259 : vector<8x64xf32>
      %261 = arith.addf %180, %260 : vector<8x64xf32>
      %c0_117 = arith.constant 0 : index
      %c0_118 = arith.constant 0 : index
      %c0_119 = arith.constant 0 : index
      %262 = vector.load %arg16[%c0_117, %c0_118, %c0_119] : memref<2x64x256xf32, #tpu.memory_space<vmem>>, vector<1x64x256xf32>
      %263 = vector.shape_cast %262 : vector<1x64x256xf32> to vector<64x256xf32>
      %264 = arith.truncf %175 : vector<8x64xf32> to vector<8x64xbf16>
      %265 = arith.truncf %263 : vector<64x256xf32> to vector<64x256xbf16>
      %cst_120 = arith.constant dense<0.000000e+00> : vector<8x256xf32>
      %266 = tpu.matmul %264, %265, %cst_120 {dimension_numbers = #tpu.dot_dimension_numbers<[1], [0], [0], [1], [0, 0, 1, 1], [], []>} : vector<8x64xbf16>, vector<64x256xbf16>, vector<8x256xf32> -> vector<8x256xf32>
      %c0_121 = arith.constant 0 : index
      %c0_122 = arith.constant 0 : index
      %c0_123 = arith.constant 0 : index
      %267 = vector.load %arg17[%c0_121, %c0_122, %c0_123] : memref<2x64x256xf32, #tpu.memory_space<vmem>>, vector<1x64x256xf32>
      %268 = vector.shape_cast %267 : vector<1x64x256xf32> to vector<64x256xf32>
      %269 = arith.truncf %220 : vector<8x64xf32> to vector<8x64xbf16>
      %270 = arith.truncf %268 : vector<64x256xf32> to vector<64x256xbf16>
      %cst_124 = arith.constant dense<0.000000e+00> : vector<8x256xf32>
      %271 = tpu.matmul %269, %270, %cst_124 {dimension_numbers = #tpu.dot_dimension_numbers<[1], [0], [0], [1], [0, 0, 1, 1], [], []>} : vector<8x64xbf16>, vector<64x256xbf16>, vector<8x256xf32> -> vector<8x256xf32>
      %272 = arith.addf %266, %271 : vector<8x256xf32>
      %c0_125 = arith.constant 0 : index
      %c0_126 = arith.constant 0 : index
      %c0_127 = arith.constant 0 : index
      %273 = vector.load %arg18[%c0_125, %c0_126, %c0_127] : memref<2x1x256xf32, #tpu.memory_space<vmem>>, vector<1x1x256xf32>
      %274 = vector.shape_cast %273 : vector<1x1x256xf32> to vector<1x256xf32>
      %275 = vector.broadcast %274 : vector<1x256xf32> to vector<8x256xf32>
      %276 = arith.addf %272, %275 : vector<8x256xf32>
      %277 = vector.extract_strided_slice %276 {offsets = [0, 0], sizes = [8, 64], strides = [1, 1]} : vector<8x256xf32> to vector<8x64xf32>
      %278 = arith.negf %277 : vector<8x64xf32>
      %279 = math.exp %278 : vector<8x64xf32>
      %cst_128 = arith.constant 1.000000e+00 : f32
      %280 = vector.broadcast %cst_128 : f32 to vector<8x64xf32>
      %281 = arith.addf %280, %279 : vector<8x64xf32>
      %282 = arith.divf %280, %281 : vector<8x64xf32>
      %283 = vector.extract_strided_slice %276 {offsets = [0, 64], sizes = [8, 64], strides = [1, 1]} : vector<8x256xf32> to vector<8x64xf32>
      %284 = arith.negf %283 : vector<8x64xf32>
      %285 = math.exp %284 : vector<8x64xf32>
      %cst_129 = arith.constant 1.000000e+00 : f32
      %286 = vector.broadcast %cst_129 : f32 to vector<8x64xf32>
      %287 = arith.addf %286, %285 : vector<8x64xf32>
      %288 = arith.divf %286, %287 : vector<8x64xf32>
      %289 = vector.extract_strided_slice %276 {offsets = [0, 128], sizes = [8, 64], strides = [1, 1]} : vector<8x256xf32> to vector<8x64xf32>
      %290 = math.tanh %289 : vector<8x64xf32>
      %291 = vector.extract_strided_slice %276 {offsets = [0, 192], sizes = [8, 64], strides = [1, 1]} : vector<8x256xf32> to vector<8x64xf32>
      %292 = arith.negf %291 : vector<8x64xf32>
      %293 = math.exp %292 : vector<8x64xf32>
      %cst_130 = arith.constant 1.000000e+00 : f32
      %294 = vector.broadcast %cst_130 : f32 to vector<8x64xf32>
      %295 = arith.addf %294, %293 : vector<8x64xf32>
      %296 = arith.divf %294, %295 : vector<8x64xf32>
      %297 = arith.mulf %288, %218 : vector<8x64xf32>
      %298 = arith.mulf %282, %290 : vector<8x64xf32>
      %299 = arith.addf %297, %298 : vector<8x64xf32>
      %300 = math.tanh %299 : vector<8x64xf32>
      %301 = arith.mulf %296, %300 : vector<8x64xf32>
      %c1_131 = arith.constant 1 : index
      %c0_132 = arith.constant 0 : index
      %c0_133 = arith.constant 0 : index
      %302 = vector.load %arg16[%c1_131, %c0_132, %c0_133] : memref<2x64x256xf32, #tpu.memory_space<vmem>>, vector<1x64x256xf32>
      %303 = vector.shape_cast %302 : vector<1x64x256xf32> to vector<64x256xf32>
      %304 = arith.truncf %301 : vector<8x64xf32> to vector<8x64xbf16>
      %305 = arith.truncf %303 : vector<64x256xf32> to vector<64x256xbf16>
      %cst_134 = arith.constant dense<0.000000e+00> : vector<8x256xf32>
      %306 = tpu.matmul %304, %305, %cst_134 {dimension_numbers = #tpu.dot_dimension_numbers<[1], [0], [0], [1], [0, 0, 1, 1], [], []>} : vector<8x64xbf16>, vector<64x256xbf16>, vector<8x256xf32> -> vector<8x256xf32>
      %c1_135 = arith.constant 1 : index
      %c0_136 = arith.constant 0 : index
      %c0_137 = arith.constant 0 : index
      %307 = vector.load %arg17[%c1_135, %c0_136, %c0_137] : memref<2x64x256xf32, #tpu.memory_space<vmem>>, vector<1x64x256xf32>
      %308 = vector.shape_cast %307 : vector<1x64x256xf32> to vector<64x256xf32>
      %309 = arith.truncf %260 : vector<8x64xf32> to vector<8x64xbf16>
      %310 = arith.truncf %308 : vector<64x256xf32> to vector<64x256xbf16>
      %cst_138 = arith.constant dense<0.000000e+00> : vector<8x256xf32>
      %311 = tpu.matmul %309, %310, %cst_138 {dimension_numbers = #tpu.dot_dimension_numbers<[1], [0], [0], [1], [0, 0, 1, 1], [], []>} : vector<8x64xbf16>, vector<64x256xbf16>, vector<8x256xf32> -> vector<8x256xf32>
      %312 = arith.addf %306, %311 : vector<8x256xf32>
      %c1_139 = arith.constant 1 : index
      %c0_140 = arith.constant 0 : index
      %c0_141 = arith.constant 0 : index
      %313 = vector.load %arg18[%c1_139, %c0_140, %c0_141] : memref<2x1x256xf32, #tpu.memory_space<vmem>>, vector<1x1x256xf32>
      %314 = vector.shape_cast %313 : vector<1x1x256xf32> to vector<1x256xf32>
      %315 = vector.broadcast %314 : vector<1x256xf32> to vector<8x256xf32>
      %316 = arith.addf %312, %315 : vector<8x256xf32>
      %317 = vector.extract_strided_slice %316 {offsets = [0, 0], sizes = [8, 64], strides = [1, 1]} : vector<8x256xf32> to vector<8x64xf32>
      %318 = arith.negf %317 : vector<8x64xf32>
      %319 = math.exp %318 : vector<8x64xf32>
      %cst_142 = arith.constant 1.000000e+00 : f32
      %320 = vector.broadcast %cst_142 : f32 to vector<8x64xf32>
      %321 = arith.addf %320, %319 : vector<8x64xf32>
      %322 = arith.divf %320, %321 : vector<8x64xf32>
      %323 = vector.extract_strided_slice %316 {offsets = [0, 64], sizes = [8, 64], strides = [1, 1]} : vector<8x256xf32> to vector<8x64xf32>
      %324 = arith.negf %323 : vector<8x64xf32>
      %325 = math.exp %324 : vector<8x64xf32>
      %cst_143 = arith.constant 1.000000e+00 : f32
      %326 = vector.broadcast %cst_143 : f32 to vector<8x64xf32>
      %327 = arith.addf %326, %325 : vector<8x64xf32>
      %328 = arith.divf %326, %327 : vector<8x64xf32>
      %329 = vector.extract_strided_slice %316 {offsets = [0, 128], sizes = [8, 64], strides = [1, 1]} : vector<8x256xf32> to vector<8x64xf32>
      %330 = math.tanh %329 : vector<8x64xf32>
      %331 = vector.extract_strided_slice %316 {offsets = [0, 192], sizes = [8, 64], strides = [1, 1]} : vector<8x256xf32> to vector<8x64xf32>
      %332 = arith.negf %331 : vector<8x64xf32>
      %333 = math.exp %332 : vector<8x64xf32>
      %cst_144 = arith.constant 1.000000e+00 : f32
      %334 = vector.broadcast %cst_144 : f32 to vector<8x64xf32>
      %335 = arith.addf %334, %333 : vector<8x64xf32>
      %336 = arith.divf %334, %335 : vector<8x64xf32>
      %337 = arith.mulf %328, %258 : vector<8x64xf32>
      %338 = arith.mulf %322, %330 : vector<8x64xf32>
      %339 = arith.addf %337, %338 : vector<8x64xf32>
      %340 = math.tanh %339 : vector<8x64xf32>
      %341 = arith.mulf %336, %340 : vector<8x64xf32>
      %342 = arith.addf %261, %341 : vector<8x64xf32>
      %cst_145 = arith.constant 5.000000e-01 : f32
      %343 = vector.broadcast %cst_145 : f32 to vector<8x64xf32>
      %344 = arith.mulf %342, %343 : vector<8x64xf32>
      %c0_146 = arith.constant 0 : index
      %c0_147 = arith.constant 0 : index
      %345 = vector.load %arg19[%c0_146, %c0_147] : memref<8x64xf32, #tpu.memory_space<vmem>>, vector<8x64xf32>
      tpu.vector_store %arg19[%c0_146, %c0_147], %344 {strides = array<i32>} : memref<8x64xf32, #tpu.memory_space<vmem>>, vector<8x64xf32>,
    } else {
    }
    return
  }
  func.func @transform_0(%arg0: i32) -> (i32, i32) {
    %c0_i32 = arith.constant 0 : i32
    %c0_i32_0 = arith.constant 0 : i32
    %c0_i32_1 = arith.constant 0 : i32
    return %c0_i32, %c0_i32_0 : i32, i32
  }
  func.func @transform_1(%arg0: i32) -> (i32, i32) {
    %c0_i32 = arith.constant 0 : i32
    %c0_i32_0 = arith.constant 0 : i32
    %c0_i32_1 = arith.constant 0 : i32
    return %c0_i32, %c0_i32_0 : i32, i32
  }
  func.func @transform_2(%arg0: i32) -> (i32, i32) {
    %c0_i32 = arith.constant 0 : i32
    %c0_i32_0 = arith.constant 0 : i32
    %c0_i32_1 = arith.constant 0 : i32
    return %c0_i32, %c0_i32_0 : i32, i32
  }
  func.func @transform_3(%arg0: i32) -> (i32, i32, i32) {
    %c0_i32 = arith.constant 0 : i32
    %c0_i32_0 = arith.constant 0 : i32
    %c0_i32_1 = arith.constant 0 : i32
    return %arg0, %c0_i32, %c0_i32_0 : i32, i32, i32
  }
  func.func @transform_4(%arg0: i32) -> (i32, i32, i32) {
    %c0_i32 = arith.constant 0 : i32
    %c0_i32_0 = arith.constant 0 : i32
    %c0_i32_1 = arith.constant 0 : i32
    return %arg0, %c0_i32, %c0_i32_0 : i32, i32, i32
  }
  func.func @transform_5(%arg0: i32) -> (i32, i32, i32, i32, i32) {
    %c0_i32 = arith.constant 0 : i32
    %c0_i32_0 = arith.constant 0 : i32
    %c0_i32_1 = arith.constant 0 : i32
    %c0_i32_2 = arith.constant 0 : i32
    %c0_i32_3 = arith.constant 0 : i32
    return %arg0, %c0_i32, %c0_i32_0, %c0_i32_1, %c0_i32_2 : i32, i32, i32, i32, i32
  }
  func.func @transform_6(%arg0: i32) -> (i32, i32, i32, i32) {
    %c0_i32 = arith.constant 0 : i32
    %c0_i32_0 = arith.constant 0 : i32
    %c0_i32_1 = arith.constant 0 : i32
    %c0_i32_2 = arith.constant 0 : i32
    return %arg0, %c0_i32, %c0_i32_0, %c0_i32_1 : i32, i32, i32, i32
  }
  func.func @transform_7(%arg0: i32) -> (i32, i32, i32) {
    %c0_i32 = arith.constant 0 : i32
    %c0_i32_0 = arith.constant 0 : i32
    %c0_i32_1 = arith.constant 0 : i32
    return %arg0, %c0_i32, %c0_i32_0 : i32, i32, i32
  }
  func.func @transform_8(%arg0: i32) -> (i32, i32, i32) {
    %c0_i32 = arith.constant 0 : i32
    %c0_i32_0 = arith.constant 0 : i32
    %c0_i32_1 = arith.constant 0 : i32
    return %arg0, %c0_i32, %c0_i32_0 : i32, i32, i32
  }
  func.func @transform_9(%arg0: i32) -> (i32, i32, i32) {
    %c0_i32 = arith.constant 0 : i32
    %c0_i32_0 = arith.constant 0 : i32
    %c0_i32_1 = arith.constant 0 : i32
    return %arg0, %c0_i32, %c0_i32_0 : i32, i32, i32
  }
  func.func @transform_10(%arg0: i32) -> (i32, i32, i32) {
    %c0_i32 = arith.constant 0 : i32
    %c0_i32_0 = arith.constant 0 : i32
    %c0_i32_1 = arith.constant 0 : i32
    return %arg0, %c0_i32, %c0_i32_0 : i32, i32, i32
  }
  func.func @transform_11(%arg0: i32) -> (i32, i32, i32) {
    %c0_i32 = arith.constant 0 : i32
    %c0_i32_0 = arith.constant 0 : i32
    %c0_i32_1 = arith.constant 0 : i32
    return %arg0, %c0_i32, %c0_i32_0 : i32, i32, i32
  }
  func.func @transform_12(%arg0: i32) -> (i32, i32, i32) {
    %c0_i32 = arith.constant 0 : i32
    %c0_i32_0 = arith.constant 0 : i32
    %c0_i32_1 = arith.constant 0 : i32
    return %arg0, %c0_i32, %c0_i32_0 : i32, i32, i32
  }
  func.func @transform_13(%arg0: i32) -> (i32, i32, i32) {
    %c0_i32 = arith.constant 0 : i32
    %c0_i32_0 = arith.constant 0 : i32
    %c0_i32_1 = arith.constant 0 : i32
    return %arg0, %c0_i32, %c0_i32_0 : i32, i32, i32
  }
  func.func @transform_14(%arg0: i32) -> (i32, i32, i32) {
    %c0_i32 = arith.constant 0 : i32
    %c0_i32_0 = arith.constant 0 : i32
    %c0_i32_1 = arith.constant 0 : i32
    %c0_i32_2 = arith.constant 0 : i32
    return %c0_i32, %c0_i32_0, %c0_i32_1 : i32, i32, i32
  }
  func.func @transform_15(%arg0: i32) -> (i32, i32, i32) {
    %c0_i32 = arith.constant 0 : i32
    %c0_i32_0 = arith.constant 0 : i32
    %c0_i32_1 = arith.constant 0 : i32
    %c0_i32_2 = arith.constant 0 : i32
    return %c0_i32, %c0_i32_0, %c0_i32_1 : i32, i32, i32
  }
  func.func @transform_16(%arg0: i32) -> (i32, i32, i32) {
    %c0_i32 = arith.constant 0 : i32
    %c0_i32_0 = arith.constant 0 : i32
    %c0_i32_1 = arith.constant 0 : i32
    %c0_i32_2 = arith.constant 0 : i32
    return %c0_i32, %c0_i32_0, %c0_i32_1 : i32, i32, i32
  }
  func.func @transform_17(%arg0: i32) -> (i32, i32, i32) {
    %c0_i32 = arith.constant 0 : i32
    %c0_i32_0 = arith.constant 0 : i32
    %c0_i32_1 = arith.constant 0 : i32
    %c0_i32_2 = arith.constant 0 : i32
    return %c0_i32, %c0_i32_0, %c0_i32_1 : i32, i32, i32
  }
  func.func @transform_18(%arg0: i32) -> (i32, i32) {
    %c0_i32 = arith.constant 0 : i32
    %c0_i32_0 = arith.constant 0 : i32
    %c0_i32_1 = arith.constant 0 : i32
    return %c0_i32, %c0_i32_0 : i32, i32
  }
}

</mosaic_0001>

<llo_original>
// kernel: _lambda_.2
$region0: #{_lambda_.2}
  #allocation0 [shape = 'u32[]', space=smem, size = 0x4, offset = 0x4, fixed_abs, tag = 'smem constant byte address 0x4 - core index']
  #allocation1 [shape = 'u32[72,128]{1,0:T(1,128)}', space=vmem, size = 0x9000, scoped, tag = 'internal scratch']
  #allocation2 [shape = 'f32[1,1]{1,0:T(1,128)S(1)}', space=vmem, size = 0x200, scoped, tag = 'scoped memory for _lambda_.2']
  %s0 = inlined_call_operand.vmem [shape: f32[8,512], index: 0, kind: input, shape index: {}]
  %s1 = inlined_call_operand.vmem [shape: f32[2,9,8,512], index: 1, kind: input, shape index: {}]
  %s2 = inlined_call_operand.vmem [shape: f32[2,9,8,512], index: 2, kind: input, shape index: {}]
  %s3 = inlined_call_operand.vmem [shape: f32[2,8,1], index: 3, kind: input, shape index: {}]
  %s4 = inlined_call_operand.vmem [shape: f32[2,8,1], index: 4, kind: input, shape index: {}]
  %s5 = inlined_call_operand.vmem [shape: f32[2,8,1], index: 5, kind: input, shape index: {}]
  %s6 = inlined_call_operand.vmem [shape: f32[2,8,1], index: 6, kind: input, shape index: {}]
  %s7 = inlined_call_operand.vmem [shape: f32[2,8,8], index: 7, kind: input, shape index: {}]
  %s8 = inlined_call_operand.vmem [shape: f32[2,8,1], index: 8, kind: input, shape index: {}]
  %s9 = inlined_call_operand.vmem [shape: f32[2,8,1], index: 9, kind: input, shape index: {}]
  %s10 = inlined_call_operand.vmem [shape: f32[2,8,1], index: 10, kind: input, shape index: {}]
  %s11 = inlined_call_operand.vmem [shape: f32[1,8], index: 11, kind: input, shape index: {}]
  %s12 = inlined_call_operand.<no memory space> [shape: f32[1,1], index: 12, kind: input, shape index: {}]
  %s13 = inlined_call_operand.vmem [shape: f32[1,512], index: 13, kind: output, shape index: {}]
  %s14 = sld [smem:[#allocation0]]
  $region62: #{_lambda_.2} parent=0
    _
  %s16 = ssub.s32 1, %s14
  %s17 = scalar_select 0, %s16, %s14
  %v18 = vstv %s12
  %19 = vst [vmem:[#allocation2] sm:$0x1] %v18
  // Predicated region
  $region2: #{_lambda_.2} parent=0 // pred_check
    _
  $region3: #{_lambda_.2} parent=0 // pred_check_branch
    %21 = sbr.rel (0) target = $region5
  $region4: #{_lambda_.2} parent=0 // pred_region
    _
  $region5: #{_lambda_.2} parent=0 // pred_fallthru
    _
  // Predicated region
  $region6: #{_lambda_.2} parent=0 // pred_check
    _
  $region7: #{_lambda_.2} parent=0 // pred_check_branch
    %23 = sbr.rel (0) target = $region9
  $region8: #{_lambda_.2} parent=0 // pred_region
    _
  $region9: #{_lambda_.2} parent=0 // pred_fallthru
    _
  // Predicated region
  $region10: #{_lambda_.2} parent=0 // pred_check
    _
  $region11: #{_lambda_.2} parent=0 // pred_check_branch
    %25 = sbr.rel (0) target = $region13
  $region12: #{_lambda_.2} parent=0 // pred_region
    _
  $region13: #{_lambda_.2} parent=0 // pred_fallthru
    _
  // Predicated region
  $region14: #{_lambda_.2} parent=0 // pred_check
    _
  $region15: #{_lambda_.2} parent=0 // pred_check_branch
    %27 = sbr.rel (0) target = $region17
  $region16: #{_lambda_.2} parent=0 // pred_region
    _
  $region17: #{_lambda_.2} parent=0 // pred_fallthru
    _
  // Predicated region
  $region18: #{_lambda_.2} parent=0 // pred_check
    _
  $region19: #{_lambda_.2} parent=0 // pred_check_branch
    %29 = sbr.rel (0) target = $region21
  $region20: #{_lambda_.2} parent=0 // pred_region
    _
  $region21: #{_lambda_.2} parent=0 // pred_fallthru
    _
  // Predicated region
  $region22: #{_lambda_.2} parent=0 // pred_check
    _
  $region23: #{_lambda_.2} parent=0 // pred_check_branch
    %31 = sbr.rel (0) target = $region25
  $region24: #{_lambda_.2} parent=0 // pred_region
    _
  $region25: #{_lambda_.2} parent=0 // pred_fallthru
    _
  // Predicated region
  $region26: #{_lambda_.2} parent=0 // pred_check
    _
  $region27: #{_lambda_.2} parent=0 // pred_check_branch
    %33 = sbr.rel (0) target = $region29
  $region28: #{_lambda_.2} parent=0 // pred_region
    _
  $region29: #{_lambda_.2} parent=0 // pred_fallthru
    _
  // Predicated region
  $region30: #{_lambda_.2} parent=0 // pred_check
    _
  $region31: #{_lambda_.2} parent=0 // pred_check_branch
    %35 = sbr.rel (0) target = $region33
  $region32: #{_lambda_.2} parent=0 // pred_region
    _
  $region33: #{_lambda_.2} parent=0 // pred_fallthru
    _
  // Predicated region
  $region34: #{_lambda_.2} parent=0 // pred_check
    _
  $region35: #{_lambda_.2} parent=0 // pred_check_branch
    %37 = sbr.rel (0) target = $region37
  $region36: #{_lambda_.2} parent=0 // pred_region
    _
  $region37: #{_lambda_.2} parent=0 // pred_fallthru
    _
  // Predicated region
  $region38: #{_lambda_.2} parent=0 // pred_check
    _
  $region39: #{_lambda_.2} parent=0 // pred_check_branch
    %39 = sbr.rel (0) target = $region41
  $region40: #{_lambda_.2} parent=0 // pred_region
    _
  $region41: #{_lambda_.2} parent=0 // pred_fallthru
    _
  // Predicated region
  $region42: #{_lambda_.2} parent=0 // pred_check
    _
  $region43: #{_lambda_.2} parent=0 // pred_check_branch
    %41 = sbr.rel (0) target = $region45
  $region44: #{_lambda_.2} parent=0 // pred_region
    _
  $region45: #{_lambda_.2} parent=0 // pred_fallthru
    _
  // Predicated region
  $region46: #{_lambda_.2} parent=0 // pred_check
    _
  $region47: #{_lambda_.2} parent=0 // pred_check_branch
    %43 = sbr.rel (0) target = $region49
  $region48: #{_lambda_.2} parent=0 // pred_region
    _
  $region49: #{_lambda_.2} parent=0 // pred_fallthru
    _
  // Predicated region
  $region50: #{_lambda_.2} parent=0 // pred_check
    _
  $region51: #{_lambda_.2} parent=0 // pred_check_branch
    %45 = sbr.rel (0) target = $region53
  $region52: #{_lambda_.2} parent=0 // pred_region
    _
  $region53: #{_lambda_.2} parent=0 // pred_fallthru
    _
  %v47 = vld [vmem:[%s0] sm:$0xff]
  %v48 = vld [vmem:[%s0 + $0x8] sm:$0xff]
  %v49 = vld [vmem:[%s0 + $0x10] sm:$0xff]
  %v50 = vld [vmem:[%s0 + $0x18] sm:$0xff]
  %v51 = vld [vmem:[%s1] sm:$0xff]
  %v52 = vld [vmem:[%s1 + $0x8] sm:$0xff]
  %v53 = vld [vmem:[%s1 + $0x10] sm:$0xff]
  %v54 = vld [vmem:[%s1 + $0x18] sm:$0xff]
  %v55 = vld [vmem:[%s1 + $0x20] sm:$0xff]
  %v56 = vld [vmem:[%s1 + $0x28] sm:$0xff]
  %v57 = vld [vmem:[%s1 + $0x30] sm:$0xff]
  %v58 = vld [vmem:[%s1 + $0x38] sm:$0xff]
  %v59 = vld [vmem:[%s1 + $0x40] sm:$0xff]
  %v60 = vld [vmem:[%s1 + $0x48] sm:$0xff]
  %v61 = vld [vmem:[%s1 + $0x50] sm:$0xff]
  %v62 = vld [vmem:[%s1 + $0x58] sm:$0xff]
  %v63 = vld [vmem:[%s1 + $0x60] sm:$0xff]
  %v64 = vld [vmem:[%s1 + $0x68] sm:$0xff]
  %v65 = vld [vmem:[%s1 + $0x70] sm:$0xff]
  %v66 = vld [vmem:[%s1 + $0x78] sm:$0xff]
  %v67 = vld [vmem:[%s1 + $0x80] sm:$0xff]
  %v68 = vld [vmem:[%s1 + $0x88] sm:$0xff]
  %v69 = vld [vmem:[%s1 + $0x90] sm:$0xff]
  %v70 = vld [vmem:[%s1 + $0x98] sm:$0xff]
  %v71 = vld [vmem:[%s1 + $0xa0] sm:$0xff]
  %v72 = vld [vmem:[%s1 + $0xa8] sm:$0xff]
  %v73 = vld [vmem:[%s1 + $0xb0] sm:$0xff]
  %v74 = vld [vmem:[%s1 + $0xb8] sm:$0xff]
  %v75 = vld [vmem:[%s1 + $0xc0] sm:$0xff]
  %v76 = vld [vmem:[%s1 + $0xc8] sm:$0xff]
  %v77 = vld [vmem:[%s1 + $0xd0] sm:$0xff]
  %v78 = vld [vmem:[%s1 + $0xd8] sm:$0xff]
  %v79 = vld [vmem:[%s1 + $0xe0] sm:$0xff]
  %v80 = vld [vmem:[%s1 + $0xe8] sm:$0xff]
  %v81 = vld [vmem:[%s1 + $0xf0] sm:$0xff]
  %v82 = vld [vmem:[%s1 + $0xf8] sm:$0xff]
  %v83 = vld [vmem:[%s1 + $0x100] sm:$0xff]
  %v84 = vld [vmem:[%s1 + $0x108] sm:$0xff]
  %v85 = vld [vmem:[%s1 + $0x110] sm:$0xff]
  %v86 = vld [vmem:[%s1 + $0x118] sm:$0xff]
  %v87 = vld [vmem:[%s3] sm:$0xff]
  %v88 = vld [vmem:[%s4] sm:$0xff]
  %89 = vrot.lane.b32.xlu0 %v47, 9
  %v90 = vpop.permute.xlu0 %89
  %91 = vrot.lane.b32.xlu0 %v48, 9
  %v92 = vpop.permute.xlu0 %91
  %93 = vrot.lane.b32.xlu0 %v49, 9
  %v94 = vpop.permute.xlu0 %93
  %95 = vrot.lane.b32.xlu0 %v50, 9
  %v96 = vpop.permute.xlu0 %95
  %v97 = vlaneseq
  %v98 = vand.u32 %v97, 127
  %vm99 = vcmp.lt.s32.totalorder %v98, 9
  %v100 = vsel %vm99, %v94, %v96
  %v101 = vsel %vm99, %v92, %v94
  %v102 = vsel %vm99, %v90, %v92
  %v103 = vsel %vm99, %v96, %v90
  %v104 = vmul.f32 %v103, %v51
  %v105 = vmul.f32 %v102, %v52
  %v106 = vmul.f32 %v101, %v53
  %v107 = vmul.f32 %v100, %v54
  %v108 = vadd.f32 %v104, 0.0
  %v109 = vadd.f32 %v105, 0.0
  %v110 = vadd.f32 %v106, 0.0
  %v111 = vadd.f32 %v107, 0.0
  %112 = vrot.lane.b32.xlu0 %v47, 8
  %v113 = vpop.permute.xlu0 %112
  %114 = vrot.lane.b32.xlu0 %v48, 8
  %v115 = vpop.permute.xlu0 %114
  %116 = vrot.lane.b32.xlu0 %v49, 8
  %v117 = vpop.permute.xlu0 %116
  %118 = vrot.lane.b32.xlu0 %v50, 8
  %v119 = vpop.permute.xlu0 %118
  %vm120 = vcmp.lt.s32.totalorder %v98, 8
  %v121 = vsel %vm120, %v117, %v119
  %v122 = vsel %vm120, %v115, %v117
  %v123 = vsel %vm120, %v113, %v115
  %v124 = vsel %vm120, %v119, %v113
  %v125 = vmul.f32 %v124, %v55
  %v126 = vmul.f32 %v123, %v56
  %v127 = vmul.f32 %v122, %v57
  %v128 = vmul.f32 %v121, %v58
  %v129 = vadd.f32 %v108, %v125
  %v130 = vadd.f32 %v109, %v126
  %v131 = vadd.f32 %v110, %v127
  %v132 = vadd.f32 %v111, %v128
  %133 = vrot.lane.b32.xlu0 %v47, 7
  %v134 = vpop.permute.xlu0 %133
  %135 = vrot.lane.b32.xlu0 %v48, 7
  %v136 = vpop.permute.xlu0 %135
  %137 = vrot.lane.b32.xlu0 %v49, 7
  %v138 = vpop.permute.xlu0 %137
  %139 = vrot.lane.b32.xlu0 %v50, 7
  %v140 = vpop.permute.xlu0 %139
  %vm141 = vcmp.lt.s32.totalorder %v98, 7
  %v142 = vsel %vm141, %v138, %v140
  %v143 = vsel %vm141, %v136, %v138
  %v144 = vsel %vm141, %v134, %v136
  %v145 = vsel %vm141, %v140, %v134
  %v146 = vmul.f32 %v145, %v59
  %v147 = vmul.f32 %v144, %v60
  %v148 = vmul.f32 %v143, %v61
  %v149 = vmul.f32 %v142, %v62
  %v150 = vadd.f32 %v129, %v146
  %v151 = vadd.f32 %v130, %v147
  %v152 = vadd.f32 %v131, %v148
  %v153 = vadd.f32 %v132, %v149
  %154 = vrot.lane.b32.xlu0 %v47, 1
  %v155 = vpop.permute.xlu0 %154
  %156 = vrot.lane.b32.xlu0 %v48, 1
  %v157 = vpop.permute.xlu0 %156
  %158 = vrot.lane.b32.xlu0 %v49, 1
  %v159 = vpop.permute.xlu0 %158
  %160 = vrot.lane.b32.xlu0 %v50, 1
  %v161 = vpop.permute.xlu0 %160
  %vm162 = vcmp.lt.s32.totalorder %v98, 1
  %v163 = vsel %vm162, %v159, %v161
  %v164 = vsel %vm162, %v157, %v159
  %v165 = vsel %vm162, %v155, %v157
  %v166 = vsel %vm162, %v161, %v155
  %v167 = vmul.f32 %v166, %v63
  %v168 = vmul.f32 %v165, %v64
  %v169 = vmul.f32 %v164, %v65
  %v170 = vmul.f32 %v163, %v66
  %v171 = vadd.f32 %v150, %v167
  %v172 = vadd.f32 %v151, %v168
  %v173 = vadd.f32 %v152, %v169
  %v174 = vadd.f32 %v153, %v170
  %v175 = vmul.f32 %v47, %v67
  %v176 = vmul.f32 %v48, %v68
  %v177 = vmul.f32 %v49, %v69
  %v178 = vmul.f32 %v50, %v70
  %v179 = vadd.f32 %v171, %v175
  %v180 = vadd.f32 %v172, %v176
  %v181 = vadd.f32 %v173, %v177
  %v182 = vadd.f32 %v174, %v178
  %183 = vrot.lane.b32.xlu0 %v47, 127
  %v184 = vpop.permute.xlu0 %183
  %185 = vrot.lane.b32.xlu0 %v48, 127
  %v186 = vpop.permute.xlu0 %185
  %187 = vrot.lane.b32.xlu0 %v49, 127
  %v188 = vpop.permute.xlu0 %187
  %189 = vrot.lane.b32.xlu0 %v50, 127
  %v190 = vpop.permute.xlu0 %189
  %vm191 = vcmp.lt.s32.totalorder %v98, 127
  %v192 = vsel %vm191, %v188, %v190
  %v193 = vsel %vm191, %v186, %v188
  %v194 = vsel %vm191, %v184, %v186
  %v195 = vsel %vm191, %v190, %v184
  %v196 = vmul.f32 %v194, %v71
  %v197 = vmul.f32 %v193, %v72
  %v198 = vmul.f32 %v192, %v73
  %v199 = vmul.f32 %v195, %v74
  %v200 = vadd.f32 %v179, %v196
  %v201 = vadd.f32 %v180, %v197
  %v202 = vadd.f32 %v181, %v198
  %v203 = vadd.f32 %v182, %v199
  %204 = vrot.lane.b32.xlu0 %v47, 121
  %v205 = vpop.permute.xlu0 %204
  %206 = vrot.lane.b32.xlu0 %v48, 121
  %v207 = vpop.permute.xlu0 %206
  %208 = vrot.lane.b32.xlu0 %v49, 121
  %v209 = vpop.permute.xlu0 %208
  %210 = vrot.lane.b32.xlu0 %v50, 121
  %v211 = vpop.permute.xlu0 %210
  %vm212 = vcmp.lt.s32.totalorder %v98, 121
  %v213 = vsel %vm212, %v209, %v211
  %v214 = vsel %vm212, %v207, %v209
  %v215 = vsel %vm212, %v205, %v207
  %v216 = vsel %vm212, %v211, %v205
  %v217 = vmul.f32 %v215, %v75
  %v218 = vmul.f32 %v214, %v76
  %v219 = vmul.f32 %v213, %v77
  %v220 = vmul.f32 %v216, %v78
  %v221 = vadd.f32 %v200, %v217
  %v222 = vadd.f32 %v201, %v218
  %v223 = vadd.f32 %v202, %v219
  %v224 = vadd.f32 %v203, %v220
  %225 = vrot.lane.b32.xlu0 %v47, 120
  %v226 = vpop.permute.xlu0 %225
  %227 = vrot.lane.b32.xlu0 %v48, 120
  %v228 = vpop.permute.xlu0 %227
  %229 = vrot.lane.b32.xlu0 %v49, 120
  %v230 = vpop.permute.xlu0 %229
  %231 = vrot.lane.b32.xlu0 %v50, 120
  %v232 = vpop.permute.xlu0 %231
  %vm233 = vcmp.lt.s32.totalorder %v98, 120
  %v234 = vsel %vm233, %v230, %v232
  %v235 = vsel %vm233, %v228, %v230
  %v236 = vsel %vm233, %v226, %v228
  %v237 = vsel %vm233, %v232, %v226
  %v238 = vmul.f32 %v236, %v79
  %v239 = vmul.f32 %v235, %v80
  %v240 = vmul.f32 %v234, %v81
  %v241 = vmul.f32 %v237, %v82
  %v242 = vadd.f32 %v221, %v238
  %v243 = vadd.f32 %v222, %v239
  %v244 = vadd.f32 %v223, %v240
  %v245 = vadd.f32 %v224, %v241
  %246 = vrot.lane.b32.xlu0 %v47, 119
  %v247 = vpop.permute.xlu0 %246
  %248 = vrot.lane.b32.xlu0 %v48, 119
  %v249 = vpop.permute.xlu0 %248
  %250 = vrot.lane.b32.xlu0 %v49, 119
  %v251 = vpop.permute.xlu0 %250
  %252 = vrot.lane.b32.xlu0 %v50, 119
  %v253 = vpop.permute.xlu0 %252
  %vm254 = vcmp.lt.s32.totalorder %v98, 119
  %v255 = vsel %vm254, %v251, %v253
  %v256 = vsel %vm254, %v249, %v251
  %v257 = vsel %vm254, %v247, %v249
  %v258 = vsel %vm254, %v253, %v247
  %v259 = vmul.f32 %v257, %v83
  %v260 = vmul.f32 %v256, %v84
  %v261 = vmul.f32 %v255, %v85
  %v262 = vmul.f32 %v258, %v86
  %v263 = vadd.f32 %v242, %v259
  %v264 = vadd.f32 %v243, %v260
  %v265 = vadd.f32 %v244, %v261
  %v266 = vadd.f32 %v245, %v262
  %268 = vset.pattern.permute.xlu0 0
  %269 = vperm.xlu0 %268, %v87
  %v270 = vpop.permute.xlu0 %269
  %v272 = vmul.f32 %v263, %v270
  %v273 = vmul.f32 %v264, %v270
  %v274 = vmul.f32 %v265, %v270
  %v275 = vmul.f32 %v266, %v270
  %277 = vset.pattern.permute.xlu0 0
  %278 = vperm.xlu0 %277, %v88
  %v279 = vpop.permute.xlu0 %278
  %v281 = vadd.f32 %v272, %v279
  %v282 = vadd.f32 %v273, %v279
  %v283 = vadd.f32 %v274, %v279
  %v284 = vadd.f32 %v275, %v279
  %v285 = vmul.f32 %v281, 0.5
  %v286 = vmul.f32 %v282, 0.5
  %v287 = vmul.f32 %v283, 0.5
  %v288 = vmul.f32 %v284, 0.5
  %v289 = vmul.f32 %v281, 0.044715
  %v290 = vmul.f32 %v282, 0.044715
  %v291 = vmul.f32 %v283, 0.044715
  %v292 = vmul.f32 %v284, 0.044715
  %v293 = vmul.f32 %v289, %v281
  %v294 = vmul.f32 %v290, %v282
  %v295 = vmul.f32 %v291, %v283
  %v296 = vmul.f32 %v292, %v284
  %v297 = vmul.f32 %v293, %v281
  %v298 = vmul.f32 %v294, %v282
  %v299 = vmul.f32 %v295, %v283
  %v300 = vmul.f32 %v296, %v284
  %v301 = vadd.f32 %v281, %v297
  %v302 = vadd.f32 %v282, %v298
  %v303 = vadd.f32 %v283, %v299
  %v304 = vadd.f32 %v284, %v300
  %v305 = vmul.f32 %v301, 0.7978846
  %v306 = vmul.f32 %v302, 0.7978846
  %v307 = vmul.f32 %v303, 0.7978846
  %v308 = vmul.f32 %v304, 0.7978846
  %v309 = vtanh.pop %v305
  %v310 = vtanh.pop %v306
  %v311 = vtanh.pop %v307
  %v312 = vtanh.pop %v308
  %v313 = vadd.f32 %v309, 1.0
  %v314 = vadd.f32 %v310, 1.0
  %v315 = vadd.f32 %v311, 1.0
  %v316 = vadd.f32 %v312, 1.0
  %v317 = vmul.f32 %v285, %v313
  %v318 = vmul.f32 %v286, %v314
  %v319 = vmul.f32 %v287, %v315
  %v320 = vmul.f32 %v288, %v316
  %v321 = vld [vmem:[%s2] sm:$0xff]
  %v322 = vld [vmem:[%s2 + $0x8] sm:$0xff]
  %v323 = vld [vmem:[%s2 + $0x10] sm:$0xff]
  %v324 = vld [vmem:[%s2 + $0x18] sm:$0xff]
  %v325 = vld [vmem:[%s2 + $0x20] sm:$0xff]
  %v326 = vld [vmem:[%s2 + $0x28] sm:$0xff]
  %v327 = vld [vmem:[%s2 + $0x30] sm:$0xff]
  %v328 = vld [vmem:[%s2 + $0x38] sm:$0xff]
  %v329 = vld [vmem:[%s2 + $0x40] sm:$0xff]
  %v330 = vld [vmem:[%s2 + $0x48] sm:$0xff]
  %v331 = vld [vmem:[%s2 + $0x50] sm:$0xff]
  %v332 = vld [vmem:[%s2 + $0x58] sm:$0xff]
  %v333 = vld [vmem:[%s2 + $0x60] sm:$0xff]
  %v334 = vld [vmem:[%s2 + $0x68] sm:$0xff]
  %v335 = vld [vmem:[%s2 + $0x70] sm:$0xff]
  %v336 = vld [vmem:[%s2 + $0x78] sm:$0xff]
  %v337 = vld [vmem:[%s2 + $0x80] sm:$0xff]
  %v338 = vld [vmem:[%s2 + $0x88] sm:$0xff]
  %v339 = vld [vmem:[%s2 + $0x90] sm:$0xff]
  %v340 = vld [vmem:[%s2 + $0x98] sm:$0xff]
  %v341 = vld [vmem:[%s2 + $0xa0] sm:$0xff]
  %v342 = vld [vmem:[%s2 + $0xa8] sm:$0xff]
  %v343 = vld [vmem:[%s2 + $0xb0] sm:$0xff]
  %v344 = vld [vmem:[%s2 + $0xb8] sm:$0xff]
  %v345 = vld [vmem:[%s2 + $0xc0] sm:$0xff]
  %v346 = vld [vmem:[%s2 + $0xc8] sm:$0xff]
  %v347 = vld [vmem:[%s2 + $0xd0] sm:$0xff]
  %v348 = vld [vmem:[%s2 + $0xd8] sm:$0xff]
  %v349 = vld [vmem:[%s2 + $0xe0] sm:$0xff]
  %v350 = vld [vmem:[%s2 + $0xe8] sm:$0xff]
  %v351 = vld [vmem:[%s2 + $0xf0] sm:$0xff]
  %v352 = vld [vmem:[%s2 + $0xf8] sm:$0xff]
  %v353 = vld [vmem:[%s2 + $0x100] sm:$0xff]
  %v354 = vld [vmem:[%s2 + $0x108] sm:$0xff]
  %v355 = vld [vmem:[%s2 + $0x110] sm:$0xff]
  %v356 = vld [vmem:[%s2 + $0x118] sm:$0xff]
  %v357 = vld [vmem:[%s5] sm:$0xff]
  %v358 = vld [vmem:[%s6] sm:$0xff]
  %359 = vrot.lane.b32.xlu0 %v317, 9
  %v360 = vpop.permute.xlu0 %359
  %361 = vrot.lane.b32.xlu0 %v318, 9
  %v362 = vpop.permute.xlu0 %361
  %363 = vrot.lane.b32.xlu0 %v319, 9
  %v364 = vpop.permute.xlu0 %363
  %365 = vrot.lane.b32.xlu0 %v320, 9
  %v366 = vpop.permute.xlu0 %365
  %v367 = vsel %vm99, %v364, %v366
  %v368 = vsel %vm99, %v362, %v364
  %v369 = vsel %vm99, %v360, %v362
  %v370 = vsel %vm99, %v366, %v360
  %v371 = vmul.f32 %v370, %v321
  %v372 = vmul.f32 %v369, %v322
  %v373 = vmul.f32 %v368, %v323
  %v374 = vmul.f32 %v367, %v324
  %v375 = vadd.f32 %v371, 0.0
  %v376 = vadd.f32 %v372, 0.0
  %v377 = vadd.f32 %v373, 0.0
  %v378 = vadd.f32 %v374, 0.0
  %379 = vrot.lane.b32.xlu0 %v317, 8
  %v380 = vpop.permute.xlu0 %379
  %381 = vrot.lane.b32.xlu0 %v318, 8
  %v382 = vpop.permute.xlu0 %381
  %383 = vrot.lane.b32.xlu0 %v319, 8
  %v384 = vpop.permute.xlu0 %383
  %385 = vrot.lane.b32.xlu0 %v320, 8
  %v386 = vpop.permute.xlu0 %385
  %v387 = vsel %vm120, %v384, %v386
  %v388 = vsel %vm120, %v382, %v384
  %v389 = vsel %vm120, %v380, %v382
  %v390 = vsel %vm120, %v386, %v380
  %v391 = vmul.f32 %v390, %v325
  %v392 = vmul.f32 %v389, %v326
  %v393 = vmul.f32 %v388, %v327
  %v394 = vmul.f32 %v387, %v328
  %v395 = vadd.f32 %v375, %v391
  %v396 = vadd.f32 %v376, %v392
  %v397 = vadd.f32 %v377, %v393
  %v398 = vadd.f32 %v378, %v394
  %399 = vrot.lane.b32.xlu0 %v317, 7
  %v400 = vpop.permute.xlu0 %399
  %401 = vrot.lane.b32.xlu0 %v318, 7
  %v402 = vpop.permute.xlu0 %401
  %403 = vrot.lane.b32.xlu0 %v319, 7
  %v404 = vpop.permute.xlu0 %403
  %405 = vrot.lane.b32.xlu0 %v320, 7
  %v406 = vpop.permute.xlu0 %405
  %v407 = vsel %vm141, %v404, %v406
  %v408 = vsel %vm141, %v402, %v404
  %v409 = vsel %vm141, %v400, %v402
  %v410 = vsel %vm141, %v406, %v400
  %v411 = vmul.f32 %v410, %v329
  %v412 = vmul.f32 %v409, %v330
  %v413 = vmul.f32 %v408, %v331
  %v414 = vmul.f32 %v407, %v332
  %v415 = vadd.f32 %v395, %v411
  %v416 = vadd.f32 %v396, %v412
  %v417 = vadd.f32 %v397, %v413
  %v418 = vadd.f32 %v398, %v414
  %419 = vrot.lane.b32.xlu0 %v317, 1
  %v420 = vpop.permute.xlu0 %419
  %421 = vrot.lane.b32.xlu0 %v318, 1
  %v422 = vpop.permute.xlu0 %421
  %423 = vrot.lane.b32.xlu0 %v319, 1
  %v424 = vpop.permute.xlu0 %423
  %425 = vrot.lane.b32.xlu0 %v320, 1
  %v426 = vpop.permute.xlu0 %425
  %v427 = vsel %vm162, %v424, %v426
  %v428 = vsel %vm162, %v422, %v424
  %v429 = vsel %vm162, %v420, %v422
  %v430 = vsel %vm162, %v426, %v420
  %v431 = vmul.f32 %v430, %v333
  %v432 = vmul.f32 %v429, %v334
  %v433 = vmul.f32 %v428, %v335
  %v434 = vmul.f32 %v427, %v336
  %v435 = vadd.f32 %v415, %v431
  %v436 = vadd.f32 %v416, %v432
  %v437 = vadd.f32 %v417, %v433
  %v438 = vadd.f32 %v418, %v434
  %v439 = vmul.f32 %v317, %v337
  %v440 = vmul.f32 %v318, %v338
  %v441 = vmul.f32 %v319, %v339
  %v442 = vmul.f32 %v320, %v340
  %v443 = vadd.f32 %v435, %v439
  %v444 = vadd.f32 %v436, %v440
  %v445 = vadd.f32 %v437, %v441
  %v446 = vadd.f32 %v438, %v442
  %447 = vrot.lane.b32.xlu0 %v317, 127
  %v448 = vpop.permute.xlu0 %447
  %449 = vrot.lane.b32.xlu0 %v318, 127
  %v450 = vpop.permute.xlu0 %449
  %451 = vrot.lane.b32.xlu0 %v319, 127
  %v452 = vpop.permute.xlu0 %451
  %453 = vrot.lane.b32.xlu0 %v320, 127
  %v454 = vpop.permute.xlu0 %453
  %v455 = vsel %vm191, %v452, %v454
  %v456 = vsel %vm191, %v450, %v452
  %v457 = vsel %vm191, %v448, %v450
  %v458 = vsel %vm191, %v454, %v448
  %v459 = vmul.f32 %v457, %v341
  %v460 = vmul.f32 %v456, %v342
  %v461 = vmul.f32 %v455, %v343
  %v462 = vmul.f32 %v458, %v344
  %v463 = vadd.f32 %v443, %v459
  %v464 = vadd.f32 %v444, %v460
  %v465 = vadd.f32 %v445, %v461
  %v466 = vadd.f32 %v446, %v462
  %467 = vrot.lane.b32.xlu0 %v317, 121
  %v468 = vpop.permute.xlu0 %467
  %469 = vrot.lane.b32.xlu0 %v318, 121
  %v470 = vpop.permute.xlu0 %469
  %471 = vrot.lane.b32.xlu0 %v319, 121
  %v472 = vpop.permute.xlu0 %471
  %473 = vrot.lane.b32.xlu0 %v320, 121
  %v474 = vpop.permute.xlu0 %473
  %v475 = vsel %vm212, %v472, %v474
  %v476 = vsel %vm212, %v470, %v472
  %v477 = vsel %vm212, %v468, %v470
  %v478 = vsel %vm212, %v474, %v468
  %v479 = vmul.f32 %v477, %v345
  %v480 = vmul.f32 %v476, %v346
  %v481 = vmul.f32 %v475, %v347
  %v482 = vmul.f32 %v478, %v348
  %v483 = vadd.f32 %v463, %v479
  %v484 = vadd.f32 %v464, %v480
  %v485 = vadd.f32 %v465, %v481
  %v486 = vadd.f32 %v466, %v482
  %487 = vrot.lane.b32.xlu0 %v317, 120
  %v488 = vpop.permute.xlu0 %487
  %489 = vrot.lane.b32.xlu0 %v318, 120
  %v490 = vpop.permute.xlu0 %489
  %491 = vrot.lane.b32.xlu0 %v319, 120
  %v492 = vpop.permute.xlu0 %491
  %493 = vrot.lane.b32.xlu0 %v320, 120
  %v494 = vpop.permute.xlu0 %493
  %v495 = vsel %vm233, %v492, %v494
  %v496 = vsel %vm233, %v490, %v492
  %v497 = vsel %vm233, %v488, %v490
  %v498 = vsel %vm233, %v494, %v488
  %v499 = vmul.f32 %v497, %v349
  %v500 = vmul.f32 %v496, %v350
  %v501 = vmul.f32 %v495, %v351
  %v502 = vmul.f32 %v498, %v352
  %v503 = vadd.f32 %v483, %v499
  %v504 = vadd.f32 %v484, %v500
  %v505 = vadd.f32 %v485, %v501
  %v506 = vadd.f32 %v486, %v502
  %507 = vrot.lane.b32.xlu0 %v317, 119
  %v508 = vpop.permute.xlu0 %507
  %509 = vrot.lane.b32.xlu0 %v318, 119
  %v510 = vpop.permute.xlu0 %509
  %511 = vrot.lane.b32.xlu0 %v319, 119
  %v512 = vpop.permute.xlu0 %511
  %513 = vrot.lane.b32.xlu0 %v320, 119
  %v514 = vpop.permute.xlu0 %513
  %v515 = vsel %vm254, %v512, %v514
  %v516 = vsel %vm254, %v510, %v512
  %v517 = vsel %vm254, %v508, %v510
  %v518 = vsel %vm254, %v514, %v508
  %v519 = vmul.f32 %v517, %v353
  %v520 = vmul.f32 %v516, %v354
  %v521 = vmul.f32 %v515, %v355
  %v522 = vmul.f32 %v518, %v356
  %v523 = vadd.f32 %v503, %v519
  %v524 = vadd.f32 %v504, %v520
  %v525 = vadd.f32 %v505, %v521
  %v526 = vadd.f32 %v506, %v522
  %528 = vset.pattern.permute.xlu0 0
  %529 = vperm.xlu0 %528, %v357
  %v530 = vpop.permute.xlu0 %529
  %v532 = vmul.f32 %v523, %v530
  %v533 = vmul.f32 %v524, %v530
  %v534 = vmul.f32 %v525, %v530
  %v535 = vmul.f32 %v526, %v530
  %537 = vset.pattern.permute.xlu0 0
  %538 = vperm.xlu0 %537, %v358
  %v539 = vpop.permute.xlu0 %538
  %v541 = vadd.f32 %v532, %v539
  %v542 = vadd.f32 %v533, %v539
  %v543 = vadd.f32 %v534, %v539
  %v544 = vadd.f32 %v535, %v539
  %v545 = vmul.f32 %v541, 0.5
  %v546 = vmul.f32 %v542, 0.5
  %v547 = vmul.f32 %v543, 0.5
  %v548 = vmul.f32 %v544, 0.5
  %v549 = vmul.f32 %v541, 0.044715
  %v550 = vmul.f32 %v542, 0.044715
  %v551 = vmul.f32 %v543, 0.044715
  %v552 = vmul.f32 %v544, 0.044715
  %v553 = vmul.f32 %v549, %v541
  %v554 = vmul.f32 %v550, %v542
  %v555 = vmul.f32 %v551, %v543
  %v556 = vmul.f32 %v552, %v544
  %v557 = vmul.f32 %v553, %v541
  %v558 = vmul.f32 %v554, %v542
  %v559 = vmul.f32 %v555, %v543
  %v560 = vmul.f32 %v556, %v544
  %v561 = vadd.f32 %v541, %v557
  %v562 = vadd.f32 %v542, %v558
  %v563 = vadd.f32 %v543, %v559
  %v564 = vadd.f32 %v544, %v560
  %v565 = vmul.f32 %v561, 0.7978846
  %v566 = vmul.f32 %v562, 0.7978846
  %v567 = vmul.f32 %v563, 0.7978846
  %v568 = vmul.f32 %v564, 0.7978846
  %v569 = vtanh.pop %v565
  %v570 = vtanh.pop %v566
  %v571 = vtanh.pop %v567
  %v572 = vtanh.pop %v568
  %v573 = vadd.f32 %v569, 1.0
  %v574 = vadd.f32 %v570, 1.0
  %v575 = vadd.f32 %v571, 1.0
  %v576 = vadd.f32 %v572, 1.0
  %v577 = vmul.f32 %v545, %v573
  %v578 = vmul.f32 %v546, %v574
  %v579 = vmul.f32 %v547, %v575
  %v580 = vmul.f32 %v548, %v576
  %v581 = vadd.f32 %v577, %v47
  %v582 = vadd.f32 %v578, %v48
  %v583 = vadd.f32 %v579, %v49
  %v584 = vadd.f32 %v580, %v50
  %v585 = vld [vmem:[%s7] sm:$0xff]
  %v586 = vpack.c.bf16 %v585, %v585
  %v587 = vpack.c.bf16 %v581, %v581
  %v588 = vpack.c.bf16 %v582, %v582
  %v589 = vpack.c.bf16 %v583, %v583
  %v590 = vpack.c.bf16 %v584, %v584
  %v591 = vld [vmem:[%s8] sm:$0xff]
  %593 = vset.pattern.permute.xlu0 0
  %594 = vperm.xlu0 %593, %v591
  %v595 = vpop.permute.xlu0 %594
  %vm597 = vcmask 64512
  %v599 = vsel %vm597, %v586, 0
  %vm601 = vcmask 1043456
  %v603 = vsel %vm601, %v587, 0
  %v606 = vsel %vm601, %v588, 0
  %v609 = vsel %vm601, %v589, 0
  %v612 = vsel %vm601, %v590, 0
  %614 = vmatpush.bf16.msra.mxu0 0
  %615 = vmatpush.bf16.msra.mxu0 0
  %616 = vmatpush.bf16.msra.mxu0 0
  %617 = vmatpush.bf16.msra.mxu0 0
  %618 = vmatpush.bf16.msra.mxu0 0
  %619 = vmatpush.bf16.msra.mxu0 0
  %620 = vmatpush.bf16.msra.mxu0 0
  %621 = vmatpush.bf16.msra.mxu0 %v603
  %622 = vmatmul.bf16.gmra.mxu0 %v599
  %v623 = vpop.f32.mrf.mxu0
  %v624 = vadd.f32 %v595, %v623
  %v625 = vpop.f32.mrf.mxu0
  %626 = vdwg.mxu0
  %627 = vmatpush.bf16.msra.mxu0 0
  %628 = vmatpush.bf16.msra.mxu0 0
  %629 = vmatpush.bf16.msra.mxu0 0
  %630 = vmatpush.bf16.msra.mxu0 0
  %631 = vmatpush.bf16.msra.mxu0 0
  %632 = vmatpush.bf16.msra.mxu0 0
  %633 = vmatpush.bf16.msra.mxu0 0
  %634 = vmatpush.bf16.msra.mxu0 %v606
  %635 = vmatmul.bf16.gmra.mxu0 %v599
  %v636 = vpop.f32.mrf.mxu0
  %v637 = vadd.f32 %v595, %v636
  %v638 = vpop.f32.mrf.mxu0
  %639 = vdwg.mxu0
  %640 = vmatpush.bf16.msra.mxu0 0
  %641 = vmatpush.bf16.msra.mxu0 0
  %642 = vmatpush.bf16.msra.mxu0 0
  %643 = vmatpush.bf16.msra.mxu0 0
  %644 = vmatpush.bf16.msra.mxu0 0
  %645 = vmatpush.bf16.msra.mxu0 0
  %646 = vmatpush.bf16.msra.mxu0 0
  %647 = vmatpush.bf16.msra.mxu0 %v609
  %648 = vmatmul.bf16.gmra.mxu0 %v599
  %v649 = vpop.f32.mrf.mxu0
  %v650 = vadd.f32 %v595, %v649
  %v651 = vpop.f32.mrf.mxu0
  %652 = vdwg.mxu0
  %653 = vmatpush.bf16.msra.mxu0 0
  %654 = vmatpush.bf16.msra.mxu0 0
  %655 = vmatpush.bf16.msra.mxu0 0
  %656 = vmatpush.bf16.msra.mxu0 0
  %657 = vmatpush.bf16.msra.mxu0 0
  %658 = vmatpush.bf16.msra.mxu0 0
  %659 = vmatpush.bf16.msra.mxu0 0
  %660 = vmatpush.bf16.msra.mxu0 %v612
  %661 = vmatmul.bf16.gmra.mxu0 %v599
  %v662 = vpop.f32.mrf.mxu0
  %v663 = vadd.f32 %v595, %v662
  %v664 = vpop.f32.mrf.mxu0
  %665 = vdwg.mxu0
  %v666 = vmul.f32 %v624, 0.5
  %v667 = vmul.f32 %v637, 0.5
  %v668 = vmul.f32 %v650, 0.5
  %v669 = vmul.f32 %v663, 0.5
  %v670 = vmul.f32 %v624, 0.044715
  %v671 = vmul.f32 %v637, 0.044715
  %v672 = vmul.f32 %v650, 0.044715
  %v673 = vmul.f32 %v663, 0.044715
  %v674 = vmul.f32 %v670, %v624
  %v675 = vmul.f32 %v671, %v637
  %v676 = vmul.f32 %v672, %v650
  %v677 = vmul.f32 %v673, %v663
  %v678 = vmul.f32 %v674, %v624
  %v679 = vmul.f32 %v675, %v637
  %v680 = vmul.f32 %v676, %v650
  %v681 = vmul.f32 %v677, %v663
  %v682 = vadd.f32 %v624, %v678
  %v683 = vadd.f32 %v637, %v679
  %v684 = vadd.f32 %v650, %v680
  %v685 = vadd.f32 %v663, %v681
  %v686 = vmul.f32 %v682, 0.7978846
  %v687 = vmul.f32 %v683, 0.7978846
  %v688 = vmul.f32 %v684, 0.7978846
  %v689 = vmul.f32 %v685, 0.7978846
  %v690 = vtanh.pop %v686
  %v691 = vtanh.pop %v687
  %v692 = vtanh.pop %v688
  %v693 = vtanh.pop %v689
  %v694 = vadd.f32 %v690, 1.0
  %v695 = vadd.f32 %v691, 1.0
  %v696 = vadd.f32 %v692, 1.0
  %v697 = vadd.f32 %v693, 1.0
  %v698 = vmul.f32 %v666, %v694
  %v699 = vmul.f32 %v667, %v695
  %v700 = vmul.f32 %v668, %v696
  %v701 = vmul.f32 %v669, %v697
  %v702 = vld [vmem:[%s9] sm:$0xff]
  %704 = vset.pattern.permute.xlu0 0
  %705 = vperm.xlu0 %704, %v702
  %v706 = vpop.permute.xlu0 %705
  %v708 = vmul.f32 %v698, %v706
  %v709 = vmul.f32 %v699, %v706
  %v710 = vmul.f32 %v700, %v706
  %v711 = vmul.f32 %v701, %v706
  %v712 = vld [vmem:[%s10] sm:$0xff]
  %714 = vset.pattern.permute.xlu0 0
  %715 = vperm.xlu0 %714, %v712
  %v716 = vpop.permute.xlu0 %715
  %v718 = vadd.f32 %v708, %v716
  %v719 = vadd.f32 %v709, %v716
  %v720 = vadd.f32 %v710, %v716
  %v721 = vadd.f32 %v711, %v716
  %s722 = scalar_lea.vmem %s1, 288
  %v723 = vld [vmem:[%s722] sm:$0xff]
  %v724 = vld [vmem:[%s722 + $0x8] sm:$0xff]
  %v725 = vld [vmem:[%s722 + $0x10] sm:$0xff]
  %v726 = vld [vmem:[%s722 + $0x18] sm:$0xff]
  %v727 = vld [vmem:[%s722 + $0x20] sm:$0xff]
  %v728 = vld [vmem:[%s722 + $0x28] sm:$0xff]
  %v729 = vld [vmem:[%s722 + $0x30] sm:$0xff]
  %v730 = vld [vmem:[%s722 + $0x38] sm:$0xff]
  %v731 = vld [vmem:[%s722 + $0x40] sm:$0xff]
  %v732 = vld [vmem:[%s722 + $0x48] sm:$0xff]
  %v733 = vld [vmem:[%s722 + $0x50] sm:$0xff]
  %v734 = vld [vmem:[%s722 + $0x58] sm:$0xff]
  %v735 = vld [vmem:[%s722 + $0x60] sm:$0xff]
  %v736 = vld [vmem:[%s722 + $0x68] sm:$0xff]
  %v737 = vld [vmem:[%s722 + $0x70] sm:$0xff]
  %v738 = vld [vmem:[%s722 + $0x78] sm:$0xff]
  %v739 = vld [vmem:[%s722 + $0x80] sm:$0xff]
  %v740 = vld [vmem:[%s722 + $0x88] sm:$0xff]
  %v741 = vld [vmem:[%s722 + $0x90] sm:$0xff]
  %v742 = vld [vmem:[%s722 + $0x98] sm:$0xff]
  %v743 = vld [vmem:[%s722 + $0xa0] sm:$0xff]
  %v744 = vld [vmem:[%s722 + $0xa8] sm:$0xff]
  %v745 = vld [vmem:[%s722 + $0xb0] sm:$0xff]
  %v746 = vld [vmem:[%s722 + $0xb8] sm:$0xff]
  %v747 = vld [vmem:[%s722 + $0xc0] sm:$0xff]
  %v748 = vld [vmem:[%s722 + $0xc8] sm:$0xff]
  %v749 = vld [vmem:[%s722 + $0xd0] sm:$0xff]
  %v750 = vld [vmem:[%s722 + $0xd8] sm:$0xff]
  %v751 = vld [vmem:[%s722 + $0xe0] sm:$0xff]
  %v752 = vld [vmem:[%s722 + $0xe8] sm:$0xff]
  %v753 = vld [vmem:[%s722 + $0xf0] sm:$0xff]
  %v754 = vld [vmem:[%s722 + $0xf8] sm:$0xff]
  %v755 = vld [vmem:[%s722 + $0x100] sm:$0xff]
  %v756 = vld [vmem:[%s722 + $0x108] sm:$0xff]
  %v757 = vld [vmem:[%s722 + $0x110] sm:$0xff]
  %v758 = vld [vmem:[%s722 + $0x118] sm:$0xff]
  %s759 = scalar_lea.vmem %s3, 8
  %v760 = vld [vmem:[%s759] sm:$0xff]
  %s761 = scalar_lea.vmem %s4, 8
  %v762 = vld [vmem:[%s761] sm:$0xff]
  %763 = vrot.lane.b32.xlu0 %v718, 9
  %v764 = vpop.permute.xlu0 %763
  %765 = vrot.lane.b32.xlu0 %v719, 9
  %v766 = vpop.permute.xlu0 %765
  %767 = vrot.lane.b32.xlu0 %v720, 9
  %v768 = vpop.permute.xlu0 %767
  %769 = vrot.lane.b32.xlu0 %v721, 9
  %v770 = vpop.permute.xlu0 %769
  %v771 = vsel %vm99, %v768, %v770
  %v772 = vsel %vm99, %v766, %v768
  %v773 = vsel %vm99, %v764, %v766
  %v774 = vsel %vm99, %v770, %v764
  %v775 = vmul.f32 %v774, %v723
  %v776 = vmul.f32 %v773, %v724
  %v777 = vmul.f32 %v772, %v725
  %v778 = vmul.f32 %v771, %v726
  %v779 = vadd.f32 %v775, 0.0
  %v780 = vadd.f32 %v776, 0.0
  %v781 = vadd.f32 %v777, 0.0
  %v782 = vadd.f32 %v778, 0.0
  %783 = vrot.lane.b32.xlu0 %v718, 8
  %v784 = vpop.permute.xlu0 %783
  %785 = vrot.lane.b32.xlu0 %v719, 8
  %v786 = vpop.permute.xlu0 %785
  %787 = vrot.lane.b32.xlu0 %v720, 8
  %v788 = vpop.permute.xlu0 %787
  %789 = vrot.lane.b32.xlu0 %v721, 8
  %v790 = vpop.permute.xlu0 %789
  %v791 = vsel %vm120, %v788, %v790
  %v792 = vsel %vm120, %v786, %v788
  %v793 = vsel %vm120, %v784, %v786
  %v794 = vsel %vm120, %v790, %v784
  %v795 = vmul.f32 %v794, %v727
  %v796 = vmul.f32 %v793, %v728
  %v797 = vmul.f32 %v792, %v729
  %v798 = vmul.f32 %v791, %v730
  %v799 = vadd.f32 %v779, %v795
  %v800 = vadd.f32 %v780, %v796
  %v801 = vadd.f32 %v781, %v797
  %v802 = vadd.f32 %v782, %v798
  %803 = vrot.lane.b32.xlu0 %v718, 7
  %v804 = vpop.permute.xlu0 %803
  %805 = vrot.lane.b32.xlu0 %v719, 7
  %v806 = vpop.permute.xlu0 %805
  %807 = vrot.lane.b32.xlu0 %v720, 7
  %v808 = vpop.permute.xlu0 %807
  %809 = vrot.lane.b32.xlu0 %v721, 7
  %v810 = vpop.permute.xlu0 %809
  %v811 = vsel %vm141, %v808, %v810
  %v812 = vsel %vm141, %v806, %v808
  %v813 = vsel %vm141, %v804, %v806
  %v814 = vsel %vm141, %v810, %v804
  %v815 = vmul.f32 %v814, %v731
  %v816 = vmul.f32 %v813, %v732
  %v817 = vmul.f32 %v812, %v733
  %v818 = vmul.f32 %v811, %v734
  %v819 = vadd.f32 %v799, %v815
  %v820 = vadd.f32 %v800, %v816
  %v821 = vadd.f32 %v801, %v817
  %v822 = vadd.f32 %v802, %v818
  %823 = vrot.lane.b32.xlu0 %v718, 1
  %v824 = vpop.permute.xlu0 %823
  %825 = vrot.lane.b32.xlu0 %v719, 1
  %v826 = vpop.permute.xlu0 %825
  %827 = vrot.lane.b32.xlu0 %v720, 1
  %v828 = vpop.permute.xlu0 %827
  %829 = vrot.lane.b32.xlu0 %v721, 1
  %v830 = vpop.permute.xlu0 %829
  %v831 = vsel %vm162, %v828, %v830
  %v832 = vsel %vm162, %v826, %v828
  %v833 = vsel %vm162, %v824, %v826
  %v834 = vsel %vm162, %v830, %v824
  %v835 = vmul.f32 %v834, %v735
  %v836 = vmul.f32 %v833, %v736
  %v837 = vmul.f32 %v832, %v737
  %v838 = vmul.f32 %v831, %v738
  %v839 = vadd.f32 %v819, %v835
  %v840 = vadd.f32 %v820, %v836
  %v841 = vadd.f32 %v821, %v837
  %v842 = vadd.f32 %v822, %v838
  %v843 = vmul.f32 %v718, %v739
  %v844 = vmul.f32 %v719, %v740
  %v845 = vmul.f32 %v720, %v741
  %v846 = vmul.f32 %v721, %v742
  %v847 = vadd.f32 %v839, %v843
  %v848 = vadd.f32 %v840, %v844
  %v849 = vadd.f32 %v841, %v845
  %v850 = vadd.f32 %v842, %v846
  %851 = vrot.lane.b32.xlu0 %v718, 127
  %v852 = vpop.permute.xlu0 %851
  %853 = vrot.lane.b32.xlu0 %v719, 127
  %v854 = vpop.permute.xlu0 %853
  %855 = vrot.lane.b32.xlu0 %v720, 127
  %v856 = vpop.permute.xlu0 %855
  %857 = vrot.lane.b32.xlu0 %v721, 127
  %v858 = vpop.permute.xlu0 %857
  %v859 = vsel %vm191, %v856, %v858
  %v860 = vsel %vm191, %v854, %v856
  %v861 = vsel %vm191, %v852, %v854
  %v862 = vsel %vm191, %v858, %v852
  %v863 = vmul.f32 %v861, %v743
  %v864 = vmul.f32 %v860, %v744
  %v865 = vmul.f32 %v859, %v745
  %v866 = vmul.f32 %v862, %v746
  %v867 = vadd.f32 %v847, %v863
  %v868 = vadd.f32 %v848, %v864
  %v869 = vadd.f32 %v849, %v865
  %v870 = vadd.f32 %v850, %v866
  %871 = vrot.lane.b32.xlu0 %v718, 121
  %v872 = vpop.permute.xlu0 %871
  %873 = vrot.lane.b32.xlu0 %v719, 121
  %v874 = vpop.permute.xlu0 %873
  %875 = vrot.lane.b32.xlu0 %v720, 121
  %v876 = vpop.permute.xlu0 %875
  %877 = vrot.lane.b32.xlu0 %v721, 121
  %v878 = vpop.permute.xlu0 %877
  %v879 = vsel %vm212, %v876, %v878
  %v880 = vsel %vm212, %v874, %v876
  %v881 = vsel %vm212, %v872, %v874
  %v882 = vsel %vm212, %v878, %v872
  %v883 = vmul.f32 %v881, %v747
  %v884 = vmul.f32 %v880, %v748
  %v885 = vmul.f32 %v879, %v749
  %v886 = vmul.f32 %v882, %v750
  %v887 = vadd.f32 %v867, %v883
  %v888 = vadd.f32 %v868, %v884
  %v889 = vadd.f32 %v869, %v885
  %v890 = vadd.f32 %v870, %v886
  %891 = vrot.lane.b32.xlu0 %v718, 120
  %v892 = vpop.permute.xlu0 %891
  %893 = vrot.lane.b32.xlu0 %v719, 120
  %v894 = vpop.permute.xlu0 %893
  %895 = vrot.lane.b32.xlu0 %v720, 120
  %v896 = vpop.permute.xlu0 %895
  %897 = vrot.lane.b32.xlu0 %v721, 120
  %v898 = vpop.permute.xlu0 %897
  %v899 = vsel %vm233, %v896, %v898
  %v900 = vsel %vm233, %v894, %v896
  %v901 = vsel %vm233, %v892, %v894
  %v902 = vsel %vm233, %v898, %v892
  %v903 = vmul.f32 %v901, %v751
  %v904 = vmul.f32 %v900, %v752
  %v905 = vmul.f32 %v899, %v753
  %v906 = vmul.f32 %v902, %v754
  %v907 = vadd.f32 %v887, %v903
  %v908 = vadd.f32 %v888, %v904
  %v909 = vadd.f32 %v889, %v905
  %v910 = vadd.f32 %v890, %v906
  %911 = vrot.lane.b32.xlu0 %v718, 119
  %v912 = vpop.permute.xlu0 %911
  %913 = vrot.lane.b32.xlu0 %v719, 119
  %v914 = vpop.permute.xlu0 %913
  %915 = vrot.lane.b32.xlu0 %v720, 119
  %v916 = vpop.permute.xlu0 %915
  %917 = vrot.lane.b32.xlu0 %v721, 119
  %v918 = vpop.permute.xlu0 %917
  %v919 = vsel %vm254, %v916, %v918
  %v920 = vsel %vm254, %v914, %v916
  %v921 = vsel %vm254, %v912, %v914
  %v922 = vsel %vm254, %v918, %v912
  %v923 = vmul.f32 %v921, %v755
  %v924 = vmul.f32 %v920, %v756
  %v925 = vmul.f32 %v919, %v757
  %v926 = vmul.f32 %v922, %v758
  %v927 = vadd.f32 %v907, %v923
  %v928 = vadd.f32 %v908, %v924
  %v929 = vadd.f32 %v909, %v925
  %v930 = vadd.f32 %v910, %v926
  %932 = vset.pattern.permute.xlu0 0
  %933 = vperm.xlu0 %932, %v760
  %v934 = vpop.permute.xlu0 %933
  %v936 = vmul.f32 %v927, %v934
  %v937 = vmul.f32 %v928, %v934
  %v938 = vmul.f32 %v929, %v934
  %v939 = vmul.f32 %v930, %v934
  %941 = vset.pattern.permute.xlu0 0
  %942 = vperm.xlu0 %941, %v762
  %v943 = vpop.permute.xlu0 %942
  %v945 = vadd.f32 %v936, %v943
  %v946 = vadd.f32 %v937, %v943
  %v947 = vadd.f32 %v938, %v943
  %v948 = vadd.f32 %v939, %v943
  %v949 = vmul.f32 %v945, 0.5
  %v950 = vmul.f32 %v946, 0.5
  %v951 = vmul.f32 %v947, 0.5
  %v952 = vmul.f32 %v948, 0.5
  %v953 = vmul.f32 %v945, 0.044715
  %v954 = vmul.f32 %v946, 0.044715
  %v955 = vmul.f32 %v947, 0.044715
  %v956 = vmul.f32 %v948, 0.044715
  %v957 = vmul.f32 %v953, %v945
  %v958 = vmul.f32 %v954, %v946
  %v959 = vmul.f32 %v955, %v947
  %v960 = vmul.f32 %v956, %v948
  %v961 = vmul.f32 %v957, %v945
  %v962 = vmul.f32 %v958, %v946
  %v963 = vmul.f32 %v959, %v947
  %v964 = vmul.f32 %v960, %v948
  %v965 = vadd.f32 %v945, %v961
  %v966 = vadd.f32 %v946, %v962
  %v967 = vadd.f32 %v947, %v963
  %v968 = vadd.f32 %v948, %v964
  %v969 = vmul.f32 %v965, 0.7978846
  %v970 = vmul.f32 %v966, 0.7978846
  %v971 = vmul.f32 %v967, 0.7978846
  %v972 = vmul.f32 %v968, 0.7978846
  %v973 = vtanh.pop %v969
  %v974 = vtanh.pop %v970
  %v975 = vtanh.pop %v971
  %v976 = vtanh.pop %v972
  %v977 = vadd.f32 %v973, 1.0
  %v978 = vadd.f32 %v974, 1.0
  %v979 = vadd.f32 %v975, 1.0
  %v980 = vadd.f32 %v976, 1.0
  %v981 = vmul.f32 %v949, %v977
  %v982 = vmul.f32 %v950, %v978
  %v983 = vmul.f32 %v951, %v979
  %v984 = vmul.f32 %v952, %v980
  %s985 = scalar_lea.vmem %s2, 288
  %v986 = vld [vmem:[%s985] sm:$0xff]
  %v987 = vld [vmem:[%s985 + $0x8] sm:$0xff]
  %v988 = vld [vmem:[%s985 + $0x10] sm:$0xff]
  %v989 = vld [vmem:[%s985 + $0x18] sm:$0xff]
  %v990 = vld [vmem:[%s985 + $0x20] sm:$0xff]
  %v991 = vld [vmem:[%s985 + $0x28] sm:$0xff]
  %v992 = vld [vmem:[%s985 + $0x30] sm:$0xff]
  %v993 = vld [vmem:[%s985 + $0x38] sm:$0xff]
  %v994 = vld [vmem:[%s985 + $0x40] sm:$0xff]
  %v995 = vld [vmem:[%s985 + $0x48] sm:$0xff]
  %v996 = vld [vmem:[%s985 + $0x50] sm:$0xff]
  %v997 = vld [vmem:[%s985 + $0x58] sm:$0xff]
  %v998 = vld [vmem:[%s985 + $0x60] sm:$0xff]
  %v999 = vld [vmem:[%s985 + $0x68] sm:$0xff]
  %v1000 = vld [vmem:[%s985 + $0x70] sm:$0xff]
  %v1001 = vld [vmem:[%s985 + $0x78] sm:$0xff]
  %v1002 = vld [vmem:[%s985 + $0x80] sm:$0xff]
  %v1003 = vld [vmem:[%s985 + $0x88] sm:$0xff]
  %v1004 = vld [vmem:[%s985 + $0x90] sm:$0xff]
  %v1005 = vld [vmem:[%s985 + $0x98] sm:$0xff]
  %v1006 = vld [vmem:[%s985 + $0xa0] sm:$0xff]
  %v1007 = vld [vmem:[%s985 + $0xa8] sm:$0xff]
  %v1008 = vld [vmem:[%s985 + $0xb0] sm:$0xff]
  %v1009 = vld [vmem:[%s985 + $0xb8] sm:$0xff]
  %v1010 = vld [vmem:[%s985 + $0xc0] sm:$0xff]
  %v1011 = vld [vmem:[%s985 + $0xc8] sm:$0xff]
  %v1012 = vld [vmem:[%s985 + $0xd0] sm:$0xff]
  %v1013 = vld [vmem:[%s985 + $0xd8] sm:$0xff]
  %v1014 = vld [vmem:[%s985 + $0xe0] sm:$0xff]
  %v1015 = vld [vmem:[%s985 + $0xe8] sm:$0xff]
  %v1016 = vld [vmem:[%s985 + $0xf0] sm:$0xff]
  %v1017 = vld [vmem:[%s985 + $0xf8] sm:$0xff]
  %v1018 = vld [vmem:[%s985 + $0x100] sm:$0xff]
  %v1019 = vld [vmem:[%s985 + $0x108] sm:$0xff]
  %v1020 = vld [vmem:[%s985 + $0x110] sm:$0xff]
  %v1021 = vld [vmem:[%s985 + $0x118] sm:$0xff]
  %s1022 = scalar_lea.vmem %s5, 8
  %v1023 = vld [vmem:[%s1022] sm:$0xff]
  %s1024 = scalar_lea.vmem %s6, 8
  %v1025 = vld [vmem:[%s1024] sm:$0xff]
  %1026 = vrot.lane.b32.xlu0 %v981, 9
  %v1027 = vpop.permute.xlu0 %1026
  %1028 = vrot.lane.b32.xlu0 %v982, 9
  %v1029 = vpop.permute.xlu0 %1028
  %1030 = vrot.lane.b32.xlu0 %v983, 9
  %v1031 = vpop.permute.xlu0 %1030
  %1032 = vrot.lane.b32.xlu0 %v984, 9
  %v1033 = vpop.permute.xlu0 %1032
  %v1034 = vsel %vm99, %v1031, %v1033
  %v1035 = vsel %vm99, %v1029, %v1031
  %v1036 = vsel %vm99, %v1027, %v1029
  %v1037 = vsel %vm99, %v1033, %v1027
  %v1038 = vmul.f32 %v1037, %v986
  %v1039 = vmul.f32 %v1036, %v987
  %v1040 = vmul.f32 %v1035, %v988
  %v1041 = vmul.f32 %v1034, %v989
  %v1042 = vadd.f32 %v1038, 0.0
  %v1043 = vadd.f32 %v1039, 0.0
  %v1044 = vadd.f32 %v1040, 0.0
  %v1045 = vadd.f32 %v1041, 0.0
  %1046 = vrot.lane.b32.xlu0 %v981, 8
  %v1047 = vpop.permute.xlu0 %1046
  %1048 = vrot.lane.b32.xlu0 %v982, 8
  %v1049 = vpop.permute.xlu0 %1048
  %1050 = vrot.lane.b32.xlu0 %v983, 8
  %v1051 = vpop.permute.xlu0 %1050
  %1052 = vrot.lane.b32.xlu0 %v984, 8
  %v1053 = vpop.permute.xlu0 %1052
  %v1054 = vsel %vm120, %v1051, %v1053
  %v1055 = vsel %vm120, %v1049, %v1051
  %v1056 = vsel %vm120, %v1047, %v1049
  %v1057 = vsel %vm120, %v1053, %v1047
  %v1058 = vmul.f32 %v1057, %v990
  %v1059 = vmul.f32 %v1056, %v991
  %v1060 = vmul.f32 %v1055, %v992
  %v1061 = vmul.f32 %v1054, %v993
  %v1062 = vadd.f32 %v1042, %v1058
  %v1063 = vadd.f32 %v1043, %v1059
  %v1064 = vadd.f32 %v1044, %v1060
  %v1065 = vadd.f32 %v1045, %v1061
  %1066 = vrot.lane.b32.xlu0 %v981, 7
  %v1067 = vpop.permute.xlu0 %1066
  %1068 = vrot.lane.b32.xlu0 %v982, 7
  %v1069 = vpop.permute.xlu0 %1068
  %1070 = vrot.lane.b32.xlu0 %v983, 7
  %v1071 = vpop.permute.xlu0 %1070
  %1072 = vrot.lane.b32.xlu0 %v984, 7
  %v1073 = vpop.permute.xlu0 %1072
  %v1074 = vsel %vm141, %v1071, %v1073
  %v1075 = vsel %vm141, %v1069, %v1071
  %v1076 = vsel %vm141, %v1067, %v1069
  %v1077 = vsel %vm141, %v1073, %v1067
  %v1078 = vmul.f32 %v1077, %v994
  %v1079 = vmul.f32 %v1076, %v995
  %v1080 = vmul.f32 %v1075, %v996
  %v1081 = vmul.f32 %v1074, %v997
  %v1082 = vadd.f32 %v1062, %v1078
  %v1083 = vadd.f32 %v1063, %v1079
  %v1084 = vadd.f32 %v1064, %v1080
  %v1085 = vadd.f32 %v1065, %v1081
  %1086 = vrot.lane.b32.xlu0 %v981, 1
  %v1087 = vpop.permute.xlu0 %1086
  %1088 = vrot.lane.b32.xlu0 %v982, 1
  %v1089 = vpop.permute.xlu0 %1088
  %1090 = vrot.lane.b32.xlu0 %v983, 1
  %v1091 = vpop.permute.xlu0 %1090
  %1092 = vrot.lane.b32.xlu0 %v984, 1
  %v1093 = vpop.permute.xlu0 %1092
  %v1094 = vsel %vm162, %v1091, %v1093
  %v1095 = vsel %vm162, %v1089, %v1091
  %v1096 = vsel %vm162, %v1087, %v1089
  %v1097 = vsel %vm162, %v1093, %v1087
  %v1098 = vmul.f32 %v1097, %v998
  %v1099 = vmul.f32 %v1096, %v999
  %v1100 = vmul.f32 %v1095, %v1000
  %v1101 = vmul.f32 %v1094, %v1001
  %v1102 = vadd.f32 %v1082, %v1098
  %v1103 = vadd.f32 %v1083, %v1099
  %v1104 = vadd.f32 %v1084, %v1100
  %v1105 = vadd.f32 %v1085, %v1101
  %v1106 = vmul.f32 %v981, %v1002
  %v1107 = vmul.f32 %v982, %v1003
  %v1108 = vmul.f32 %v983, %v1004
  %v1109 = vmul.f32 %v984, %v1005
  %v1110 = vadd.f32 %v1102, %v1106
  %v1111 = vadd.f32 %v1103, %v1107
  %v1112 = vadd.f32 %v1104, %v1108
  %v1113 = vadd.f32 %v1105, %v1109
  %1114 = vrot.lane.b32.xlu0 %v981, 127
  %v1115 = vpop.permute.xlu0 %1114
  %1116 = vrot.lane.b32.xlu0 %v982, 127
  %v1117 = vpop.permute.xlu0 %1116
  %1118 = vrot.lane.b32.xlu0 %v983, 127
  %v1119 = vpop.permute.xlu0 %1118
  %1120 = vrot.lane.b32.xlu0 %v984, 127
  %v1121 = vpop.permute.xlu0 %1120
  %v1122 = vsel %vm191, %v1119, %v1121
  %v1123 = vsel %vm191, %v1117, %v1119
  %v1124 = vsel %vm191, %v1115, %v1117
  %v1125 = vsel %vm191, %v1121, %v1115
  %v1126 = vmul.f32 %v1124, %v1006
  %v1127 = vmul.f32 %v1123, %v1007
  %v1128 = vmul.f32 %v1122, %v1008
  %v1129 = vmul.f32 %v1125, %v1009
  %v1130 = vadd.f32 %v1110, %v1126
  %v1131 = vadd.f32 %v1111, %v1127
  %v1132 = vadd.f32 %v1112, %v1128
  %v1133 = vadd.f32 %v1113, %v1129
  %1134 = vrot.lane.b32.xlu0 %v981, 121
  %v1135 = vpop.permute.xlu0 %1134
  %1136 = vrot.lane.b32.xlu0 %v982, 121
  %v1137 = vpop.permute.xlu0 %1136
  %1138 = vrot.lane.b32.xlu0 %v983, 121
  %v1139 = vpop.permute.xlu0 %1138
  %1140 = vrot.lane.b32.xlu0 %v984, 121
  %v1141 = vpop.permute.xlu0 %1140
  %v1142 = vsel %vm212, %v1139, %v1141
  %v1143 = vsel %vm212, %v1137, %v1139
  %v1144 = vsel %vm212, %v1135, %v1137
  %v1145 = vsel %vm212, %v1141, %v1135
  %v1146 = vmul.f32 %v1144, %v1010
  %v1147 = vmul.f32 %v1143, %v1011
  %v1148 = vmul.f32 %v1142, %v1012
  %v1149 = vmul.f32 %v1145, %v1013
  %v1150 = vadd.f32 %v1130, %v1146
  %v1151 = vadd.f32 %v1131, %v1147
  %v1152 = vadd.f32 %v1132, %v1148
  %v1153 = vadd.f32 %v1133, %v1149
  %1154 = vrot.lane.b32.xlu0 %v981, 120
  %v1155 = vpop.permute.xlu0 %1154
  %1156 = vrot.lane.b32.xlu0 %v982, 120
  %v1157 = vpop.permute.xlu0 %1156
  %1158 = vrot.lane.b32.xlu0 %v983, 120
  %v1159 = vpop.permute.xlu0 %1158
  %1160 = vrot.lane.b32.xlu0 %v984, 120
  %v1161 = vpop.permute.xlu0 %1160
  %v1162 = vsel %vm233, %v1159, %v1161
  %v1163 = vsel %vm233, %v1157, %v1159
  %v1164 = vsel %vm233, %v1155, %v1157
  %v1165 = vsel %vm233, %v1161, %v1155
  %v1166 = vmul.f32 %v1164, %v1014
  %v1167 = vmul.f32 %v1163, %v1015
  %v1168 = vmul.f32 %v1162, %v1016
  %v1169 = vmul.f32 %v1165, %v1017
  %v1170 = vadd.f32 %v1150, %v1166
  %v1171 = vadd.f32 %v1151, %v1167
  %v1172 = vadd.f32 %v1152, %v1168
  %v1173 = vadd.f32 %v1153, %v1169
  %1174 = vrot.lane.b32.xlu0 %v981, 119
  %v1175 = vpop.permute.xlu0 %1174
  %1176 = vrot.lane.b32.xlu0 %v982, 119
  %v1177 = vpop.permute.xlu0 %1176
  %1178 = vrot.lane.b32.xlu0 %v983, 119
  %v1179 = vpop.permute.xlu0 %1178
  %1180 = vrot.lane.b32.xlu0 %v984, 119
  %v1181 = vpop.permute.xlu0 %1180
  %v1182 = vsel %vm254, %v1179, %v1181
  %v1183 = vsel %vm254, %v1177, %v1179
  %v1184 = vsel %vm254, %v1175, %v1177
  %v1185 = vsel %vm254, %v1181, %v1175
  %v1186 = vmul.f32 %v1184, %v1018
  %v1187 = vmul.f32 %v1183, %v1019
  %v1188 = vmul.f32 %v1182, %v1020
  %v1189 = vmul.f32 %v1185, %v1021
  %v1190 = vadd.f32 %v1170, %v1186
  %v1191 = vadd.f32 %v1171, %v1187
  %v1192 = vadd.f32 %v1172, %v1188
  %v1193 = vadd.f32 %v1173, %v1189
  %1195 = vset.pattern.permute.xlu0 0
  %1196 = vperm.xlu0 %1195, %v1023
  %v1197 = vpop.permute.xlu0 %1196
  %v1199 = vmul.f32 %v1190, %v1197
  %v1200 = vmul.f32 %v1191, %v1197
  %v1201 = vmul.f32 %v1192, %v1197
  %v1202 = vmul.f32 %v1193, %v1197
  %1204 = vset.pattern.permute.xlu0 0
  %1205 = vperm.xlu0 %1204, %v1025
  %v1206 = vpop.permute.xlu0 %1205
  %v1208 = vadd.f32 %v1199, %v1206
  %v1209 = vadd.f32 %v1200, %v1206
  %v1210 = vadd.f32 %v1201, %v1206
  %v1211 = vadd.f32 %v1202, %v1206
  %v1212 = vmul.f32 %v1208, 0.5
  %v1213 = vmul.f32 %v1209, 0.5
  %v1214 = vmul.f32 %v1210, 0.5
  %v1215 = vmul.f32 %v1211, 0.5
  %v1216 = vmul.f32 %v1208, 0.044715
  %v1217 = vmul.f32 %v1209, 0.044715
  %v1218 = vmul.f32 %v1210, 0.044715
  %v1219 = vmul.f32 %v1211, 0.044715
  %v1220 = vmul.f32 %v1216, %v1208
  %v1221 = vmul.f32 %v1217, %v1209
  %v1222 = vmul.f32 %v1218, %v1210
  %v1223 = vmul.f32 %v1219, %v1211
  %v1224 = vmul.f32 %v1220, %v1208
  %v1225 = vmul.f32 %v1221, %v1209
  %v1226 = vmul.f32 %v1222, %v1210
  %v1227 = vmul.f32 %v1223, %v1211
  %v1228 = vadd.f32 %v1208, %v1224
  %v1229 = vadd.f32 %v1209, %v1225
  %v1230 = vadd.f32 %v1210, %v1226
  %v1231 = vadd.f32 %v1211, %v1227
  %v1232 = vmul.f32 %v1228, 0.7978846
  %v1233 = vmul.f32 %v1229, 0.7978846
  %v1234 = vmul.f32 %v1230, 0.7978846
  %v1235 = vmul.f32 %v1231, 0.7978846
  %v1236 = vtanh.pop %v1232
  %v1237 = vtanh.pop %v1233
  %v1238 = vtanh.pop %v1234
  %v1239 = vtanh.pop %v1235
  %v1240 = vadd.f32 %v1236, 1.0
  %v1241 = vadd.f32 %v1237, 1.0
  %v1242 = vadd.f32 %v1238, 1.0
  %v1243 = vadd.f32 %v1239, 1.0
  %v1244 = vmul.f32 %v1212, %v1240
  %v1245 = vmul.f32 %v1213, %v1241
  %v1246 = vmul.f32 %v1214, %v1242
  %v1247 = vmul.f32 %v1215, %v1243
  %v1248 = vadd.f32 %v1244, %v718
  %v1249 = vadd.f32 %v1245, %v719
  %v1250 = vadd.f32 %v1246, %v720
  %v1251 = vadd.f32 %v1247, %v721
  %s1252 = scalar_lea.vmem %s7, 8
  %v1253 = vld [vmem:[%s1252] sm:$0xff]
  %v1254 = vpack.c.bf16 %v1253, %v1253
  %v1255 = vpack.c.bf16 %v1248, %v1248
  %v1256 = vpack.c.bf16 %v1249, %v1249
  %v1257 = vpack.c.bf16 %v1250, %v1250
  %v1258 = vpack.c.bf16 %v1251, %v1251
  %s1259 = scalar_lea.vmem %s8, 8
  %v1260 = vld [vmem:[%s1259] sm:$0xff]
  %1262 = vset.pattern.permute.xlu0 0
  %1263 = vperm.xlu0 %1262, %v1260
  %v1264 = vpop.permute.xlu0 %1263
  %v1267 = vsel %vm597, %v1254, 0
  %v1270 = vsel %vm601, %v1255, 0
  %v1273 = vsel %vm601, %v1256, 0
  %v1276 = vsel %vm601, %v1257, 0
  %v1279 = vsel %vm601, %v1258, 0
  %1281 = vmatpush.bf16.msra.mxu0 0
  %1282 = vmatpush.bf16.msra.mxu0 0
  %1283 = vmatpush.bf16.msra.mxu0 0
  %1284 = vmatpush.bf16.msra.mxu0 0
  %1285 = vmatpush.bf16.msra.mxu0 0
  %1286 = vmatpush.bf16.msra.mxu0 0
  %1287 = vmatpush.bf16.msra.mxu0 0
  %1288 = vmatpush.bf16.msra.mxu0 %v1270
  %1289 = vmatmul.bf16.gmra.mxu0 %v1267
  %v1290 = vpop.f32.mrf.mxu0
  %v1291 = vadd.f32 %v1264, %v1290
  %v1292 = vpop.f32.mrf.mxu0
  %1293 = vdwg.mxu0
  %1294 = vmatpush.bf16.msra.mxu0 0
  %1295 = vmatpush.bf16.msra.mxu0 0
  %1296 = vmatpush.bf16.msra.mxu0 0
  %1297 = vmatpush.bf16.msra.mxu0 0
  %1298 = vmatpush.bf16.msra.mxu0 0
  %1299 = vmatpush.bf16.msra.mxu0 0
  %1300 = vmatpush.bf16.msra.mxu0 0
  %1301 = vmatpush.bf16.msra.mxu0 %v1273
  %1302 = vmatmul.bf16.gmra.mxu0 %v1267
  %v1303 = vpop.f32.mrf.mxu0
  %v1304 = vadd.f32 %v1264, %v1303
  %v1305 = vpop.f32.mrf.mxu0
  %1306 = vdwg.mxu0
  %1307 = vmatpush.bf16.msra.mxu0 0
  %1308 = vmatpush.bf16.msra.mxu0 0
  %1309 = vmatpush.bf16.msra.mxu0 0
  %1310 = vmatpush.bf16.msra.mxu0 0
  %1311 = vmatpush.bf16.msra.mxu0 0
  %1312 = vmatpush.bf16.msra.mxu0 0
  %1313 = vmatpush.bf16.msra.mxu0 0
  %1314 = vmatpush.bf16.msra.mxu0 %v1276
  %1315 = vmatmul.bf16.gmra.mxu0 %v1267
  %v1316 = vpop.f32.mrf.mxu0
  %v1317 = vadd.f32 %v1264, %v1316
  %v1318 = vpop.f32.mrf.mxu0
  %1319 = vdwg.mxu0
  %1320 = vmatpush.bf16.msra.mxu0 0
  %1321 = vmatpush.bf16.msra.mxu0 0
  %1322 = vmatpush.bf16.msra.mxu0 0
  %1323 = vmatpush.bf16.msra.mxu0 0
  %1324 = vmatpush.bf16.msra.mxu0 0
  %1325 = vmatpush.bf16.msra.mxu0 0
  %1326 = vmatpush.bf16.msra.mxu0 0
  %1327 = vmatpush.bf16.msra.mxu0 %v1279
  %1328 = vmatmul.bf16.gmra.mxu0 %v1267
  %v1329 = vpop.f32.mrf.mxu0
  %v1330 = vadd.f32 %v1264, %v1329
  %v1331 = vpop.f32.mrf.mxu0
  %1332 = vdwg.mxu0
  %v1333 = vmul.f32 %v1291, 0.5
  %v1334 = vmul.f32 %v1304, 0.5
  %v1335 = vmul.f32 %v1317, 0.5
  %v1336 = vmul.f32 %v1330, 0.5
  %v1337 = vmul.f32 %v1291, 0.044715
  %v1338 = vmul.f32 %v1304, 0.044715
  %v1339 = vmul.f32 %v1317, 0.044715
  %v1340 = vmul.f32 %v1330, 0.044715
  %v1341 = vmul.f32 %v1337, %v1291
  %v1342 = vmul.f32 %v1338, %v1304
  %v1343 = vmul.f32 %v1339, %v1317
  %v1344 = vmul.f32 %v1340, %v1330
  %v1345 = vmul.f32 %v1341, %v1291
  %v1346 = vmul.f32 %v1342, %v1304
  %v1347 = vmul.f32 %v1343, %v1317
  %v1348 = vmul.f32 %v1344, %v1330
  %v1349 = vadd.f32 %v1291, %v1345
  %v1350 = vadd.f32 %v1304, %v1346
  %v1351 = vadd.f32 %v1317, %v1347
  %v1352 = vadd.f32 %v1330, %v1348
  %v1353 = vmul.f32 %v1349, 0.7978846
  %v1354 = vmul.f32 %v1350, 0.7978846
  %v1355 = vmul.f32 %v1351, 0.7978846
  %v1356 = vmul.f32 %v1352, 0.7978846
  %v1357 = vtanh.pop %v1353
  %v1358 = vtanh.pop %v1354
  %v1359 = vtanh.pop %v1355
  %v1360 = vtanh.pop %v1356
  %v1361 = vadd.f32 %v1357, 1.0
  %v1362 = vadd.f32 %v1358, 1.0
  %v1363 = vadd.f32 %v1359, 1.0
  %v1364 = vadd.f32 %v1360, 1.0
  %v1365 = vmul.f32 %v1333, %v1361
  %v1366 = vmul.f32 %v1334, %v1362
  %v1367 = vmul.f32 %v1335, %v1363
  %v1368 = vmul.f32 %v1336, %v1364
  %s1369 = scalar_lea.vmem %s9, 8
  %v1370 = vld [vmem:[%s1369] sm:$0xff]
  %1372 = vset.pattern.permute.xlu0 0
  %1373 = vperm.xlu0 %1372, %v1370
  %v1374 = vpop.permute.xlu0 %1373
  %v1376 = vmul.f32 %v1365, %v1374
  %v1377 = vmul.f32 %v1366, %v1374
  %v1378 = vmul.f32 %v1367, %v1374
  %v1379 = vmul.f32 %v1368, %v1374
  %s1380 = scalar_lea.vmem %s10, 8
  %v1381 = vld [vmem:[%s1380] sm:$0xff]
  %1383 = vset.pattern.permute.xlu0 0
  %1384 = vperm.xlu0 %1383, %v1381
  %v1385 = vpop.permute.xlu0 %1384
  %v1387 = vadd.f32 %v1376, %v1385
  %v1388 = vadd.f32 %v1377, %v1385
  %v1389 = vadd.f32 %v1378, %v1385
  %v1390 = vadd.f32 %v1379, %v1385
  %v1391 = vld [vmem:[%s11] sm:$0x1]
  %v1392 = vpack.c.bf16 %v1391, %v1391
  %v1393 = vpack.c.bf16 %v1387, %v1387
  %v1394 = vpack.c.bf16 %v1388, %v1388
  %v1395 = vpack.c.bf16 %v1389, %v1389
  %v1396 = vpack.c.bf16 %v1390, %v1390
  %v1397 = vld [vmem:[#allocation2] sm:$0x1]
  %1399 = vset.pattern.permute.xlu0 0
  %1400 = vperm.xlu0 %1399, %v1397
  %v1401 = vpop.permute.xlu0 %1400
  %v1403 = vperm.slane %v1401, 0
  %v1405 = vsel %vm597, %v1392, 0
  %v1408 = vsel %vm601, %v1393, 0
  %v1411 = vsel %vm601, %v1394, 0
  %v1414 = vsel %vm601, %v1395, 0
  %v1417 = vsel %vm601, %v1396, 0
  %1419 = vmatpush.bf16.msra.mxu0 0
  %1420 = vmatpush.bf16.msra.mxu0 0
  %1421 = vmatpush.bf16.msra.mxu0 0
  %1422 = vmatpush.bf16.msra.mxu0 0
  %1423 = vmatpush.bf16.msra.mxu0 0
  %1424 = vmatpush.bf16.msra.mxu0 0
  %1425 = vmatpush.bf16.msra.mxu0 0
  %1426 = vmatpush.bf16.msra.mxu0 %v1408
  %1427 = vmatmul.bf16.gmra.mxu0 %v1405
  %v1428 = vpop.f32.mrf.mxu0
  %v1429 = vadd.f32 %v1403, %v1428
  %v1430 = vpop.f32.mrf.mxu0
  %1431 = vdwg.mxu0
  %1432 = vmatpush.bf16.msra.mxu0 0
  %1433 = vmatpush.bf16.msra.mxu0 0
  %1434 = vmatpush.bf16.msra.mxu0 0
  %1435 = vmatpush.bf16.msra.mxu0 0
  %1436 = vmatpush.bf16.msra.mxu0 0
  %1437 = vmatpush.bf16.msra.mxu0 0
  %1438 = vmatpush.bf16.msra.mxu0 0
  %1439 = vmatpush.bf16.msra.mxu0 %v1411
  %1440 = vmatmul.bf16.gmra.mxu0 %v1405
  %v1441 = vpop.f32.mrf.mxu0
  %v1442 = vadd.f32 %v1403, %v1441
  %v1443 = vpop.f32.mrf.mxu0
  %1444 = vdwg.mxu0
  %1445 = vmatpush.bf16.msra.mxu0 0
  %1446 = vmatpush.bf16.msra.mxu0 0
  %1447 = vmatpush.bf16.msra.mxu0 0
  %1448 = vmatpush.bf16.msra.mxu0 0
  %1449 = vmatpush.bf16.msra.mxu0 0
  %1450 = vmatpush.bf16.msra.mxu0 0
  %1451 = vmatpush.bf16.msra.mxu0 0
  %1452 = vmatpush.bf16.msra.mxu0 %v1414
  %1453 = vmatmul.bf16.gmra.mxu0 %v1405
  %v1454 = vpop.f32.mrf.mxu0
  %v1455 = vadd.f32 %v1403, %v1454
  %v1456 = vpop.f32.mrf.mxu0
  %1457 = vdwg.mxu0
  %1458 = vmatpush.bf16.msra.mxu0 0
  %1459 = vmatpush.bf16.msra.mxu0 0
  %1460 = vmatpush.bf16.msra.mxu0 0
  %1461 = vmatpush.bf16.msra.mxu0 0
  %1462 = vmatpush.bf16.msra.mxu0 0
  %1463 = vmatpush.bf16.msra.mxu0 0
  %1464 = vmatpush.bf16.msra.mxu0 0
  %1465 = vmatpush.bf16.msra.mxu0 %v1417
  %1466 = vmatmul.bf16.gmra.mxu0 %v1405
  %v1467 = vpop.f32.mrf.mxu0
  %v1468 = vadd.f32 %v1403, %v1467
  %v1469 = vpop.f32.mrf.mxu0
  %1470 = vdwg.mxu0
  %v1475 = vrot.slane %v1442, 7
  %v1476 = vrot.slane %v1455, 6
  %v1477 = vrot.slane %v1468, 5
  %vm1478 = vcmask 1040384
  %v1479 = vsel %vm1478, %v1429, %v1475
  %vm1480 = vcmask 1042434
  %v1481 = vsel %vm1480, %v1476, %v1477
  %vm1482 = vcmask 1041408
  %v1483 = vsel %vm1482, %v1479, %v1481
  %v1485 = vlaneseq
  %vm1486 = vcmp.ge.s32.totalorder %v1485, 0
  %vm1487 = vcmp.lt.s32.totalorder %v1485, 512
  %vm1488 = vmand %vm1486, %vm1487
  %1489 = vst.msk [vmem:[%s13] sm:$0xf] %vm1488, %v1483
  // Predicated region
  $region54: #{_lambda_.2} parent=0 // pred_check
    _
  $region55: #{_lambda_.2} parent=0 // pred_check_branch
    %1491 = sbr.rel (0) target = $region57
  $region56: #{_lambda_.2} parent=0 // pred_region
    _
  $region57: #{_lambda_.2} parent=0 // pred_fallthru
    _
  // Predicated region
  $region58: #{_lambda_.2} parent=0 // pred_check
    _
  $region59: #{_lambda_.2} parent=0 // pred_check_branch
    %1493 = sbr.rel (0) target = $region61
  $region60: #{_lambda_.2} parent=0 // pred_region
    _
  $region61: #{_lambda_.2} parent=0 // pred_fallthru
    _

// kernel: _lambda_.3
$region0: #{_lambda_.3}
  #allocation0 [shape = 'u32[]', space=smem, size = 0x4, offset = 0x4, fixed_abs, tag = 'smem constant byte address 0x4 - core index']
  #allocation1 [shape = 'u32[72,128]{1,0:T(1,128)}', space=vmem, size = 0x9000, scoped, tag = 'internal scratch']
  #allocation2 [shape = 'f32[8,64]{1,0:T(8,128)}', space=vmem, size = 0x1000, scoped, tag = 'scratch operand']
  %s0 = inlined_call_operand.vmem [shape: f32[8,64], index: 0, kind: input, shape index: {}]
  %s1 = inlined_call_operand.vmem [shape: f32[8,64], index: 1, kind: input, shape index: {}]
  %s2 = inlined_call_operand.vmem [shape: f32[8,8], index: 2, kind: input, shape index: {}]
  %s3 = inlined_call_operand.vmem [shape: f32[2,1,64], index: 3, kind: input, shape index: {}]
  %s4 = inlined_call_operand.vmem [shape: f32[2,1,64], index: 4, kind: input, shape index: {}]
  %s5 = inlined_call_operand.vmem [shape: f32[2,3,4,16,64], index: 5, kind: input, shape index: {}]
  %s6 = inlined_call_operand.vmem [shape: f32[2,4,16,64], index: 6, kind: input, shape index: {}]
  %s7 = inlined_call_operand.vmem [shape: f32[2,1,64], index: 7, kind: input, shape index: {}]
  %s8 = inlined_call_operand.vmem [shape: f32[2,1,64], index: 8, kind: input, shape index: {}]
  %s9 = inlined_call_operand.vmem [shape: f32[2,1,64], index: 9, kind: input, shape index: {}]
  %s10 = inlined_call_operand.vmem [shape: f32[2,64,64], index: 10, kind: input, shape index: {}]
  %s11 = inlined_call_operand.vmem [shape: f32[2,1,64], index: 11, kind: input, shape index: {}]
  %s12 = inlined_call_operand.vmem [shape: f32[2,64,64], index: 12, kind: input, shape index: {}]
  %s13 = inlined_call_operand.vmem [shape: f32[2,1,64], index: 13, kind: input, shape index: {}]
  %s14 = inlined_call_operand.vmem [shape: f32[2,64,64], index: 14, kind: input, shape index: {}]
  %s15 = inlined_call_operand.vmem [shape: f32[2,64,256], index: 15, kind: input, shape index: {}]
  %s16 = inlined_call_operand.vmem [shape: f32[2,64,256], index: 16, kind: input, shape index: {}]
  %s17 = inlined_call_operand.vmem [shape: f32[2,1,256], index: 17, kind: input, shape index: {}]
  %s18 = inlined_call_operand.hbm [shape: f32[8,64], index: 18, kind: output, shape index: {}]
  %s19 = sld [smem:[#allocation0]]
  $region113: #{_lambda_.3} parent=0
    _
  %s21 = ssub.s32 1, %s19
  %s22 = scalar_select 0, %s21, %s19
  $region1: #{_lambda_.3} parent=0
    #allocation3 [shape = 'u8[4096]{0}', space=vmem, size = 0x1000, scoped, tag = 'output window, operand 0, single buffered']
    #allocation4 [shape = 's32[2]{0}', space=sflag, size = 0x8, scoped, tag = 'scoped memory for _lambda_.3']
    %23 = vsyncpa [#allocation4], 0
    loop: start=0, step=1, limit=4
    $region2: #{_lambda_.3} parent=1 // loop_pre_header
      _
    $region3: #{_lambda_.3} parent=1 // loop_header
      %s25 = sphi 0, %s29
      %p26 = scmp.ge.s32.totalorder %s25, 4
      %s33 = sphi 0, %s33
      %s35 = sphi 0, %s33
      %s36 = sphi 0, %s35
      %s50 = sphi 0, %s36
      %s54 = sphi 0, %s54
      %s56 = sphi 0, %s54
      %s57 = sphi 0, %s56
      %s71 = sphi 0, %s57
      %s75 = sphi 0, %s75
      %s77 = sphi 0, %s75
      %s78 = sphi 0, %s77
      %s92 = sphi 0, %s78
      %s98 = sphi 0, %s100
      %s101 = sphi 0, %s98
      %s102 = sphi 0, %s101
      %s118 = sphi 0, %s102
      %s124 = sphi 0, %s126
      %s127 = sphi 0, %s124
      %s128 = sphi 0, %s127
      %s144 = sphi 0, %s128
      %s150 = sphi 0, %s152
      %s153 = sphi 0, %s150
      %s154 = sphi 0, %s153
      %s170 = sphi 0, %s154
      %s176 = sphi 0, %s178
      %s179 = sphi 0, %s176
      %s180 = sphi 0, %s179
      %s196 = sphi 0, %s180
      %s202 = sphi 0, %s204
      %s205 = sphi 0, %s202
      %s206 = sphi 0, %s205
      %s222 = sphi 0, %s206
      %s228 = sphi 0, %s230
      %s231 = sphi 0, %s228
      %s232 = sphi 0, %s231
      %s248 = sphi 0, %s232
      %s254 = sphi 0, %s256
      %s257 = sphi 0, %s254
      %s258 = sphi 0, %s257
      %s274 = sphi 0, %s258
      %s280 = sphi 0, %s282
      %s283 = sphi 0, %s280
      %s284 = sphi 0, %s283
      %s300 = sphi 0, %s284
      %s306 = sphi 0, %s308
      %s309 = sphi 0, %s306
      %s310 = sphi 0, %s309
      %s326 = sphi 0, %s310
      %s332 = sphi 0, %s334
      %s335 = sphi 0, %s332
      %s336 = sphi 0, %s335
      %s352 = sphi 0, %s336
      %s358 = sphi 0, %s360
      %s361 = sphi 0, %s358
      %s362 = sphi 0, %s361
      %s378 = sphi 0, %s362
      %s382 = sphi 0, %s382
      %s384 = sphi 0, %s382
      %s385 = sphi 0, %s384
      %s399 = sphi 0, %s385
      %s403 = sphi 0, %s403
      %s405 = sphi 0, %s403
      %s406 = sphi 0, %s405
      %s420 = sphi 0, %s406
      %s424 = sphi 0, %s424
      %s426 = sphi 0, %s424
      %s427 = sphi 0, %s426
      %s441 = sphi 0, %s427
      %s445 = sphi 0, %s445
      %s447 = sphi 0, %s445
      %s448 = sphi 0, %s447
      %s462 = sphi 0, %s448
      %s466 = sphi 0, %s466
      %s468 = sphi 0, %s466
      %s469 = sphi 0, %s468
      %s483 = sphi 0, %s469
    $region4: #{_lambda_.3} parent=1 // loop_header_branch
      %28 = sbr.rel (%p26) target = $region8
    $region5: #{_lambda_.3} parent=1 // loop_body
      %s30 = ssub.s32 %s25, 1
      %s31 = ssub.s32 %s25, 2
      %s32 = sadd.s32 %s25, 1
      %s34 = sadd.s32 %s33, 1
      %p37 = scmp.eq.s32.totalorder %s25, 1
      %p38 = scmp.ne.s32.totalorder %s33, %s35
      %p39 = scmp.eq.s32.totalorder %s25, 0
      %p40 = por %p38, %p39
      %p41 = scmp.ne.s32.totalorder %s33, %s35
      %p42 = scmp.eq.s32.totalorder %s30, 1
      %p43 = por %p41, %p42
      %p44 = scmp.ne.s32.totalorder %s35, %s36
      %p45 = scmp.eq.s32.totalorder %s30, 0
      %p46 = por %p44, %p45
      %p47 = scmp.ne.s32.totalorder %s35, %s36
      %p48 = scmp.eq.s32.totalorder %s31, 1
      %p49 = por %p47, %p48
      %p51 = scmp.ne.s32.totalorder %s36, %s50
      %p52 = scmp.eq.s32.totalorder %s31, 0
      %p53 = por %p51, %p52
      %s55 = sadd.s32 %s54, 1
      %p58 = scmp.eq.s32.totalorder %s25, 1
      %p59 = scmp.ne.s32.totalorder %s54, %s56
      %p60 = scmp.eq.s32.totalorder %s25, 0
      %p61 = por %p59, %p60
      %p62 = scmp.ne.s32.totalorder %s54, %s56
      %p63 = scmp.eq.s32.totalorder %s30, 1
      %p64 = por %p62, %p63
      %p65 = scmp.ne.s32.totalorder %s56, %s57
      %p66 = scmp.eq.s32.totalorder %s30, 0
      %p67 = por %p65, %p66
      %p68 = scmp.ne.s32.totalorder %s56, %s57
      %p69 = scmp.eq.s32.totalorder %s31, 1
      %p70 = por %p68, %p69
      %p72 = scmp.ne.s32.totalorder %s57, %s71
      %p73 = scmp.eq.s32.totalorder %s31, 0
      %p74 = por %p72, %p73
      %s76 = sadd.s32 %s75, 1
      %p79 = scmp.eq.s32.totalorder %s25, 1
      %p80 = scmp.ne.s32.totalorder %s75, %s77
      %p81 = scmp.eq.s32.totalorder %s25, 0
      %p82 = por %p80, %p81
      %p83 = scmp.ne.s32.totalorder %s75, %s77
      %p84 = scmp.eq.s32.totalorder %s30, 1
      %p85 = por %p83, %p84
      %p86 = scmp.ne.s32.totalorder %s77, %s78
      %p87 = scmp.eq.s32.totalorder %s30, 0
      %p88 = por %p86, %p87
      %p89 = scmp.ne.s32.totalorder %s77, %s78
      %p90 = scmp.eq.s32.totalorder %s31, 1
      %p91 = por %p89, %p90
      %p93 = scmp.ne.s32.totalorder %s78, %s92
      %p94 = scmp.eq.s32.totalorder %s31, 0
      %p95 = por %p93, %p94
      %s96 = ssub.s32 %s25, %s32
      %p97 = scmp.eq.s32.totalorder %s96, 0
      %s99 = sadd.s32 %s98, 1
      %s100 = scalar_select %p97, %s98, %s99
      %p103 = pneg %p97
      %p104 = scmp.eq.s32.totalorder %s25, 1
      %p105 = por %p103, %p104
      %p106 = scmp.ne.s32.totalorder %s98, %s101
      %p107 = scmp.eq.s32.totalorder %s25, 0
      %p108 = por %p106, %p107
      %p109 = scmp.ne.s32.totalorder %s98, %s101
      %p110 = scmp.eq.s32.totalorder %s30, 1
      %p111 = por %p109, %p110
      %p112 = scmp.ne.s32.totalorder %s101, %s102
      %p113 = scmp.eq.s32.totalorder %s30, 0
      %p114 = por %p112, %p113
      %p115 = scmp.ne.s32.totalorder %s101, %s102
      %p116 = scmp.eq.s32.totalorder %s31, 1
      %p117 = por %p115, %p116
      %p119 = scmp.ne.s32.totalorder %s102, %s118
      %p120 = scmp.eq.s32.totalorder %s31, 0
      %p121 = por %p119, %p120
      %s122 = ssub.s32 %s25, %s32
      %p123 = scmp.eq.s32.totalorder %s122, 0
      %s125 = sadd.s32 %s124, 1
      %s126 = scalar_select %p123, %s124, %s125
      %p129 = pneg %p123
      %p130 = scmp.eq.s32.totalorder %s25, 1
      %p131 = por %p129, %p130
      %p132 = scmp.ne.s32.totalorder %s124, %s127
      %p133 = scmp.eq.s32.totalorder %s25, 0
      %p134 = por %p132, %p133
      %p135 = scmp.ne.s32.totalorder %s124, %s127
      %p136 = scmp.eq.s32.totalorder %s30, 1
      %p137 = por %p135, %p136
      %p138 = scmp.ne.s32.totalorder %s127, %s128
      %p139 = scmp.eq.s32.totalorder %s30, 0
      %p140 = por %p138, %p139
      %p141 = scmp.ne.s32.totalorder %s127, %s128
      %p142 = scmp.eq.s32.totalorder %s31, 1
      %p143 = por %p141, %p142
      %p145 = scmp.ne.s32.totalorder %s128, %s144
      %p146 = scmp.eq.s32.totalorder %s31, 0
      %p147 = por %p145, %p146
      %s148 = ssub.s32 %s25, %s32
      %p149 = scmp.eq.s32.totalorder %s148, 0
      %s151 = sadd.s32 %s150, 1
      %s152 = scalar_select %p149, %s150, %s151
      %p155 = pneg %p149
      %p156 = scmp.eq.s32.totalorder %s25, 1
      %p157 = por %p155, %p156
      %p158 = scmp.ne.s32.totalorder %s150, %s153
      %p159 = scmp.eq.s32.totalorder %s25, 0
      %p160 = por %p158, %p159
      %p161 = scmp.ne.s32.totalorder %s150, %s153
      %p162 = scmp.eq.s32.totalorder %s30, 1
      %p163 = por %p161, %p162
      %p164 = scmp.ne.s32.totalorder %s153, %s154
      %p165 = scmp.eq.s32.totalorder %s30, 0
      %p166 = por %p164, %p165
      %p167 = scmp.ne.s32.totalorder %s153, %s154
      %p168 = scmp.eq.s32.totalorder %s31, 1
      %p169 = por %p167, %p168
      %p171 = scmp.ne.s32.totalorder %s154, %s170
      %p172 = scmp.eq.s32.totalorder %s31, 0
      %p173 = por %p171, %p172
      %s174 = ssub.s32 %s25, %s32
      %p175 = scmp.eq.s32.totalorder %s174, 0
      %s177 = sadd.s32 %s176, 1
      %s178 = scalar_select %p175, %s176, %s177
      %p181 = pneg %p175
      %p182 = scmp.eq.s32.totalorder %s25, 1
      %p183 = por %p181, %p182
      %p184 = scmp.ne.s32.totalorder %s176, %s179
      %p185 = scmp.eq.s32.totalorder %s25, 0
      %p186 = por %p184, %p185
      %p187 = scmp.ne.s32.totalorder %s176, %s179
      %p188 = scmp.eq.s32.totalorder %s30, 1
      %p189 = por %p187, %p188
      %p190 = scmp.ne.s32.totalorder %s179, %s180
      %p191 = scmp.eq.s32.totalorder %s30, 0
      %p192 = por %p190, %p191
      %p193 = scmp.ne.s32.totalorder %s179, %s180
      %p194 = scmp.eq.s32.totalorder %s31, 1
      %p195 = por %p193, %p194
      %p197 = scmp.ne.s32.totalorder %s180, %s196
      %p198 = scmp.eq.s32.totalorder %s31, 0
      %p199 = por %p197, %p198
      %s200 = ssub.s32 %s25, %s32
      %p201 = scmp.eq.s32.totalorder %s200, 0
      %s203 = sadd.s32 %s202, 1
      %s204 = scalar_select %p201, %s202, %s203
      %p207 = pneg %p201
      %p208 = scmp.eq.s32.totalorder %s25, 1
      %p209 = por %p207, %p208
      %p210 = scmp.ne.s32.totalorder %s202, %s205
      %p211 = scmp.eq.s32.totalorder %s25, 0
      %p212 = por %p210, %p211
      %p213 = scmp.ne.s32.totalorder %s202, %s205
      %p214 = scmp.eq.s32.totalorder %s30, 1
      %p215 = por %p213, %p214
      %p216 = scmp.ne.s32.totalorder %s205, %s206
      %p217 = scmp.eq.s32.totalorder %s30, 0
      %p218 = por %p216, %p217
      %p219 = scmp.ne.s32.totalorder %s205, %s206
      %p220 = scmp.eq.s32.totalorder %s31, 1
      %p221 = por %p219, %p220
      %p223 = scmp.ne.s32.totalorder %s206, %s222
      %p224 = scmp.eq.s32.totalorder %s31, 0
      %p225 = por %p223, %p224
      %s226 = ssub.s32 %s25, %s32
      %p227 = scmp.eq.s32.totalorder %s226, 0
      %s229 = sadd.s32 %s228, 1
      %s230 = scalar_select %p227, %s228, %s229
      %p233 = pneg %p227
      %p234 = scmp.eq.s32.totalorder %s25, 1
      %p235 = por %p233, %p234
      %p236 = scmp.ne.s32.totalorder %s228, %s231
      %p237 = scmp.eq.s32.totalorder %s25, 0
      %p238 = por %p236, %p237
      %p239 = scmp.ne.s32.totalorder %s228, %s231
      %p240 = scmp.eq.s32.totalorder %s30, 1
      %p241 = por %p239, %p240
      %p242 = scmp.ne.s32.totalorder %s231, %s232
      %p243 = scmp.eq.s32.totalorder %s30, 0
      %p244 = por %p242, %p243
      %p245 = scmp.ne.s32.totalorder %s231, %s232
      %p246 = scmp.eq.s32.totalorder %s31, 1
      %p247 = por %p245, %p246
      %p249 = scmp.ne.s32.totalorder %s232, %s248
      %p250 = scmp.eq.s32.totalorder %s31, 0
      %p251 = por %p249, %p250
      %s252 = ssub.s32 %s25, %s32
      %p253 = scmp.eq.s32.totalorder %s252, 0
      %s255 = sadd.s32 %s254, 1
      %s256 = scalar_select %p253, %s254, %s255
      %p259 = pneg %p253
      %p260 = scmp.eq.s32.totalorder %s25, 1
      %p261 = por %p259, %p260
      %p262 = scmp.ne.s32.totalorder %s254, %s257
      %p263 = scmp.eq.s32.totalorder %s25, 0
      %p264 = por %p262, %p263
      %p265 = scmp.ne.s32.totalorder %s254, %s257
      %p266 = scmp.eq.s32.totalorder %s30, 1
      %p267 = por %p265, %p266
      %p268 = scmp.ne.s32.totalorder %s257, %s258
      %p269 = scmp.eq.s32.totalorder %s30, 0
      %p270 = por %p268, %p269
      %p271 = scmp.ne.s32.totalorder %s257, %s258
      %p272 = scmp.eq.s32.totalorder %s31, 1
      %p273 = por %p271, %p272
      %p275 = scmp.ne.s32.totalorder %s258, %s274
      %p276 = scmp.eq.s32.totalorder %s31, 0
      %p277 = por %p275, %p276
      %s278 = ssub.s32 %s25, %s32
      %p279 = scmp.eq.s32.totalorder %s278, 0
      %s281 = sadd.s32 %s280, 1
      %s282 = scalar_select %p279, %s280, %s281
      %p285 = pneg %p279
      %p286 = scmp.eq.s32.totalorder %s25, 1
      %p287 = por %p285, %p286
      %p288 = scmp.ne.s32.totalorder %s280, %s283
      %p289 = scmp.eq.s32.totalorder %s25, 0
      %p290 = por %p288, %p289
      %p291 = scmp.ne.s32.totalorder %s280, %s283
      %p292 = scmp.eq.s32.totalorder %s30, 1
      %p293 = por %p291, %p292
      %p294 = scmp.ne.s32.totalorder %s283, %s284
      %p295 = scmp.eq.s32.totalorder %s30, 0
      %p296 = por %p294, %p295
      %p297 = scmp.ne.s32.totalorder %s283, %s284
      %p298 = scmp.eq.s32.totalorder %s31, 1
      %p299 = por %p297, %p298
      %p301 = scmp.ne.s32.totalorder %s284, %s300
      %p302 = scmp.eq.s32.totalorder %s31, 0
      %p303 = por %p301, %p302
      %s304 = ssub.s32 %s25, %s32
      %p305 = scmp.eq.s32.totalorder %s304, 0
      %s307 = sadd.s32 %s306, 1
      %s308 = scalar_select %p305, %s306, %s307
      %p311 = pneg %p305
      %p312 = scmp.eq.s32.totalorder %s25, 1
      %p313 = por %p311, %p312
      %p314 = scmp.ne.s32.totalorder %s306, %s309
      %p315 = scmp.eq.s32.totalorder %s25, 0
      %p316 = por %p314, %p315
      %p317 = scmp.ne.s32.totalorder %s306, %s309
      %p318 = scmp.eq.s32.totalorder %s30, 1
      %p319 = por %p317, %p318
      %p320 = scmp.ne.s32.totalorder %s309, %s310
      %p321 = scmp.eq.s32.totalorder %s30, 0
      %p322 = por %p320, %p321
      %p323 = scmp.ne.s32.totalorder %s309, %s310
      %p324 = scmp.eq.s32.totalorder %s31, 1
      %p325 = por %p323, %p324
      %p327 = scmp.ne.s32.totalorder %s310, %s326
      %p328 = scmp.eq.s32.totalorder %s31, 0
      %p329 = por %p327, %p328
      %s330 = ssub.s32 %s25, %s32
      %p331 = scmp.eq.s32.totalorder %s330, 0
      %s333 = sadd.s32 %s332, 1
      %s334 = scalar_select %p331, %s332, %s333
      %p337 = pneg %p331
      %p338 = scmp.eq.s32.totalorder %s25, 1
      %p339 = por %p337, %p338
      %p340 = scmp.ne.s32.totalorder %s332, %s335
      %p341 = scmp.eq.s32.totalorder %s25, 0
      %p342 = por %p340, %p341
      %p343 = scmp.ne.s32.totalorder %s332, %s335
      %p344 = scmp.eq.s32.totalorder %s30, 1
      %p345 = por %p343, %p344
      %p346 = scmp.ne.s32.totalorder %s335, %s336
      %p347 = scmp.eq.s32.totalorder %s30, 0
      %p348 = por %p346, %p347
      %p349 = scmp.ne.s32.totalorder %s335, %s336
      %p350 = scmp.eq.s32.totalorder %s31, 1
      %p351 = por %p349, %p350
      %p353 = scmp.ne.s32.totalorder %s336, %s352
      %p354 = scmp.eq.s32.totalorder %s31, 0
      %p355 = por %p353, %p354
      %s356 = ssub.s32 %s25, %s32
      %p357 = scmp.eq.s32.totalorder %s356, 0
      %s359 = sadd.s32 %s358, 1
      %s360 = scalar_select %p357, %s358, %s359
      %p363 = pneg %p357
      %p364 = scmp.eq.s32.totalorder %s25, 1
      %p365 = por %p363, %p364
      %p366 = scmp.ne.s32.totalorder %s358, %s361
      %p367 = scmp.eq.s32.totalorder %s25, 0
      %p368 = por %p366, %p367
      %p369 = scmp.ne.s32.totalorder %s358, %s361
      %p370 = scmp.eq.s32.totalorder %s30, 1
      %p371 = por %p369, %p370
      %p372 = scmp.ne.s32.totalorder %s361, %s362
      %p373 = scmp.eq.s32.totalorder %s30, 0
      %p374 = por %p372, %p373
      %p375 = scmp.ne.s32.totalorder %s361, %s362
      %p376 = scmp.eq.s32.totalorder %s31, 1
      %p377 = por %p375, %p376
      %p379 = scmp.ne.s32.totalorder %s362, %s378
      %p380 = scmp.eq.s32.totalorder %s31, 0
      %p381 = por %p379, %p380
      %s383 = sadd.s32 %s382, 1
      %p386 = scmp.eq.s32.totalorder %s25, 1
      %p387 = scmp.ne.s32.totalorder %s382, %s384
      %p388 = scmp.eq.s32.totalorder %s25, 0
      %p389 = por %p387, %p388
      %p390 = scmp.ne.s32.totalorder %s382, %s384
      %p391 = scmp.eq.s32.totalorder %s30, 1
      %p392 = por %p390, %p391
      %p393 = scmp.ne.s32.totalorder %s384, %s385
      %p394 = scmp.eq.s32.totalorder %s30, 0
      %p395 = por %p393, %p394
      %p396 = scmp.ne.s32.totalorder %s384, %s385
      %p397 = scmp.eq.s32.totalorder %s31, 1
      %p398 = por %p396, %p397
      %p400 = scmp.ne.s32.totalorder %s385, %s399
      %p401 = scmp.eq.s32.totalorder %s31, 0
      %p402 = por %p400, %p401
      %s404 = sadd.s32 %s403, 1
      %p407 = scmp.eq.s32.totalorder %s25, 1
      %p408 = scmp.ne.s32.totalorder %s403, %s405
      %p409 = scmp.eq.s32.totalorder %s25, 0
      %p410 = por %p408, %p409
      %p411 = scmp.ne.s32.totalorder %s403, %s405
      %p412 = scmp.eq.s32.totalorder %s30, 1
      %p413 = por %p411, %p412
      %p414 = scmp.ne.s32.totalorder %s405, %s406
      %p415 = scmp.eq.s32.totalorder %s30, 0
      %p416 = por %p414, %p415
      %p417 = scmp.ne.s32.totalorder %s405, %s406
      %p418 = scmp.eq.s32.totalorder %s31, 1
      %p419 = por %p417, %p418
      %p421 = scmp.ne.s32.totalorder %s406, %s420
      %p422 = scmp.eq.s32.totalorder %s31, 0
      %p423 = por %p421, %p422
      %s425 = sadd.s32 %s424, 1
      %p428 = scmp.eq.s32.totalorder %s25, 1
      %p429 = scmp.ne.s32.totalorder %s424, %s426
      %p430 = scmp.eq.s32.totalorder %s25, 0
      %p431 = por %p429, %p430
      %p432 = scmp.ne.s32.totalorder %s424, %s426
      %p433 = scmp.eq.s32.totalorder %s30, 1
      %p434 = por %p432, %p433
      %p435 = scmp.ne.s32.totalorder %s426, %s427
      %p436 = scmp.eq.s32.totalorder %s30, 0
      %p437 = por %p435, %p436
      %p438 = scmp.ne.s32.totalorder %s426, %s427
      %p439 = scmp.eq.s32.totalorder %s31, 1
      %p440 = por %p438, %p439
      %p442 = scmp.ne.s32.totalorder %s427, %s441
      %p443 = scmp.eq.s32.totalorder %s31, 0
      %p444 = por %p442, %p443
      %s446 = sadd.s32 %s445, 1
      %p449 = scmp.eq.s32.totalorder %s25, 1
      %p450 = scmp.ne.s32.totalorder %s445, %s447
      %p451 = scmp.eq.s32.totalorder %s25, 0
      %p452 = por %p450, %p451
      %p453 = scmp.ne.s32.totalorder %s445, %s447
      %p454 = scmp.eq.s32.totalorder %s30, 1
      %p455 = por %p453, %p454
      %p456 = scmp.ne.s32.totalorder %s447, %s448
      %p457 = scmp.eq.s32.totalorder %s30, 0
      %p458 = por %p456, %p457
      %p459 = scmp.ne.s32.totalorder %s447, %s448
      %p460 = scmp.eq.s32.totalorder %s31, 1
      %p461 = por %p459, %p460
      %p463 = scmp.ne.s32.totalorder %s448, %s462
      %p464 = scmp.eq.s32.totalorder %s31, 0
      %p465 = por %p463, %p464
      %s467 = sadd.s32 %s466, 1
      %p470 = scmp.eq.s32.totalorder %s25, 1
      %p471 = scmp.ne.s32.totalorder %s466, %s468
      %p472 = scmp.eq.s32.totalorder %s25, 0
      %p473 = por %p471, %p472
      %p474 = scmp.ne.s32.totalorder %s466, %s468
      %p475 = scmp.eq.s32.totalorder %s30, 1
      %p476 = por %p474, %p475
      %p477 = scmp.ne.s32.totalorder %s468, %s469
      %p478 = scmp.eq.s32.totalorder %s30, 0
      %p479 = por %p477, %p478
      %p480 = scmp.ne.s32.totalorder %s468, %s469
      %p481 = scmp.eq.s32.totalorder %s31, 1
      %p482 = por %p480, %p481
      %p484 = scmp.ne.s32.totalorder %s469, %s483
      %p485 = scmp.eq.s32.totalorder %s31, 0
      %p486 = por %p484, %p485
      %p487 = scmp.le.s32.totalorder 1, %s25
      %p488 = scmp.lt.s32.totalorder %s25, 3
      %p489 = pnand %p487, %p488
      %p490 = pneg %p489
      // Predicated region
      $region9: #{_lambda_.3} parent=5 // pred_check
        _
      $region10: #{_lambda_.3} parent=5 // pred_check_branch
        %492 = sbr.rel (%p489) target = $region12
      $region11: #{_lambda_.3} parent=5 // pred_region
        %s493 = ssub.s32 %s25, 1
        // Predicated region
        $region13: #{_lambda_.3} parent=11 // pred_check
          %p494 = pneg %p46
        $region14: #{_lambda_.3} parent=11 // pred_check_branch
          %496 = sbr.rel (%p494) target = $region16
        $region15: #{_lambda_.3} parent=11 // pred_region
          _
        $region16: #{_lambda_.3} parent=11 // pred_fallthru
          _
        // Predicated region
        $region17: #{_lambda_.3} parent=11 // pred_check
          %p497 = pneg %p67
        $region18: #{_lambda_.3} parent=11 // pred_check_branch
          %499 = sbr.rel (%p497) target = $region20
        $region19: #{_lambda_.3} parent=11 // pred_region
          _
        $region20: #{_lambda_.3} parent=11 // pred_fallthru
          _
        // Predicated region
        $region21: #{_lambda_.3} parent=11 // pred_check
          %p500 = pneg %p88
        $region22: #{_lambda_.3} parent=11 // pred_check_branch
          %502 = sbr.rel (%p500) target = $region24
        $region23: #{_lambda_.3} parent=11 // pred_region
          _
        $region24: #{_lambda_.3} parent=11 // pred_fallthru
          _
        // Predicated region
        $region25: #{_lambda_.3} parent=11 // pred_check
          %p503 = pneg %p395
        $region26: #{_lambda_.3} parent=11 // pred_check_branch
          %505 = sbr.rel (%p503) target = $region28
        $region27: #{_lambda_.3} parent=11 // pred_region
          _
        $region28: #{_lambda_.3} parent=11 // pred_fallthru
          _
        // Predicated region
        $region29: #{_lambda_.3} parent=11 // pred_check
          %p506 = pneg %p416
        $region30: #{_lambda_.3} parent=11 // pred_check_branch
          %508 = sbr.rel (%p506) target = $region32
        $region31: #{_lambda_.3} parent=11 // pred_region
          _
        $region32: #{_lambda_.3} parent=11 // pred_fallthru
          _
        // Predicated region
        $region33: #{_lambda_.3} parent=11 // pred_check
          %p509 = pneg %p437
        $region34: #{_lambda_.3} parent=11 // pred_check_branch
          %511 = sbr.rel (%p509) target = $region36
        $region35: #{_lambda_.3} parent=11 // pred_region
          _
        $region36: #{_lambda_.3} parent=11 // pred_fallthru
          _
        // Predicated region
        $region37: #{_lambda_.3} parent=11 // pred_check
          %p512 = pneg %p458
        $region38: #{_lambda_.3} parent=11 // pred_check_branch
          %514 = sbr.rel (%p512) target = $region40
        $region39: #{_lambda_.3} parent=11 // pred_region
          _
        $region40: #{_lambda_.3} parent=11 // pred_fallthru
          _
      $region12: #{_lambda_.3} parent=5 // pred_fallthru
        _
      %p515 = scmp.lt.s32.totalorder %s25, 2
      // Predicated region
      $region41: #{_lambda_.3} parent=5 // pred_check
        %p516 = pneg %p515
      $region42: #{_lambda_.3} parent=5 // pred_check_branch
        %518 = sbr.rel (%p516) target = $region44
      $region43: #{_lambda_.3} parent=5 // pred_region
        // Predicated region
        $region45: #{_lambda_.3} parent=43 // pred_check
          %p519 = pneg %p108
        $region46: #{_lambda_.3} parent=43 // pred_check_branch
          %521 = sbr.rel (%p519) target = $region48
        $region47: #{_lambda_.3} parent=43 // pred_region
          %p522 = scmp.lt.s32.totalorder %s25, 1
          %s523 = scalar_select %p522, %s25, 1
          %s524 = scalar_lea.vmem %s3, %s523
        $region48: #{_lambda_.3} parent=43 // pred_fallthru
          _
        // Predicated region
        $region49: #{_lambda_.3} parent=43 // pred_check
          %p525 = pneg %p134
        $region50: #{_lambda_.3} parent=43 // pred_check_branch
          %527 = sbr.rel (%p525) target = $region52
        $region51: #{_lambda_.3} parent=43 // pred_region
          %p528 = scmp.lt.s32.totalorder %s25, 1
          %s529 = scalar_select %p528, %s25, 1
          %s530 = scalar_lea.vmem %s4, %s529
        $region52: #{_lambda_.3} parent=43 // pred_fallthru
          _
        // Predicated region
        $region53: #{_lambda_.3} parent=43 // pred_check
          %p531 = pneg %p160
        $region54: #{_lambda_.3} parent=43 // pred_check_branch
          %533 = sbr.rel (%p531) target = $region56
        $region55: #{_lambda_.3} parent=43 // pred_region
          %p534 = scmp.lt.s32.totalorder %s25, 1
          %s535 = scalar_select %p534, %s25, 1
          %s536 = smul.addr %s535, 24
          %s537 = smul.addr %s536, 8
          %s538 = scalar_lea.vmem %s5, %s537
        $region56: #{_lambda_.3} parent=43 // pred_fallthru
          _
        // Predicated region
        $region57: #{_lambda_.3} parent=43 // pred_check
          %p539 = pneg %p186
        $region58: #{_lambda_.3} parent=43 // pred_check_branch
          %541 = sbr.rel (%p539) target = $region60
        $region59: #{_lambda_.3} parent=43 // pred_region
          %p542 = scmp.lt.s32.totalorder %s25, 1
          %s543 = scalar_select %p542, %s25, 1
          %s544 = smul.addr %s543, 8
          %s545 = smul.addr %s544, 8
          %s546 = scalar_lea.vmem %s6, %s545
        $region60: #{_lambda_.3} parent=43 // pred_fallthru
          _
        // Predicated region
        $region61: #{_lambda_.3} parent=43 // pred_check
          %p547 = pneg %p212
        $region62: #{_lambda_.3} parent=43 // pred_check_branch
          %549 = sbr.rel (%p547) target = $region64
        $region63: #{_lambda_.3} parent=43 // pred_region
          %p550 = scmp.lt.s32.totalorder %s25, 1
          %s551 = scalar_select %p550, %s25, 1
          %s552 = scalar_lea.vmem %s7, %s551
        $region64: #{_lambda_.3} parent=43 // pred_fallthru
          _
        // Predicated region
        $region65: #{_lambda_.3} parent=43 // pred_check
          %p553 = pneg %p238
        $region66: #{_lambda_.3} parent=43 // pred_check_branch
          %555 = sbr.rel (%p553) target = $region68
        $region67: #{_lambda_.3} parent=43 // pred_region
          %p556 = scmp.lt.s32.totalorder %s25, 1
          %s557 = scalar_select %p556, %s25, 1
          %s558 = scalar_lea.vmem %s8, %s557
        $region68: #{_lambda_.3} parent=43 // pred_fallthru
          _
        // Predicated region
        $region69: #{_lambda_.3} parent=43 // pred_check
          %p559 = pneg %p264
        $region70: #{_lambda_.3} parent=43 // pred_check_branch
          %561 = sbr.rel (%p559) target = $region72
        $region71: #{_lambda_.3} parent=43 // pred_region
          %p562 = scmp.lt.s32.totalorder %s25, 1
          %s563 = scalar_select %p562, %s25, 1
          %s564 = scalar_lea.vmem %s9, %s563
        $region72: #{_lambda_.3} parent=43 // pred_fallthru
          _
        // Predicated region
        $region73: #{_lambda_.3} parent=43 // pred_check
          %p565 = pneg %p290
        $region74: #{_lambda_.3} parent=43 // pred_check_branch
          %567 = sbr.rel (%p565) target = $region76
        $region75: #{_lambda_.3} parent=43 // pred_region
          %p568 = scmp.lt.s32.totalorder %s25, 1
          %s569 = scalar_select %p568, %s25, 1
          %s570 = smul.addr %s569, 8
          %s571 = smul.addr %s570, 8
          %s572 = scalar_lea.vmem %s10, %s571
        $region76: #{_lambda_.3} parent=43 // pred_fallthru
          _
        // Predicated region
        $region77: #{_lambda_.3} parent=43 // pred_check
          %p573 = pneg %p316
        $region78: #{_lambda_.3} parent=43 // pred_check_branch
          %575 = sbr.rel (%p573) target = $region80
        $region79: #{_lambda_.3} parent=43 // pred_region
          %p576 = scmp.lt.s32.totalorder %s25, 1
          %s577 = scalar_select %p576, %s25, 1
          %s578 = scalar_lea.vmem %s11, %s577
        $region80: #{_lambda_.3} parent=43 // pred_fallthru
          _
        // Predicated region
        $region81: #{_lambda_.3} parent=43 // pred_check
          %p579 = pneg %p342
        $region82: #{_lambda_.3} parent=43 // pred_check_branch
          %581 = sbr.rel (%p579) target = $region84
        $region83: #{_lambda_.3} parent=43 // pred_region
          %p582 = scmp.lt.s32.totalorder %s25, 1
          %s583 = scalar_select %p582, %s25, 1
          %s584 = smul.addr %s583, 8
          %s585 = smul.addr %s584, 8
          %s586 = scalar_lea.vmem %s12, %s585
        $region84: #{_lambda_.3} parent=43 // pred_fallthru
          _
        // Predicated region
        $region85: #{_lambda_.3} parent=43 // pred_check
          %p587 = pneg %p368
        $region86: #{_lambda_.3} parent=43 // pred_check_branch
          %589 = sbr.rel (%p587) target = $region88
        $region87: #{_lambda_.3} parent=43 // pred_region
          %p590 = scmp.lt.s32.totalorder %s25, 1
          %s591 = scalar_select %p590, %s25, 1
          %s592 = scalar_lea.vmem %s13, %s591
        $region88: #{_lambda_.3} parent=43 // pred_fallthru
          _
      $region44: #{_lambda_.3} parent=5 // pred_fallthru
        _
      %p593 = scmp.le.s32.totalorder 1, %s25
      %p594 = scmp.lt.s32.totalorder %s25, 3
      %p595 = pnand %p593, %p594
      %p596 = pneg %p595
      // Predicated region
      $region89: #{_lambda_.3} parent=5 // pred_check
        _
      $region90: #{_lambda_.3} parent=5 // pred_check_branch
        %598 = sbr.rel (%p595) target = $region92
      $region91: #{_lambda_.3} parent=5 // pred_region
        %s599 = ssub.s32 %s25, 1
        %p600 = pneg %p46
        %p601 = pneg %p43
        %p602 = pneg %p67
        %p603 = pneg %p64
        %p604 = pneg %p88
        %p605 = pneg %p85
        %p606 = scmp.lt.s32.totalorder %s30, 1
        %s607 = scalar_select %p606, %s30, 1
        %s608 = scalar_lea.vmem %s3, %s607
        %p609 = pneg %p114
        %p610 = pneg %p111
        %p611 = scmp.lt.s32.totalorder %s30, 1
        %s612 = scalar_select %p611, %s30, 1
        %s613 = scalar_lea.vmem %s4, %s612
        %p614 = pneg %p140
        %p615 = pneg %p137
        %p616 = scmp.lt.s32.totalorder %s30, 1
        %s617 = scalar_select %p616, %s30, 1
        %s618 = smul.addr %s617, 24
        %s619 = smul.addr %s618, 8
        %s620 = scalar_lea.vmem %s5, %s619
        %p621 = pneg %p166
        %p622 = pneg %p163
        %p623 = scmp.lt.s32.totalorder %s30, 1
        %s624 = scalar_select %p623, %s30, 1
        %s625 = smul.addr %s624, 8
        %s626 = smul.addr %s625, 8
        %s627 = scalar_lea.vmem %s6, %s626
        %p628 = pneg %p192
        %p629 = pneg %p189
        %p630 = scmp.lt.s32.totalorder %s30, 1
        %s631 = scalar_select %p630, %s30, 1
        %s632 = scalar_lea.vmem %s7, %s631
        %p633 = pneg %p218
        %p634 = pneg %p215
        %p635 = scmp.lt.s32.totalorder %s30, 1
        %s636 = scalar_select %p635, %s30, 1
        %s637 = scalar_lea.vmem %s8, %s636
        %p638 = pneg %p244
        %p639 = pneg %p241
        %p640 = scmp.lt.s32.totalorder %s30, 1
        %s641 = scalar_select %p640, %s30, 1
        %s642 = scalar_lea.vmem %s9, %s641
        %p643 = pneg %p270
        %p644 = pneg %p267
        %p645 = scmp.lt.s32.totalorder %s30, 1
        %s646 = scalar_select %p645, %s30, 1
        %s647 = smul.addr %s646, 8
        %s648 = smul.addr %s647, 8
        %s649 = scalar_lea.vmem %s10, %s648
        %p650 = pneg %p296
        %p651 = pneg %p293
        %p652 = scmp.lt.s32.totalorder %s30, 1
        %s653 = scalar_select %p652, %s30, 1
        %s654 = scalar_lea.vmem %s11, %s653
        %p655 = pneg %p322
        %p656 = pneg %p319
        %p657 = scmp.lt.s32.totalorder %s30, 1
        %s658 = scalar_select %p657, %s30, 1
        %s659 = smul.addr %s658, 8
        %s660 = smul.addr %s659, 8
        %s661 = scalar_lea.vmem %s12, %s660
        %p662 = pneg %p348
        %p663 = pneg %p345
        %p664 = scmp.lt.s32.totalorder %s30, 1
        %s665 = scalar_select %p664, %s30, 1
        %s666 = scalar_lea.vmem %s13, %s665
        %p667 = pneg %p374
        %p668 = pneg %p371
        %p669 = pneg %p395
        %p670 = pneg %p392
        %p671 = pneg %p416
        %p672 = pneg %p413
        %p673 = pneg %p437
        %p674 = pneg %p434
        %p675 = pneg %p458
        %p676 = pneg %p455
        %p677 = pneg %p479
        %p678 = pneg %p476
        %p679 = scmp.lt.s32.totalorder %s30, 1
        %s680 = scalar_select %p679, %s30, 1
        %s681 = scalar_lea.vmem %s3, %s680
        %p682 = scmp.lt.s32.totalorder %s30, 1
        %s683 = scalar_select %p682, %s30, 1
        %s684 = scalar_lea.vmem %s4, %s683
        %p685 = scmp.lt.s32.totalorder %s30, 1
        %s686 = scalar_select %p685, %s30, 1
        %s687 = smul.addr %s686, 24
        %s688 = smul.addr %s687, 8
        %s689 = scalar_lea.vmem %s5, %s688
        %p690 = scmp.lt.s32.totalorder %s30, 1
        %s691 = scalar_select %p690, %s30, 1
        %s692 = smul.addr %s691, 8
        %s693 = smul.addr %s692, 8
        %s694 = scalar_lea.vmem %s6, %s693
        %p695 = scmp.lt.s32.totalorder %s30, 1
        %s696 = scalar_select %p695, %s30, 1
        %s697 = scalar_lea.vmem %s7, %s696
        %p698 = scmp.lt.s32.totalorder %s30, 1
        %s699 = scalar_select %p698, %s30, 1
        %s700 = scalar_lea.vmem %s8, %s699
        %p701 = scmp.lt.s32.totalorder %s30, 1
        %s702 = scalar_select %p701, %s30, 1
        %s703 = scalar_lea.vmem %s9, %s702
        %p704 = scmp.lt.s32.totalorder %s30, 1
        %s705 = scalar_select %p704, %s30, 1
        %s706 = smul.addr %s705, 8
        %s707 = smul.addr %s706, 8
        %s708 = scalar_lea.vmem %s10, %s707
        %p709 = scmp.lt.s32.totalorder %s30, 1
        %s710 = scalar_select %p709, %s30, 1
        %s711 = scalar_lea.vmem %s11, %s710
        %p712 = scmp.lt.s32.totalorder %s30, 1
        %s713 = scalar_select %p712, %s30, 1
        %s714 = smul.addr %s713, 8
        %s715 = smul.addr %s714, 8
        %s716 = scalar_lea.vmem %s12, %s715
        %p717 = scmp.lt.s32.totalorder %s30, 1
        %s718 = scalar_select %p717, %s30, 1
        %s719 = scalar_lea.vmem %s13, %s718
        %p721 = scmp.eq.s32.totalorder %s30, 0
        // Predicated region
        $region93: #{_lambda_.3} parent=91 // pred_check
          %p722 = pneg %p721
        $region94: #{_lambda_.3} parent=91 // pred_check_branch
          %724 = sbr.rel (%p722) target = $region96
        $region95: #{_lambda_.3} parent=91 // pred_region
          %v725 = vld [vmem:[%s0] sm:$0xff]
          %v726 = vld [vmem:[%s1] sm:$0xff]
          %v727 = vadd.f32 %v725, %v726
          %vm728 = vcmask 523264
          %729 = vst.msk [vmem:[#allocation2] sm:$0xff] %vm728, %v727
        $region96: #{_lambda_.3} parent=91 // pred_fallthru
          _
        %v730 = vld [vmem:[#allocation2] sm:$0xff]
        %v731 = vld [vmem:[%s681] sm:$0x1]
        %v732 = vld [vmem:[%s684] sm:$0x1]
        %vm733 = vcmask 523264
        %v734 = vsel %vm733, %v730, 0.0
        %735 = vadd.xlane.f32.xlu0 %v734
        %v736 = vpop.xlane.xlu0 %735
        %v737 = vrcp.pop 64.0
        %v738 = vmul.f32 64.0, %v737
        %v739 = vsub.f32 1.0, %v738
        %v740 = vmul.f32 %v737, %v739
        %v741 = vadd.f32 %v737, %v740
        %vm742 = vweird.f32 %v737
        %v743 = vsel %vm742, %v737, %v741
        %v744 = vmul.f32 %v736, %v743
        %v745 = vsub.f32 %v730, %v744
        %v746 = vmul.f32 %v745, %v745
        %v747 = vsel %vm733, %v746, 0.0
        %748 = vadd.xlane.f32.xlu0 %v747
        %v749 = vpop.xlane.xlu0 %748
        %v750 = vmul.f32 %v749, %v743
        %v751 = vadd.f32 %v750, 1e-05
        %v752 = vrsqrt.pop %v751
        %v753 = vmul.f32 %v752, %v751
        %v754 = vmul.f32 %v753, %v752
        %v755 = vmul.f32 0.5, %v754
        %v756 = vsub.f32 1.5, %v755
        %v757 = vmul.f32 %v752, %v756
        %vm758 = vweird.f32 %v751
        %vm759 = vweird.f32 %v752
        %vm760 = vmor %vm758, %vm759
        %v761 = vsel %vm760, %v752, %v757
        %v762 = vmul.f32 %v745, %v761
        %v764 = vperm.slane %v731, 0
        %v766 = vmul.f32 %v762, %v764
        %v768 = vperm.slane %v732, 0
        %v770 = vadd.f32 %v766, %v768
        %v771 = vld [vmem:[%s689] sm:$0xff]
        %v772 = vld [vmem:[%s689 + $0x8] sm:$0xff]
        %v773 = vld [vmem:[%s689 + $0x10] sm:$0xff]
        %v774 = vld [vmem:[%s689 + $0x18] sm:$0xff]
        %v775 = vld [vmem:[%s689 + $0x20] sm:$0xff]
        %v776 = vld [vmem:[%s689 + $0x28] sm:$0xff]
        %v777 = vld [vmem:[%s689 + $0x30] sm:$0xff]
        %v778 = vld [vmem:[%s689 + $0x38] sm:$0xff]
        %v779 = vld [vmem:[%s689 + $0x40] sm:$0xff]
        %v780 = vld [vmem:[%s689 + $0x48] sm:$0xff]
        %v781 = vld [vmem:[%s689 + $0x50] sm:$0xff]
        %v782 = vld [vmem:[%s689 + $0x58] sm:$0xff]
        %v783 = vld [vmem:[%s689 + $0x60] sm:$0xff]
        %v784 = vld [vmem:[%s689 + $0x68] sm:$0xff]
        %v785 = vld [vmem:[%s689 + $0x70] sm:$0xff]
        %v786 = vld [vmem:[%s689 + $0x78] sm:$0xff]
        %v787 = vld [vmem:[%s689 + $0x80] sm:$0xff]
        %v788 = vld [vmem:[%s689 + $0x88] sm:$0xff]
        %v789 = vld [vmem:[%s689 + $0x90] sm:$0xff]
        %v790 = vld [vmem:[%s689 + $0x98] sm:$0xff]
        %v791 = vld [vmem:[%s689 + $0xa0] sm:$0xff]
        %v792 = vld [vmem:[%s689 + $0xa8] sm:$0xff]
        %v793 = vld [vmem:[%s689 + $0xb0] sm:$0xff]
        %v794 = vld [vmem:[%s689 + $0xb8] sm:$0xff]
        %v795 = vpack.c.bf16 %v772, %v771
        %v796 = vpack.c.bf16 %v774, %v773
        %v797 = vpack.c.bf16 %v776, %v775
        %v798 = vpack.c.bf16 %v778, %v777
        %v799 = vpack.c.bf16 %v780, %v779
        %v800 = vpack.c.bf16 %v782, %v781
        %v801 = vpack.c.bf16 %v784, %v783
        %v802 = vpack.c.bf16 %v786, %v785
        %v803 = vpack.c.bf16 %v788, %v787
        %v804 = vpack.c.bf16 %v790, %v789
        %v805 = vpack.c.bf16 %v792, %v791
        %v806 = vpack.c.bf16 %v794, %v793
        %v807 = vpack.c.bf16 %v770, %v770
        %v809 = vsel %vm733, %v795, 0
        %v812 = vsel %vm733, %v796, 0
        %v815 = vsel %vm733, %v797, 0
        %v818 = vsel %vm733, %v798, 0
        %v821 = vsel %vm733, %v799, 0
        %v824 = vsel %vm733, %v800, 0
        %v827 = vsel %vm733, %v801, 0
        %v830 = vsel %vm733, %v802, 0
        %v833 = vsel %vm733, %v803, 0
        %v836 = vsel %vm733, %v804, 0
        %v839 = vsel %vm733, %v805, 0
        %v842 = vsel %vm733, %v806, 0
        %v845 = vsel %vm733, %v807, 0
        %847 = vmatpush.bf16.xpose.msra.mxu0 0
        %848 = vmatpush.bf16.xpose.msra.mxu0 0
        %849 = vmatpush.bf16.xpose.msra.mxu0 0
        %850 = vmatpush.bf16.xpose.msra.mxu0 0
        %851 = vmatpush.bf16.xpose.msra.mxu0 0
        %852 = vmatpush.bf16.xpose.msra.mxu0 0
        %853 = vmatpush.bf16.xpose.msra.mxu0 0
        %854 = vmatpush.bf16.xpose.msra.mxu0 %v845
        %855 = vmatmul.bf16.gmra.mxu0 %v809
        %v856 = vpop.f32.mrf.mxu0
        %v857 = vadd.f32 0.0, %v856
        %v858 = vpop.f32.mrf.mxu0
        %v859 = vadd.f32 0.0, %v858
        %860 = vmatmul.bf16.gmra.mxu0 %v812
        %v861 = vpop.f32.mrf.mxu0
        %v862 = vadd.f32 0.0, %v861
        %v863 = vpop.f32.mrf.mxu0
        %v864 = vadd.f32 0.0, %v863
        %865 = vmatmul.bf16.gmra.mxu0 %v815
        %v866 = vpop.f32.mrf.mxu0
        %v867 = vadd.f32 0.0, %v866
        %v868 = vpop.f32.mrf.mxu0
        %v869 = vadd.f32 0.0, %v868
        %870 = vmatmul.bf16.gmra.mxu0 %v818
        %v871 = vpop.f32.mrf.mxu0
        %v872 = vadd.f32 0.0, %v871
        %v873 = vpop.f32.mrf.mxu0
        %v874 = vadd.f32 0.0, %v873
        %875 = vmatmul.bf16.gmra.mxu0 %v821
        %v876 = vpop.f32.mrf.mxu0
        %v877 = vadd.f32 0.0, %v876
        %v878 = vpop.f32.mrf.mxu0
        %v879 = vadd.f32 0.0, %v878
        %880 = vmatmul.bf16.gmra.mxu0 %v824
        %v881 = vpop.f32.mrf.mxu0
        %v882 = vadd.f32 0.0, %v881
        %v883 = vpop.f32.mrf.mxu0
        %v884 = vadd.f32 0.0, %v883
        %885 = vmatmul.bf16.gmra.mxu0 %v827
        %v886 = vpop.f32.mrf.mxu0
        %v887 = vadd.f32 0.0, %v886
        %v888 = vpop.f32.mrf.mxu0
        %v889 = vadd.f32 0.0, %v888
        %890 = vmatmul.bf16.gmra.mxu0 %v830
        %v891 = vpop.f32.mrf.mxu0
        %v892 = vadd.f32 0.0, %v891
        %v893 = vpop.f32.mrf.mxu0
        %v894 = vadd.f32 0.0, %v893
        %895 = vmatmul.bf16.gmra.mxu0 %v833
        %v896 = vpop.f32.mrf.mxu0
        %v897 = vadd.f32 0.0, %v896
        %v898 = vpop.f32.mrf.mxu0
        %v899 = vadd.f32 0.0, %v898
        %900 = vmatmul.bf16.gmra.mxu0 %v836
        %v901 = vpop.f32.mrf.mxu0
        %v902 = vadd.f32 0.0, %v901
        %v903 = vpop.f32.mrf.mxu0
        %v904 = vadd.f32 0.0, %v903
        %905 = vmatmul.bf16.gmra.mxu0 %v839
        %v906 = vpop.f32.mrf.mxu0
        %v907 = vadd.f32 0.0, %v906
        %v908 = vpop.f32.mrf.mxu0
        %v909 = vadd.f32 0.0, %v908
        %910 = vmatmul.bf16.gmra.mxu0 %v842
        %v911 = vpop.f32.mrf.mxu0
        %v912 = vadd.f32 0.0, %v911
        %v913 = vpop.f32.mrf.mxu0
        %v914 = vadd.f32 0.0, %v913
        %915 = vdwg.mxu0
        %v916 = vpack.c.bf16 %v857, %v857
        %v917 = vpack.c.bf16 %v859, %v859
        %v918 = vpack.c.bf16 %v862, %v862
        %v919 = vpack.c.bf16 %v864, %v864
        %v920 = vpack.c.bf16 %v867, %v867
        %v921 = vpack.c.bf16 %v869, %v869
        %v922 = vpack.c.bf16 %v872, %v872
        %v923 = vpack.c.bf16 %v874, %v874
        %v924 = vpack.c.bf16 %v877, %v877
        %v925 = vpack.c.bf16 %v879, %v879
        %v926 = vpack.c.bf16 %v882, %v882
        %v927 = vpack.c.bf16 %v884, %v884
        %v928 = vpack.c.bf16 %v887, %v887
        %v929 = vpack.c.bf16 %v889, %v889
        %v930 = vpack.c.bf16 %v892, %v892
        %v931 = vpack.c.bf16 %v894, %v894
        %v934 = vunpack.c.l.b16 %v916
        %v935 = vunpack.c.l.b16 %v917
        %v936 = vpack.c.b16 %v935, %v934
        %938 = vxpose.xlu0.c.b16.start [1/8] %v936, 128
        %939 = vxpose.xlu0.c.b16.cont [2/8] 0, 128
        %940 = vxpose.xlu0.c.b16.cont [3/8] 0, 128
        %941 = vxpose.xlu0.c.b16.cont [4/8] 0, 128
        %942 = vxpose.xlu0.c.b16.cont [5/8] 0, 128
        %943 = vxpose.xlu0.c.b16.cont [6/8] 0, 128
        %944 = vxpose.xlu0.c.b16.cont [7/8] 0, 128
        %945 = vxpose.xlu0.c.b16.end [8/8] 0, 128
        %v946 = vpop.trf.xlu0
        %v947 = vpop.trf.xlu0
        %v948 = vpop.trf.xlu0
        %v949 = vpop.trf.xlu0
        %v950 = vpop.trf.xlu0
        %v951 = vpop.trf.xlu0
        %v952 = vpop.trf.xlu0
        %v953 = vpop.trf.xlu0
        %v956 = vunpack.c.l.b16 %v924
        %v957 = vunpack.c.l.b16 %v925
        %v958 = vpack.c.b16 %v957, %v956
        %vm960 = vcmask 130048
        %v962 = vsel %vm960, %v946, 0
        %964 = vmatpush.bf16.msra.mxu0 0
        %965 = vmatpush.bf16.msra.mxu0 0
        %966 = vmatpush.bf16.msra.mxu0 0
        %967 = vmatpush.bf16.msra.mxu0 0
        %968 = vmatpush.bf16.msra.mxu0 0
        %969 = vmatpush.bf16.msra.mxu0 0
        %970 = vmatpush.bf16.msra.mxu0 0
        %971 = vmatpush.bf16.msra.mxu0 %v958
        %972 = vmatmul.bf16.gmra.mxu0 %v962
        %v973 = vpop.f32.mrf.mxu0
        %v974 = vadd.f32 0.0, %v973
        %v975 = vpop.f32.mrf.mxu0
        %976 = vdwg.mxu0
        %v979 = vunpack.c.l.b16 %v918
        %v980 = vunpack.c.l.b16 %v919
        %v981 = vpack.c.b16 %v980, %v979
        %983 = vxpose.xlu0.c.b16.start [1/8] %v981, 128
        %984 = vxpose.xlu0.c.b16.cont [2/8] 0, 128
        %985 = vxpose.xlu0.c.b16.cont [3/8] 0, 128
        %986 = vxpose.xlu0.c.b16.cont [4/8] 0, 128
        %987 = vxpose.xlu0.c.b16.cont [5/8] 0, 128
        %988 = vxpose.xlu0.c.b16.cont [6/8] 0, 128
        %989 = vxpose.xlu0.c.b16.cont [7/8] 0, 128
        %990 = vxpose.xlu0.c.b16.end [8/8] 0, 128
        %v991 = vpop.trf.xlu0
        %v992 = vpop.trf.xlu0
        %v993 = vpop.trf.xlu0
        %v994 = vpop.trf.xlu0
        %v995 = vpop.trf.xlu0
        %v996 = vpop.trf.xlu0
        %v997 = vpop.trf.xlu0
        %v998 = vpop.trf.xlu0
        %v1001 = vunpack.c.l.b16 %v926
        %v1002 = vunpack.c.l.b16 %v927
        %v1003 = vpack.c.b16 %v1002, %v1001
        %v1006 = vsel %vm960, %v991, 0
        %1008 = vmatpush.bf16.msra.mxu0 0
        %1009 = vmatpush.bf16.msra.mxu0 0
        %1010 = vmatpush.bf16.msra.mxu0 0
        %1011 = vmatpush.bf16.msra.mxu0 0
        %1012 = vmatpush.bf16.msra.mxu0 0
        %1013 = vmatpush.bf16.msra.mxu0 0
        %1014 = vmatpush.bf16.msra.mxu0 0
        %1015 = vmatpush.bf16.msra.mxu0 %v1003
        %1016 = vmatmul.bf16.gmra.mxu0 %v1006
        %v1017 = vpop.f32.mrf.mxu0
        %v1018 = vadd.f32 0.0, %v1017
        %v1019 = vpop.f32.mrf.mxu0
        %1020 = vdwg.mxu0
        %v1023 = vunpack.c.l.b16 %v920
        %v1024 = vunpack.c.l.b16 %v921
        %v1025 = vpack.c.b16 %v1024, %v1023
        %1027 = vxpose.xlu0.c.b16.start [1/8] %v1025, 128
        %1028 = vxpose.xlu0.c.b16.cont [2/8] 0, 128
        %1029 = vxpose.xlu0.c.b16.cont [3/8] 0, 128
        %1030 = vxpose.xlu0.c.b16.cont [4/8] 0, 128
        %1031 = vxpose.xlu0.c.b16.cont [5/8] 0, 128
        %1032 = vxpose.xlu0.c.b16.cont [6/8] 0, 128
        %1033 = vxpose.xlu0.c.b16.cont [7/8] 0, 128
        %1034 = vxpose.xlu0.c.b16.end [8/8] 0, 128
        %v1035 = vpop.trf.xlu0
        %v1036 = vpop.trf.xlu0
        %v1037 = vpop.trf.xlu0
        %v1038 = vpop.trf.xlu0
        %v1039 = vpop.trf.xlu0
        %v1040 = vpop.trf.xlu0
        %v1041 = vpop.trf.xlu0
        %v1042 = vpop.trf.xlu0
        %v1045 = vunpack.c.l.b16 %v928
        %v1046 = vunpack.c.l.b16 %v929
        %v1047 = vpack.c.b16 %v1046, %v1045
        %v1050 = vsel %vm960, %v1035, 0
        %1052 = vmatpush.bf16.msra.mxu0 0
        %1053 = vmatpush.bf16.msra.mxu0 0
        %1054 = vmatpush.bf16.msra.mxu0 0
        %1055 = vmatpush.bf16.msra.mxu0 0
        %1056 = vmatpush.bf16.msra.mxu0 0
        %1057 = vmatpush.bf16.msra.mxu0 0
        %1058 = vmatpush.bf16.msra.mxu0 0
        %1059 = vmatpush.bf16.msra.mxu0 %v1047
        %1060 = vmatmul.bf16.gmra.mxu0 %v1050
        %v1061 = vpop.f32.mrf.mxu0
        %v1062 = vadd.f32 0.0, %v1061
        %v1063 = vpop.f32.mrf.mxu0
        %1064 = vdwg.mxu0
        %v1067 = vunpack.c.l.b16 %v922
        %v1068 = vunpack.c.l.b16 %v923
        %v1069 = vpack.c.b16 %v1068, %v1067
        %1071 = vxpose.xlu0.c.b16.start [1/8] %v1069, 128
        %1072 = vxpose.xlu0.c.b16.cont [2/8] 0, 128
        %1073 = vxpose.xlu0.c.b16.cont [3/8] 0, 128
        %1074 = vxpose.xlu0.c.b16.cont [4/8] 0, 128
        %1075 = vxpose.xlu0.c.b16.cont [5/8] 0, 128
        %1076 = vxpose.xlu0.c.b16.cont [6/8] 0, 128
        %1077 = vxpose.xlu0.c.b16.cont [7/8] 0, 128
        %1078 = vxpose.xlu0.c.b16.end [8/8] 0, 128
        %v1079 = vpop.trf.xlu0
        %v1080 = vpop.trf.xlu0
        %v1081 = vpop.trf.xlu0
        %v1082 = vpop.trf.xlu0
        %v1083 = vpop.trf.xlu0
        %v1084 = vpop.trf.xlu0
        %v1085 = vpop.trf.xlu0
        %v1086 = vpop.trf.xlu0
        %v1089 = vunpack.c.l.b16 %v930
        %v1090 = vunpack.c.l.b16 %v931
        %v1091 = vpack.c.b16 %v1090, %v1089
        %v1094 = vsel %vm960, %v1079, 0
        %1096 = vmatpush.bf16.msra.mxu0 0
        %1097 = vmatpush.bf16.msra.mxu0 0
        %1098 = vmatpush.bf16.msra.mxu0 0
        %1099 = vmatpush.bf16.msra.mxu0 0
        %1100 = vmatpush.bf16.msra.mxu0 0
        %1101 = vmatpush.bf16.msra.mxu0 0
        %1102 = vmatpush.bf16.msra.mxu0 0
        %1103 = vmatpush.bf16.msra.mxu0 %v1091
        %1104 = vmatmul.bf16.gmra.mxu0 %v1094
        %v1105 = vpop.f32.mrf.mxu0
        %v1106 = vadd.f32 0.0, %v1105
        %v1107 = vpop.f32.mrf.mxu0
        %1108 = vdwg.mxu0
        %v1109 = vmul.f32 %v974, 0.25
        %v1110 = vmul.f32 %v1018, 0.25
        %v1111 = vmul.f32 %v1062, 0.25
        %v1112 = vmul.f32 %v1106, 0.25
        %vm1113 = vcmask 64512
        %v1114 = vsel %vm1113, %v1109, -inf
        %1115 = vmax.xlane.f32.xlu0 %v1114
        %v1116 = vpop.xlane.xlu0 %1115
        %v1117 = vsel %vm1113, %v1110, -inf
        %1118 = vmax.xlane.f32.xlu0 %v1117
        %v1119 = vpop.xlane.xlu0 %1118
        %v1120 = vsel %vm1113, %v1111, -inf
        %1121 = vmax.xlane.f32.xlu0 %v1120
        %v1122 = vpop.xlane.xlu0 %1121
        %v1123 = vsel %vm1113, %v1112, -inf
        %1124 = vmax.xlane.f32.xlu0 %v1123
        %v1125 = vpop.xlane.xlu0 %1124
        %v1126 = vsub.f32 %v1109, %v1116
        %v1127 = vsub.f32 %v1110, %v1119
        %v1128 = vsub.f32 %v1111, %v1122
        %v1129 = vsub.f32 %v1112, %v1125
        %v1130 = vmul.f32 %v1126, 1.442695
        %v1131 = vpow.pop %v1130
        %v1132 = vmul.f32 %v1127, 1.442695
        %v1133 = vpow.pop %v1132
        %v1134 = vmul.f32 %v1128, 1.442695
        %v1135 = vpow.pop %v1134
        %v1136 = vmul.f32 %v1129, 1.442695
        %v1137 = vpow.pop %v1136
        %v1138 = vsel %vm1113, %v1131, 0.0
        %1139 = vadd.xlane.f32.xlu0 %v1138
        %v1140 = vpop.xlane.xlu0 %1139
        %v1141 = vsel %vm1113, %v1133, 0.0
        %1142 = vadd.xlane.f32.xlu0 %v1141
        %v1143 = vpop.xlane.xlu0 %1142
        %v1144 = vsel %vm1113, %v1135, 0.0
        %1145 = vadd.xlane.f32.xlu0 %v1144
        %v1146 = vpop.xlane.xlu0 %1145
        %v1147 = vsel %vm1113, %v1137, 0.0
        %1148 = vadd.xlane.f32.xlu0 %v1147
        %v1149 = vpop.xlane.xlu0 %1148
        %v1150 = vrcp.pop %v1140
        %v1151 = vmul.f32 %v1140, %v1150
        %v1152 = vsub.f32 1.0, %v1151
        %v1153 = vmul.f32 %v1150, %v1152
        %v1154 = vadd.f32 %v1150, %v1153
        %vm1155 = vweird.f32 %v1140
        %vm1156 = vweird.f32 %v1150
        %vm1157 = vmor %vm1155, %vm1156
        %v1158 = vsel %vm1157, %v1150, %v1154
        %v1159 = vand.u32 2147483647, %v1140
        %vm1160 = vcmp.eq.f32.partialorder %v1159, 8.507059e+37
        %v1161 = vand.u32 %v1140, 2147483648
        %v1162 = vor.u32 1.1754944e-38, %v1161
        %v1163 = vsel %vm1160, %v1162, %v1158
        %v1164 = vrcp.pop %v1143
        %v1165 = vmul.f32 %v1143, %v1164
        %v1166 = vsub.f32 1.0, %v1165
        %v1167 = vmul.f32 %v1164, %v1166
        %v1168 = vadd.f32 %v1164, %v1167
        %vm1169 = vweird.f32 %v1143
        %vm1170 = vweird.f32 %v1164
        %vm1171 = vmor %vm1169, %vm1170
        %v1172 = vsel %vm1171, %v1164, %v1168
        %v1173 = vand.u32 2147483647, %v1143
        %vm1174 = vcmp.eq.f32.partialorder %v1173, 8.507059e+37
        %v1175 = vand.u32 %v1143, 2147483648
        %v1176 = vor.u32 1.1754944e-38, %v1175
        %v1177 = vsel %vm1174, %v1176, %v1172
        %v1178 = vrcp.pop %v1146
        %v1179 = vmul.f32 %v1146, %v1178
        %v1180 = vsub.f32 1.0, %v1179
        %v1181 = vmul.f32 %v1178, %v1180
        %v1182 = vadd.f32 %v1178, %v1181
        %vm1183 = vweird.f32 %v1146
        %vm1184 = vweird.f32 %v1178
        %vm1185 = vmor %vm1183, %vm1184
        %v1186 = vsel %vm1185, %v1178, %v1182
        %v1187 = vand.u32 2147483647, %v1146
        %vm1188 = vcmp.eq.f32.partialorder %v1187, 8.507059e+37
        %v1189 = vand.u32 %v1146, 2147483648
        %v1190 = vor.u32 1.1754944e-38, %v1189
        %v1191 = vsel %vm1188, %v1190, %v1186
        %v1192 = vrcp.pop %v1149
        %v1193 = vmul.f32 %v1149, %v1192
        %v1194 = vsub.f32 1.0, %v1193
        %v1195 = vmul.f32 %v1192, %v1194
        %v1196 = vadd.f32 %v1192, %v1195
        %vm1197 = vweird.f32 %v1149
        %vm1198 = vweird.f32 %v1192
        %vm1199 = vmor %vm1197, %vm1198
        %v1200 = vsel %vm1199, %v1192, %v1196
        %v1201 = vand.u32 2147483647, %v1149
        %vm1202 = vcmp.eq.f32.partialorder %v1201, 8.507059e+37
        %v1203 = vand.u32 %v1149, 2147483648
        %v1204 = vor.u32 1.1754944e-38, %v1203
        %v1205 = vsel %vm1202, %v1204, %v1200
        %v1206 = vmul.f32 %v1131, %v1163
        %v1207 = vmul.f32 %v1133, %v1177
        %v1208 = vmul.f32 %v1135, %v1191
        %v1209 = vmul.f32 %v1137, %v1205
        %v1210 = vpack.c.bf16 %v897, %v897
        %v1211 = vpack.c.bf16 %v899, %v899
        %v1212 = vpack.c.bf16 %v902, %v902
        %v1213 = vpack.c.bf16 %v904, %v904
        %v1214 = vpack.c.bf16 %v907, %v907
        %v1215 = vpack.c.bf16 %v909, %v909
        %v1216 = vpack.c.bf16 %v912, %v912
        %v1217 = vpack.c.bf16 %v914, %v914
        %v1218 = vpack.c.bf16 %v1206, %v1206
        %v1219 = vpack.c.bf16 %v1207, %v1207
        %v1220 = vpack.c.bf16 %v1208, %v1208
        %v1221 = vpack.c.bf16 %v1209, %v1209
        %v1224 = vunpack.c.l.b16 %v1210
        %v1225 = vunpack.c.l.b16 %v1211
        %v1226 = vpack.c.b16 %v1225, %v1224
        %v1228 = vsel %vm1113, %v1226, 0
        %v1231 = vsel %vm1113, %v1218, 0
        %1233 = vmatpush.bf16.xpose.msra.mxu0 0
        %1234 = vmatpush.bf16.xpose.msra.mxu0 0
        %1235 = vmatpush.bf16.xpose.msra.mxu0 0
        %1236 = vmatpush.bf16.xpose.msra.mxu0 0
        %1237 = vmatpush.bf16.xpose.msra.mxu0 0
        %1238 = vmatpush.bf16.xpose.msra.mxu0 0
        %1239 = vmatpush.bf16.xpose.msra.mxu0 0
        %1240 = vmatpush.bf16.xpose.msra.mxu0 %v1231
        %1241 = vmatmul.bf16.gmra.mxu0 %v1228
        %v1242 = vpop.f32.mrf.mxu0
        %v1243 = vadd.f32 0.0, %v1242
        %v1244 = vpop.f32.mrf.mxu0
        %v1245 = vadd.f32 0.0, %v1244
        %1246 = vdwg.mxu0
        %v1249 = vunpack.c.l.b16 %v1212
        %v1250 = vunpack.c.l.b16 %v1213
        %v1251 = vpack.c.b16 %v1250, %v1249
        %v1253 = vsel %vm1113, %v1251, 0
        %v1256 = vsel %vm1113, %v1219, 0
        %1258 = vmatpush.bf16.xpose.msra.mxu0 0
        %1259 = vmatpush.bf16.xpose.msra.mxu0 0
        %1260 = vmatpush.bf16.xpose.msra.mxu0 0
        %1261 = vmatpush.bf16.xpose.msra.mxu0 0
        %1262 = vmatpush.bf16.xpose.msra.mxu0 0
        %1263 = vmatpush.bf16.xpose.msra.mxu0 0
        %1264 = vmatpush.bf16.xpose.msra.mxu0 0
        %1265 = vmatpush.bf16.xpose.msra.mxu0 %v1256
        %1266 = vmatmul.bf16.gmra.mxu0 %v1253
        %v1267 = vpop.f32.mrf.mxu0
        %v1268 = vadd.f32 0.0, %v1267
        %v1269 = vpop.f32.mrf.mxu0
        %v1270 = vadd.f32 0.0, %v1269
        %1271 = vdwg.mxu0
        %v1274 = vunpack.c.l.b16 %v1214
        %v1275 = vunpack.c.l.b16 %v1215
        %v1276 = vpack.c.b16 %v1275, %v1274
        %v1278 = vsel %vm1113, %v1276, 0
        %v1281 = vsel %vm1113, %v1220, 0
        %1283 = vmatpush.bf16.xpose.msra.mxu0 0
        %1284 = vmatpush.bf16.xpose.msra.mxu0 0
        %1285 = vmatpush.bf16.xpose.msra.mxu0 0
        %1286 = vmatpush.bf16.xpose.msra.mxu0 0
        %1287 = vmatpush.bf16.xpose.msra.mxu0 0
        %1288 = vmatpush.bf16.xpose.msra.mxu0 0
        %1289 = vmatpush.bf16.xpose.msra.mxu0 0
        %1290 = vmatpush.bf16.xpose.msra.mxu0 %v1281
        %1291 = vmatmul.bf16.gmra.mxu0 %v1278
        %v1292 = vpop.f32.mrf.mxu0
        %v1293 = vadd.f32 0.0, %v1292
        %v1294 = vpop.f32.mrf.mxu0
        %v1295 = vadd.f32 0.0, %v1294
        %1296 = vdwg.mxu0
        %v1299 = vunpack.c.l.b16 %v1216
        %v1300 = vunpack.c.l.b16 %v1217
        %v1301 = vpack.c.b16 %v1300, %v1299
        %v1303 = vsel %vm1113, %v1301, 0
        %v1306 = vsel %vm1113, %v1221, 0
        %1308 = vmatpush.bf16.xpose.msra.mxu0 0
        %1309 = vmatpush.bf16.xpose.msra.mxu0 0
        %1310 = vmatpush.bf16.xpose.msra.mxu0 0
        %1311 = vmatpush.bf16.xpose.msra.mxu0 0
        %1312 = vmatpush.bf16.xpose.msra.mxu0 0
        %1313 = vmatpush.bf16.xpose.msra.mxu0 0
        %1314 = vmatpush.bf16.xpose.msra.mxu0 0
        %1315 = vmatpush.bf16.xpose.msra.mxu0 %v1306
        %1316 = vmatmul.bf16.gmra.mxu0 %v1303
        %v1317 = vpop.f32.mrf.mxu0
        %v1318 = vadd.f32 0.0, %v1317
        %v1319 = vpop.f32.mrf.mxu0
        %v1320 = vadd.f32 0.0, %v1319
        %1321 = vdwg.mxu0
        %v1322 = vld [vmem:[%s694] sm:$0xff]
        %v1323 = vld [vmem:[%s694 + $0x8] sm:$0xff]
        %v1324 = vld [vmem:[%s694 + $0x10] sm:$0xff]
        %v1325 = vld [vmem:[%s694 + $0x18] sm:$0xff]
        %v1326 = vld [vmem:[%s694 + $0x20] sm:$0xff]
        %v1327 = vld [vmem:[%s694 + $0x28] sm:$0xff]
        %v1328 = vld [vmem:[%s694 + $0x30] sm:$0xff]
        %v1329 = vld [vmem:[%s694 + $0x38] sm:$0xff]
        %v1330 = vpack.c.bf16 %v1245, %v1243
        %v1331 = vpack.c.bf16 %v1270, %v1268
        %v1332 = vpack.c.bf16 %v1295, %v1293
        %v1333 = vpack.c.bf16 %v1320, %v1318
        %v1334 = vpack.c.bf16 %v1323, %v1322
        %v1335 = vpack.c.bf16 %v1325, %v1324
        %v1336 = vpack.c.bf16 %v1327, %v1326
        %v1337 = vpack.c.bf16 %v1329, %v1328
        %1338 = vxpose.xlu0.c.b16.start [1/8] %v1330, 128
        %1339 = vxpose.xlu0.c.b16.cont [2/8] %v1331, 128
        %1340 = vxpose.xlu0.c.b16.cont [3/8] %v1332, 128
        %1341 = vxpose.xlu0.c.b16.cont [4/8] %v1333, 128
        %1342 = vxpose.xlu0.c.b16.cont [5/8] 0, 128
        %1343 = vxpose.xlu0.c.b16.cont [6/8] 0, 128
        %1344 = vxpose.xlu0.c.b16.cont [7/8] 0, 128
        %1345 = vxpose.xlu0.c.b16.end [8/8] 0, 128
        %v1346 = vpop.trf.xlu0
        %v1347 = vpop.trf.xlu0
        %v1348 = vpop.trf.xlu0
        %v1349 = vpop.trf.xlu0
        %v1350 = vpop.trf.xlu0
        %v1351 = vpop.trf.xlu0
        %v1352 = vpop.trf.xlu0
        %v1353 = vpop.trf.xlu0
        %v1355 = vsel %vm733, %v1346, 0
        %1357 = vmatpush.bf16.msra.mxu0 0
        %1358 = vmatpush.bf16.msra.mxu0 0
        %1359 = vmatpush.bf16.msra.mxu0 0
        %1360 = vmatpush.bf16.msra.mxu0 0
        %1361 = vmatpush.bf16.msra.mxu0 %v1337
        %1362 = vmatpush.bf16.msra.mxu0 %v1336
        %1363 = vmatpush.bf16.msra.mxu0 %v1335
        %1364 = vmatpush.bf16.msra.mxu0 %v1334
        %1365 = vmatmul.bf16.gmra.mxu0 %v1355
        %v1366 = vpop.f32.mrf.mxu0
        %v1367 = vadd.f32 0.0, %v1366
        %v1368 = vpop.f32.mrf.mxu0
        %1369 = vdwg.mxu0
        %v1370 = vadd.f32 %v730, %v1367
        %v1371 = vld [vmem:[%s697] sm:$0x1]
        %v1373 = vperm.slane %v1371, 0
        %v1375 = vadd.f32 %v1370, %v1373
        %v1376 = vld [vmem:[%s700] sm:$0x1]
        %v1377 = vld [vmem:[%s703] sm:$0x1]
        %v1378 = vsel %vm733, %v1375, 0.0
        %1379 = vadd.xlane.f32.xlu0 %v1378
        %v1380 = vpop.xlane.xlu0 %1379
        %v1381 = vmul.f32 %v1380, %v743
        %v1382 = vsub.f32 %v1375, %v1381
        %v1383 = vmul.f32 %v1382, %v1382
        %v1384 = vsel %vm733, %v1383, 0.0
        %1385 = vadd.xlane.f32.xlu0 %v1384
        %v1386 = vpop.xlane.xlu0 %1385
        %v1387 = vmul.f32 %v1386, %v743
        %v1388 = vadd.f32 %v1387, 1e-05
        %v1389 = vrsqrt.pop %v1388
        %v1390 = vmul.f32 %v1389, %v1388
        %v1391 = vmul.f32 %v1390, %v1389
        %v1392 = vmul.f32 0.5, %v1391
        %v1393 = vsub.f32 1.5, %v1392
        %v1394 = vmul.f32 %v1389, %v1393
        %vm1395 = vweird.f32 %v1388
        %vm1396 = vweird.f32 %v1389
        %vm1397 = vmor %vm1395, %vm1396
        %v1398 = vsel %vm1397, %v1389, %v1394
        %v1399 = vmul.f32 %v1382, %v1398
        %v1401 = vperm.slane %v1376, 0
        %v1403 = vmul.f32 %v1399, %v1401
        %v1405 = vperm.slane %v1377, 0
        %v1407 = vadd.f32 %v1403, %v1405
        %v1408 = vld [vmem:[%s708] sm:$0xff]
        %v1409 = vld [vmem:[%s708 + $0x8] sm:$0xff]
        %v1410 = vld [vmem:[%s708 + $0x10] sm:$0xff]
        %v1411 = vld [vmem:[%s708 + $0x18] sm:$0xff]
        %v1412 = vld [vmem:[%s708 + $0x20] sm:$0xff]
        %v1413 = vld [vmem:[%s708 + $0x28] sm:$0xff]
        %v1414 = vld [vmem:[%s708 + $0x30] sm:$0xff]
        %v1415 = vld [vmem:[%s708 + $0x38] sm:$0xff]
        %v1416 = vpack.c.bf16 %v1407, %v1407
        %v1417 = vpack.c.bf16 %v1409, %v1408
        %v1418 = vpack.c.bf16 %v1411, %v1410
        %v1419 = vpack.c.bf16 %v1413, %v1412
        %v1420 = vpack.c.bf16 %v1415, %v1414
        %v1421 = vld [vmem:[%s711] sm:$0x1]
        %v1423 = vperm.slane %v1421, 0
        %v1426 = vsel %vm733, %v1416, 0
        %1428 = vmatpush.bf16.msra.mxu0 0
        %1429 = vmatpush.bf16.msra.mxu0 0
        %1430 = vmatpush.bf16.msra.mxu0 0
        %1431 = vmatpush.bf16.msra.mxu0 0
        %1432 = vmatpush.bf16.msra.mxu0 %v1420
        %1433 = vmatpush.bf16.msra.mxu0 %v1419
        %1434 = vmatpush.bf16.msra.mxu0 %v1418
        %1435 = vmatpush.bf16.msra.mxu0 %v1417
        %1436 = vmatmul.bf16.gmra.mxu0 %v1426
        %v1437 = vpop.f32.mrf.mxu0
        %v1438 = vadd.f32 %v1423, %v1437
        %v1439 = vpop.f32.mrf.mxu0
        %1440 = vdwg.mxu0
        %v1441 = vmul.f32 %v1438, 0.5
        %v1442 = vmul.f32 %v1438, 0.044715
        %v1443 = vmul.f32 %v1442, %v1438
        %v1444 = vmul.f32 %v1443, %v1438
        %v1445 = vadd.f32 %v1438, %v1444
        %v1446 = vmul.f32 %v1445, 0.7978846
        %v1447 = vtanh.pop %v1446
        %v1448 = vadd.f32 %v1447, 1.0
        %v1449 = vmul.f32 %v1441, %v1448
        %v1450 = vld [vmem:[%s716] sm:$0xff]
        %v1451 = vld [vmem:[%s716 + $0x8] sm:$0xff]
        %v1452 = vld [vmem:[%s716 + $0x10] sm:$0xff]
        %v1453 = vld [vmem:[%s716 + $0x18] sm:$0xff]
        %v1454 = vld [vmem:[%s716 + $0x20] sm:$0xff]
        %v1455 = vld [vmem:[%s716 + $0x28] sm:$0xff]
        %v1456 = vld [vmem:[%s716 + $0x30] sm:$0xff]
        %v1457 = vld [vmem:[%s716 + $0x38] sm:$0xff]
        %v1458 = vpack.c.bf16 %v1449, %v1449
        %v1459 = vpack.c.bf16 %v1451, %v1450
        %v1460 = vpack.c.bf16 %v1453, %v1452
        %v1461 = vpack.c.bf16 %v1455, %v1454
        %v1462 = vpack.c.bf16 %v1457, %v1456
        %v1464 = vsel %vm733, %v1458, 0
        %1466 = vmatpush.bf16.msra.mxu0 0
        %1467 = vmatpush.bf16.msra.mxu0 0
        %1468 = vmatpush.bf16.msra.mxu0 0
        %1469 = vmatpush.bf16.msra.mxu0 0
        %1470 = vmatpush.bf16.msra.mxu0 %v1462
        %1471 = vmatpush.bf16.msra.mxu0 %v1461
        %1472 = vmatpush.bf16.msra.mxu0 %v1460
        %1473 = vmatpush.bf16.msra.mxu0 %v1459
        %1474 = vmatmul.bf16.gmra.mxu0 %v1464
        %v1475 = vpop.f32.mrf.mxu0
        %v1476 = vadd.f32 0.0, %v1475
        %v1477 = vpop.f32.mrf.mxu0
        %1478 = vdwg.mxu0
        %v1479 = vadd.f32 %v1375, %v1476
        %v1480 = vld [vmem:[%s719] sm:$0x1]
        %v1482 = vperm.slane %v1480, 0
        %v1484 = vadd.f32 %v1479, %v1482
        %1485 = vst.msk [vmem:[#allocation2] sm:$0xff] %vm733, %v1484
        %p1486 = scmp.eq.s32.totalorder %s30, 1
        // Predicated region
        $region97: #{_lambda_.3} parent=91 // pred_check
          %p1487 = pneg %p1486
        $region98: #{_lambda_.3} parent=91 // pred_check_branch
          %1489 = sbr.rel (%p1487) target = $region100
        $region99: #{_lambda_.3} parent=91 // pred_region
          %v1490 = vld [vmem:[#allocation2] sm:$0xff]
          %v1491 = vld [vmem:[%s2] sm:$0xff]
          %v1492 = vsel %vm1113, %v1491, 0.0
          %1493 = vadd.xlane.f32.xlu0 %v1492
          %v1494 = vpop.xlane.xlu0 %1493
          %v1495 = vmax.f32 %v1494, 1e-12
          %v1496 = vrcp.pop %v1495
          %v1497 = vmul.f32 %v1495, %v1496
          %v1498 = vsub.f32 1.0, %v1497
          %v1499 = vmul.f32 %v1496, %v1498
          %v1500 = vadd.f32 %v1496, %v1499
          %vm1501 = vweird.f32 %v1495
          %vm1502 = vweird.f32 %v1496
          %vm1503 = vmor %vm1501, %vm1502
          %v1504 = vsel %vm1503, %v1496, %v1500
          %v1505 = vand.u32 2147483647, %v1495
          %vm1506 = vcmp.eq.f32.partialorder %v1505, 8.507059e+37
          %v1507 = vand.u32 %v1495, 2147483648
          %v1508 = vor.u32 1.1754944e-38, %v1507
          %v1509 = vsel %vm1506, %v1508, %v1504
          %v1510 = vmul.f32 %v1491, %v1509
          %v1511 = vpack.c.bf16 %v1510, %v1510
          %v1512 = vpack.c.bf16 %v1490, %v1490
          %v1514 = vsel %vm1113, %v1511, 0
          %vm1516 = vcmask 1043456
          %v1518 = vsel %vm1516, %v1512, 0
          %1520 = vmatpush.bf16.msra.mxu0 0
          %1521 = vmatpush.bf16.msra.mxu0 0
          %1522 = vmatpush.bf16.msra.mxu0 0
          %1523 = vmatpush.bf16.msra.mxu0 0
          %1524 = vmatpush.bf16.msra.mxu0 0
          %1525 = vmatpush.bf16.msra.mxu0 0
          %1526 = vmatpush.bf16.msra.mxu0 0
          %1527 = vmatpush.bf16.msra.mxu0 %v1518
          %1528 = vmatmul.bf16.gmra.mxu0 %v1514
          %v1529 = vpop.f32.mrf.mxu0
          %v1530 = vadd.f32 0.0, %v1529
          %v1531 = vpop.f32.mrf.mxu0
          %1532 = vdwg.mxu0
          %v1533 = vld [vmem:[%s14] sm:$0xff]
          %v1534 = vld [vmem:[%s14 + $0x8] sm:$0xff]
          %v1535 = vld [vmem:[%s14 + $0x10] sm:$0xff]
          %v1536 = vld [vmem:[%s14 + $0x18] sm:$0xff]
          %v1537 = vld [vmem:[%s14 + $0x20] sm:$0xff]
          %v1538 = vld [vmem:[%s14 + $0x28] sm:$0xff]
          %v1539 = vld [vmem:[%s14 + $0x30] sm:$0xff]
          %v1540 = vld [vmem:[%s14 + $0x38] sm:$0xff]
          %v1541 = vpack.c.bf16 %v1530, %v1530
          %v1542 = vpack.c.bf16 %v1534, %v1533
          %v1543 = vpack.c.bf16 %v1536, %v1535
          %v1544 = vpack.c.bf16 %v1538, %v1537
          %v1545 = vpack.c.bf16 %v1540, %v1539
          %v1547 = vsel %vm733, %v1541, 0
          %1549 = vmatpush.bf16.msra.mxu0 0
          %1550 = vmatpush.bf16.msra.mxu0 0
          %1551 = vmatpush.bf16.msra.mxu0 0
          %1552 = vmatpush.bf16.msra.mxu0 0
          %1553 = vmatpush.bf16.msra.mxu0 %v1545
          %1554 = vmatpush.bf16.msra.mxu0 %v1544
          %1555 = vmatpush.bf16.msra.mxu0 %v1543
          %1556 = vmatpush.bf16.msra.mxu0 %v1542
          %1557 = vmatmul.bf16.gmra.mxu0 %v1547
          %v1558 = vpop.f32.mrf.mxu0
          %v1559 = vadd.f32 0.0, %v1558
          %v1560 = vpop.f32.mrf.mxu0
          %1561 = vdwg.mxu0
          %v1562 = vmax.f32 %v1559, 0.0
          %v1563 = vmul.f32 %v1562, %v1562
          %v1564 = vsel %vm733, %v1563, 0.0
          %1565 = vadd.xlane.f32.xlu0 %v1564
          %v1566 = vpop.xlane.xlu0 %1565
          %v1567 = vmax.f32 %v1566, 1e-24
          %v1568 = vrsqrt.pop %v1567
          %v1569 = vmul.f32 %v1568, %v1567
          %v1570 = vmul.f32 %v1569, %v1568
          %v1571 = vmul.f32 0.5, %v1570
          %v1572 = vsub.f32 1.5, %v1571
          %v1573 = vmul.f32 %v1568, %v1572
          %vm1574 = vweird.f32 %v1567
          %vm1575 = vweird.f32 %v1568
          %vm1576 = vmor %vm1574, %vm1575
          %v1577 = vsel %vm1576, %v1568, %v1573
          %v1578 = vmul.f32 %v1562, %v1577
          %v1579 = vpack.c.bf16 %v1578, %v1578
          %v1581 = vsel %vm1516, %v1579, 0
          %1583 = vmatpush.bf16.msra.mxu0 0
          %1584 = vmatpush.bf16.msra.mxu0 0
          %1585 = vmatpush.bf16.msra.mxu0 0
          %1586 = vmatpush.bf16.msra.mxu0 0
          %1587 = vmatpush.bf16.msra.mxu0 0
          %1588 = vmatpush.bf16.msra.mxu0 0
          %1589 = vmatpush.bf16.msra.mxu0 0
          %1590 = vmatpush.bf16.msra.mxu0 %v1581
          %1591 = vmatmul.bf16.gmra.mxu0 %v1514
          %v1592 = vpop.f32.mrf.mxu0
          %v1593 = vadd.f32 0.0, %v1592
          %v1594 = vpop.f32.mrf.mxu0
          %1595 = vdwg.mxu0
          %s1596 = scalar_lea.vmem %s14, 64
          %v1597 = vld [vmem:[%s1596] sm:$0xff]
          %v1598 = vld [vmem:[%s1596 + $0x8] sm:$0xff]
          %v1599 = vld [vmem:[%s1596 + $0x10] sm:$0xff]
          %v1600 = vld [vmem:[%s1596 + $0x18] sm:$0xff]
          %v1601 = vld [vmem:[%s1596 + $0x20] sm:$0xff]
          %v1602 = vld [vmem:[%s1596 + $0x28] sm:$0xff]
          %v1603 = vld [vmem:[%s1596 + $0x30] sm:$0xff]
          %v1604 = vld [vmem:[%s1596 + $0x38] sm:$0xff]
          %v1605 = vpack.c.bf16 %v1593, %v1593
          %v1606 = vpack.c.bf16 %v1598, %v1597
          %v1607 = vpack.c.bf16 %v1600, %v1599
          %v1608 = vpack.c.bf16 %v1602, %v1601
          %v1609 = vpack.c.bf16 %v1604, %v1603
          %v1611 = vsel %vm733, %v1605, 0
          %1613 = vmatpush.bf16.msra.mxu0 0
          %1614 = vmatpush.bf16.msra.mxu0 0
          %1615 = vmatpush.bf16.msra.mxu0 0
          %1616 = vmatpush.bf16.msra.mxu0 0
          %1617 = vmatpush.bf16.msra.mxu0 %v1609
          %1618 = vmatpush.bf16.msra.mxu0 %v1608
          %1619 = vmatpush.bf16.msra.mxu0 %v1607
          %1620 = vmatpush.bf16.msra.mxu0 %v1606
          %1621 = vmatmul.bf16.gmra.mxu0 %v1611
          %v1622 = vpop.f32.mrf.mxu0
          %v1623 = vadd.f32 0.0, %v1622
          %v1624 = vpop.f32.mrf.mxu0
          %1625 = vdwg.mxu0
          %v1626 = vmax.f32 %v1623, 0.0
          %v1627 = vmul.f32 %v1626, %v1626
          %v1628 = vsel %vm733, %v1627, 0.0
          %1629 = vadd.xlane.f32.xlu0 %v1628
          %v1630 = vpop.xlane.xlu0 %1629
          %v1631 = vmax.f32 %v1630, 1e-24
          %v1632 = vrsqrt.pop %v1631
          %v1633 = vmul.f32 %v1632, %v1631
          %v1634 = vmul.f32 %v1633, %v1632
          %v1635 = vmul.f32 0.5, %v1634
          %v1636 = vsub.f32 1.5, %v1635
          %v1637 = vmul.f32 %v1632, %v1636
          %vm1638 = vweird.f32 %v1631
          %vm1639 = vweird.f32 %v1632
          %vm1640 = vmor %vm1638, %vm1639
          %v1641 = vsel %vm1640, %v1632, %v1637
          %v1642 = vmul.f32 %v1626, %v1641
          %v1643 = vld [vmem:[%s15] sm:$0xff]
          %v1644 = vld [vmem:[%s15 + $0x8] sm:$0xff]
          %v1645 = vld [vmem:[%s15 + $0x10] sm:$0xff]
          %v1646 = vld [vmem:[%s15 + $0x18] sm:$0xff]
          %v1647 = vld [vmem:[%s15 + $0x20] sm:$0xff]
          %v1648 = vld [vmem:[%s15 + $0x28] sm:$0xff]
          %v1649 = vld [vmem:[%s15 + $0x30] sm:$0xff]
          %v1650 = vld [vmem:[%s15 + $0x38] sm:$0xff]
          %v1651 = vld [vmem:[%s15 + $0x40] sm:$0xff]
          %v1652 = vld [vmem:[%s15 + $0x48] sm:$0xff]
          %v1653 = vld [vmem:[%s15 + $0x50] sm:$0xff]
          %v1654 = vld [vmem:[%s15 + $0x58] sm:$0xff]
          %v1655 = vld [vmem:[%s15 + $0x60] sm:$0xff]
          %v1656 = vld [vmem:[%s15 + $0x68] sm:$0xff]
          %v1657 = vld [vmem:[%s15 + $0x70] sm:$0xff]
          %v1658 = vld [vmem:[%s15 + $0x78] sm:$0xff]
          %v1659 = vpack.c.bf16 %v1645, %v1643
          %v1660 = vpack.c.bf16 %v1646, %v1644
          %v1661 = vpack.c.bf16 %v1649, %v1647
          %v1662 = vpack.c.bf16 %v1650, %v1648
          %v1663 = vpack.c.bf16 %v1653, %v1651
          %v1664 = vpack.c.bf16 %v1654, %v1652
          %v1665 = vpack.c.bf16 %v1657, %v1655
          %v1666 = vpack.c.bf16 %v1658, %v1656
          %v1667 = vld [vmem:[%s16] sm:$0xff]
          %v1668 = vld [vmem:[%s16 + $0x8] sm:$0xff]
          %v1669 = vld [vmem:[%s16 + $0x10] sm:$0xff]
          %v1670 = vld [vmem:[%s16 + $0x18] sm:$0xff]
          %v1671 = vld [vmem:[%s16 + $0x20] sm:$0xff]
          %v1672 = vld [vmem:[%s16 + $0x28] sm:$0xff]
          %v1673 = vld [vmem:[%s16 + $0x30] sm:$0xff]
          %v1674 = vld [vmem:[%s16 + $0x38] sm:$0xff]
          %v1675 = vld [vmem:[%s16 + $0x40] sm:$0xff]
          %v1676 = vld [vmem:[%s16 + $0x48] sm:$0xff]
          %v1677 = vld [vmem:[%s16 + $0x50] sm:$0xff]
          %v1678 = vld [vmem:[%s16 + $0x58] sm:$0xff]
          %v1679 = vld [vmem:[%s16 + $0x60] sm:$0xff]
          %v1680 = vld [vmem:[%s16 + $0x68] sm:$0xff]
          %v1681 = vld [vmem:[%s16 + $0x70] sm:$0xff]
          %v1682 = vld [vmem:[%s16 + $0x78] sm:$0xff]
          %v1683 = vpack.c.bf16 %v1669, %v1667
          %v1684 = vpack.c.bf16 %v1670, %v1668
          %v1685 = vpack.c.bf16 %v1673, %v1671
          %v1686 = vpack.c.bf16 %v1674, %v1672
          %v1687 = vpack.c.bf16 %v1677, %v1675
          %v1688 = vpack.c.bf16 %v1678, %v1676
          %v1689 = vpack.c.bf16 %v1681, %v1679
          %v1690 = vpack.c.bf16 %v1682, %v1680
          %v1692 = vsel %vm733, 0, 0
          %1694 = vmatpush.bf16.msra.mxu0 0
          %1695 = vmatpush.bf16.msra.mxu0 0
          %1696 = vmatpush.bf16.msra.mxu0 0
          %1697 = vmatpush.bf16.msra.mxu0 0
          %1698 = vmatpush.bf16.msra.mxu0 %v1689
          %1699 = vmatpush.bf16.msra.mxu0 %v1687
          %1700 = vmatpush.bf16.msra.mxu0 %v1685
          %1701 = vmatpush.bf16.msra.mxu0 %v1683
          %1702 = vmatmul.bf16.gmra.mxu0 %v1692
          %v1703 = vpop.f32.mrf.mxu0
          %v1704 = vadd.f32 0.0, %v1703
          %v1705 = vpop.f32.mrf.mxu0
          %1706 = vdwg.mxu0
          %1707 = vmatpush.bf16.msra.mxu0 0
          %1708 = vmatpush.bf16.msra.mxu0 0
          %1709 = vmatpush.bf16.msra.mxu0 0
          %1710 = vmatpush.bf16.msra.mxu0 0
          %1711 = vmatpush.bf16.msra.mxu0 %v1690
          %1712 = vmatpush.bf16.msra.mxu0 %v1688
          %1713 = vmatpush.bf16.msra.mxu0 %v1686
          %1714 = vmatpush.bf16.msra.mxu0 %v1684
          %1715 = vmatmul.bf16.gmra.mxu0 %v1692
          %v1716 = vpop.f32.mrf.mxu0
          %v1717 = vadd.f32 0.0, %v1716
          %v1718 = vpop.f32.mrf.mxu0
          %1719 = vdwg.mxu0
          %v1720 = vsel %vm733, %v1579, 0
          %1722 = vmatpush.bf16.msra.mxu0 0
          %1723 = vmatpush.bf16.msra.mxu0 0
          %1724 = vmatpush.bf16.msra.mxu0 0
          %1725 = vmatpush.bf16.msra.mxu0 0
          %1726 = vmatpush.bf16.msra.mxu0 %v1665
          %1727 = vmatpush.bf16.msra.mxu0 %v1663
          %1728 = vmatpush.bf16.msra.mxu0 %v1661
          %1729 = vmatpush.bf16.msra.mxu0 %v1659
          %1730 = vmatmul.bf16.gmra.mxu0 %v1720
          %v1731 = vpop.f32.mrf.mxu0
          %v1732 = vadd.f32 %v1704, %v1731
          %v1733 = vpop.f32.mrf.mxu0
          %1734 = vdwg.mxu0
          %1735 = vmatpush.bf16.msra.mxu0 0
          %1736 = vmatpush.bf16.msra.mxu0 0
          %1737 = vmatpush.bf16.msra.mxu0 0
          %1738 = vmatpush.bf16.msra.mxu0 0
          %1739 = vmatpush.bf16.msra.mxu0 %v1666
          %1740 = vmatpush.bf16.msra.mxu0 %v1664
          %1741 = vmatpush.bf16.msra.mxu0 %v1662
          %1742 = vmatpush.bf16.msra.mxu0 %v1660
          %1743 = vmatmul.bf16.gmra.mxu0 %v1720
          %v1744 = vpop.f32.mrf.mxu0
          %v1745 = vadd.f32 %v1717, %v1744
          %v1746 = vpop.f32.mrf.mxu0
          %1747 = vdwg.mxu0
          %v1748 = vld [vmem:[%s17] sm:$0x3]
          %v1750 = vperm.slane %v1748, 0
          %v1751 = vperm.slane %v1748, 1
          %v1754 = vadd.f32 %v1732, %v1750
          %v1755 = vadd.f32 %v1745, %v1751
          %v1756 = vxor.u32 %v1754, 2147483648
          %v1757 = vmul.f32 %v1756, 1.442695
          %v1758 = vpow.pop %v1757
          %v1759 = vadd.f32 %v1758, 1.0
          %v1760 = vrcp.pop %v1759
          %v1761 = vmul.f32 %v1759, %v1760
          %v1762 = vsub.f32 1.0, %v1761
          %v1763 = vmul.f32 %v1760, %v1762
          %v1764 = vadd.f32 %v1760, %v1763
          %vm1765 = vweird.f32 %v1759
          %vm1766 = vweird.f32 %v1760
          %vm1767 = vmor %vm1765, %vm1766
          %v1768 = vsel %vm1767, %v1760, %v1764
          %v1769 = vand.u32 2147483647, %v1759
          %vm1770 = vcmp.eq.f32.partialorder %v1769, 8.507059e+37
          %v1771 = vand.u32 %v1759, 2147483648
          %v1772 = vor.u32 1.1754944e-38, %v1771
          %v1773 = vsel %vm1770, %v1772, %v1768
          %v1774 = vmul.f32 1.0, %v1773
          %v1775 = vtanh.pop %v1755
          %v1776 = vxor.u32 %v1755, 2147483648
          %v1777 = vmul.f32 %v1776, 1.442695
          %v1778 = vpow.pop %v1777
          %v1779 = vadd.f32 %v1778, 1.0
          %v1780 = vrcp.pop %v1779
          %v1781 = vmul.f32 %v1779, %v1780
          %v1782 = vsub.f32 1.0, %v1781
          %v1783 = vmul.f32 %v1780, %v1782
          %v1784 = vadd.f32 %v1780, %v1783
          %vm1785 = vweird.f32 %v1779
          %vm1786 = vweird.f32 %v1780
          %vm1787 = vmor %vm1785, %vm1786
          %v1788 = vsel %vm1787, %v1780, %v1784
          %v1789 = vand.u32 2147483647, %v1779
          %vm1790 = vcmp.eq.f32.partialorder %v1789, 8.507059e+37
          %v1791 = vand.u32 %v1779, 2147483648
          %v1792 = vor.u32 1.1754944e-38, %v1791
          %v1793 = vsel %vm1790, %v1792, %v1788
          %v1794 = vmul.f32 1.0, %v1793
          %v1795 = vmul.f32 %v1774, 0.0
          %v1796 = vmul.f32 %v1774, %v1775
          %1798 = vrot.lane.b32.xlu0 %v1796, 64
          %v1799 = vpop.permute.xlu0 %1798
          %v1801 = vadd.f32 %v1795, %v1799
          %v1802 = vtanh.pop %v1801
          %v1803 = vmul.f32 %v1794, %v1802
          %s1804 = scalar_lea.vmem %s15, 128
          %v1805 = vld [vmem:[%s1804] sm:$0xff]
          %v1806 = vld [vmem:[%s1804 + $0x8] sm:$0xff]
          %v1807 = vld [vmem:[%s1804 + $0x10] sm:$0xff]
          %v1808 = vld [vmem:[%s1804 + $0x18] sm:$0xff]
          %v1809 = vld [vmem:[%s1804 + $0x20] sm:$0xff]
          %v1810 = vld [vmem:[%s1804 + $0x28] sm:$0xff]
          %v1811 = vld [vmem:[%s1804 + $0x30] sm:$0xff]
          %v1812 = vld [vmem:[%s1804 + $0x38] sm:$0xff]
          %v1813 = vld [vmem:[%s1804 + $0x40] sm:$0xff]
          %v1814 = vld [vmem:[%s1804 + $0x48] sm:$0xff]
          %v1815 = vld [vmem:[%s1804 + $0x50] sm:$0xff]
          %v1816 = vld [vmem:[%s1804 + $0x58] sm:$0xff]
          %v1817 = vld [vmem:[%s1804 + $0x60] sm:$0xff]
          %v1818 = vld [vmem:[%s1804 + $0x68] sm:$0xff]
          %v1819 = vld [vmem:[%s1804 + $0x70] sm:$0xff]
          %v1820 = vld [vmem:[%s1804 + $0x78] sm:$0xff]
          %v1821 = vpack.c.bf16 %v1803, %v1803
          %v1822 = vpack.c.bf16 %v1807, %v1805
          %v1823 = vpack.c.bf16 %v1808, %v1806
          %v1824 = vpack.c.bf16 %v1811, %v1809
          %v1825 = vpack.c.bf16 %v1812, %v1810
          %v1826 = vpack.c.bf16 %v1815, %v1813
          %v1827 = vpack.c.bf16 %v1816, %v1814
          %v1828 = vpack.c.bf16 %v1819, %v1817
          %v1829 = vpack.c.bf16 %v1820, %v1818
          %s1830 = scalar_lea.vmem %s16, 128
          %v1831 = vld [vmem:[%s1830] sm:$0xff]
          %v1832 = vld [vmem:[%s1830 + $0x8] sm:$0xff]
          %v1833 = vld [vmem:[%s1830 + $0x10] sm:$0xff]
          %v1834 = vld [vmem:[%s1830 + $0x18] sm:$0xff]
          %v1835 = vld [vmem:[%s1830 + $0x20] sm:$0xff]
          %v1836 = vld [vmem:[%s1830 + $0x28] sm:$0xff]
          %v1837 = vld [vmem:[%s1830 + $0x30] sm:$0xff]
          %v1838 = vld [vmem:[%s1830 + $0x38] sm:$0xff]
          %v1839 = vld [vmem:[%s1830 + $0x40] sm:$0xff]
          %v1840 = vld [vmem:[%s1830 + $0x48] sm:$0xff]
          %v1841 = vld [vmem:[%s1830 + $0x50] sm:$0xff]
          %v1842 = vld [vmem:[%s1830 + $0x58] sm:$0xff]
          %v1843 = vld [vmem:[%s1830 + $0x60] sm:$0xff]
          %v1844 = vld [vmem:[%s1830 + $0x68] sm:$0xff]
          %v1845 = vld [vmem:[%s1830 + $0x70] sm:$0xff]
          %v1846 = vld [vmem:[%s1830 + $0x78] sm:$0xff]
          %v1847 = vpack.c.bf16 %v1833, %v1831
          %v1848 = vpack.c.bf16 %v1834, %v1832
          %v1849 = vpack.c.bf16 %v1837, %v1835
          %v1850 = vpack.c.bf16 %v1838, %v1836
          %v1851 = vpack.c.bf16 %v1841, %v1839
          %v1852 = vpack.c.bf16 %v1842, %v1840
          %v1853 = vpack.c.bf16 %v1845, %v1843
          %v1854 = vpack.c.bf16 %v1846, %v1844
          %1855 = vmatpush.bf16.msra.mxu0 0
          %1856 = vmatpush.bf16.msra.mxu0 0
          %1857 = vmatpush.bf16.msra.mxu0 0
          %1858 = vmatpush.bf16.msra.mxu0 0
          %1859 = vmatpush.bf16.msra.mxu0 %v1853
          %1860 = vmatpush.bf16.msra.mxu0 %v1851
          %1861 = vmatpush.bf16.msra.mxu0 %v1849
          %1862 = vmatpush.bf16.msra.mxu0 %v1847
          %1863 = vmatmul.bf16.gmra.mxu0 %v1692
          %v1864 = vpop.f32.mrf.mxu0
          %v1865 = vadd.f32 0.0, %v1864
          %v1866 = vpop.f32.mrf.mxu0
          %1867 = vdwg.mxu0
          %1868 = vmatpush.bf16.msra.mxu0 0
          %1869 = vmatpush.bf16.msra.mxu0 0
          %1870 = vmatpush.bf16.msra.mxu0 0
          %1871 = vmatpush.bf16.msra.mxu0 0
          %1872 = vmatpush.bf16.msra.mxu0 %v1854
          %1873 = vmatpush.bf16.msra.mxu0 %v1852
          %1874 = vmatpush.bf16.msra.mxu0 %v1850
          %1875 = vmatpush.bf16.msra.mxu0 %v1848
          %1876 = vmatmul.bf16.gmra.mxu0 %v1692
          %v1877 = vpop.f32.mrf.mxu0
          %v1878 = vadd.f32 0.0, %v1877
          %v1879 = vpop.f32.mrf.mxu0
          %1880 = vdwg.mxu0
          %1882 = vrot.lane.b32.xlu0 %v1821, 64
          %v1883 = vpop.permute.xlu0 %1882
          %v1885 = vsel %vm733, %v1883, 0
          %1887 = vmatpush.bf16.msra.mxu0 0
          %1888 = vmatpush.bf16.msra.mxu0 0
          %1889 = vmatpush.bf16.msra.mxu0 0
          %1890 = vmatpush.bf16.msra.mxu0 0
          %1891 = vmatpush.bf16.msra.mxu0 %v1828
          %1892 = vmatpush.bf16.msra.mxu0 %v1826
          %1893 = vmatpush.bf16.msra.mxu0 %v1824
          %1894 = vmatpush.bf16.msra.mxu0 %v1822
          %1895 = vmatmul.bf16.gmra.mxu0 %v1885
          %v1896 = vpop.f32.mrf.mxu0
          %v1897 = vadd.f32 %v1865, %v1896
          %v1898 = vpop.f32.mrf.mxu0
          %1899 = vdwg.mxu0
          %1900 = vmatpush.bf16.msra.mxu0 0
          %1901 = vmatpush.bf16.msra.mxu0 0
          %1902 = vmatpush.bf16.msra.mxu0 0
          %1903 = vmatpush.bf16.msra.mxu0 0
          %1904 = vmatpush.bf16.msra.mxu0 %v1829
          %1905 = vmatpush.bf16.msra.mxu0 %v1827
          %1906 = vmatpush.bf16.msra.mxu0 %v1825
          %1907 = vmatpush.bf16.msra.mxu0 %v1823
          %1908 = vmatmul.bf16.gmra.mxu0 %v1885
          %v1909 = vpop.f32.mrf.mxu0
          %v1910 = vadd.f32 %v1878, %v1909
          %v1911 = vpop.f32.mrf.mxu0
          %1912 = vdwg.mxu0
          %s1913 = scalar_lea.vmem %s17, 2
          %v1914 = vld [vmem:[%s1913] sm:$0x3]
          %v1916 = vperm.slane %v1914, 0
          %v1917 = vperm.slane %v1914, 1
          %v1920 = vadd.f32 %v1897, %v1916
          %v1921 = vadd.f32 %v1910, %v1917
          %v1922 = vxor.u32 %v1920, 2147483648
          %v1923 = vmul.f32 %v1922, 1.442695
          %v1924 = vpow.pop %v1923
          %v1925 = vadd.f32 %v1924, 1.0
          %v1926 = vrcp.pop %v1925
          %v1927 = vmul.f32 %v1925, %v1926
          %v1928 = vsub.f32 1.0, %v1927
          %v1929 = vmul.f32 %v1926, %v1928
          %v1930 = vadd.f32 %v1926, %v1929
          %vm1931 = vweird.f32 %v1925
          %vm1932 = vweird.f32 %v1926
          %vm1933 = vmor %vm1931, %vm1932
          %v1934 = vsel %vm1933, %v1926, %v1930
          %v1935 = vand.u32 2147483647, %v1925
          %vm1936 = vcmp.eq.f32.partialorder %v1935, 8.507059e+37
          %v1937 = vand.u32 %v1925, 2147483648
          %v1938 = vor.u32 1.1754944e-38, %v1937
          %v1939 = vsel %vm1936, %v1938, %v1934
          %v1940 = vmul.f32 1.0, %v1939
          %v1941 = vtanh.pop %v1921
          %v1942 = vxor.u32 %v1921, 2147483648
          %v1943 = vmul.f32 %v1942, 1.442695
          %v1944 = vpow.pop %v1943
          %v1945 = vadd.f32 %v1944, 1.0
          %v1946 = vrcp.pop %v1945
          %v1947 = vmul.f32 %v1945, %v1946
          %v1948 = vsub.f32 1.0, %v1947
          %v1949 = vmul.f32 %v1946, %v1948
          %v1950 = vadd.f32 %v1946, %v1949
          %vm1951 = vweird.f32 %v1945
          %vm1952 = vweird.f32 %v1946
          %vm1953 = vmor %vm1951, %vm1952
          %v1954 = vsel %vm1953, %v1946, %v1950
          %v1955 = vand.u32 2147483647, %v1945
          %vm1956 = vcmp.eq.f32.partialorder %v1955, 8.507059e+37
          %v1957 = vand.u32 %v1945, 2147483648
          %v1958 = vor.u32 1.1754944e-38, %v1957
          %v1959 = vsel %vm1956, %v1958, %v1954
          %v1960 = vmul.f32 1.0, %v1959
          %v1961 = vmul.f32 %v1940, 0.0
          %v1962 = vmul.f32 %v1940, %v1941
          %1964 = vrot.lane.b32.xlu0 %v1962, 64
          %v1965 = vpop.permute.xlu0 %1964
          %v1967 = vadd.f32 %v1961, %v1965
          %v1968 = vtanh.pop %v1967
          %v1969 = vmul.f32 %v1960, %v1968
          %v1970 = vadd.f32 %v1969, 0.0
          %v1971 = vpack.c.bf16 %v1642, %v1642
          %1972 = vmatpush.bf16.msra.mxu0 0
          %1973 = vmatpush.bf16.msra.mxu0 0
          %1974 = vmatpush.bf16.msra.mxu0 0
          %1975 = vmatpush.bf16.msra.mxu0 0
          %1976 = vmatpush.bf16.msra.mxu0 %v1689
          %1977 = vmatpush.bf16.msra.mxu0 %v1687
          %1978 = vmatpush.bf16.msra.mxu0 %v1685
          %1979 = vmatpush.bf16.msra.mxu0 %v1683
          %1980 = vmatmul.bf16.gmra.mxu0 %v1885
          %v1981 = vpop.f32.mrf.mxu0
          %v1982 = vadd.f32 0.0, %v1981
          %v1983 = vpop.f32.mrf.mxu0
          %1984 = vdwg.mxu0
          %1985 = vmatpush.bf16.msra.mxu0 0
          %1986 = vmatpush.bf16.msra.mxu0 0
          %1987 = vmatpush.bf16.msra.mxu0 0
          %1988 = vmatpush.bf16.msra.mxu0 0
          %1989 = vmatpush.bf16.msra.mxu0 %v1690
          %1990 = vmatpush.bf16.msra.mxu0 %v1688
          %1991 = vmatpush.bf16.msra.mxu0 %v1686
          %1992 = vmatpush.bf16.msra.mxu0 %v1684
          %1993 = vmatmul.bf16.gmra.mxu0 %v1885
          %v1994 = vpop.f32.mrf.mxu0
          %v1995 = vadd.f32 0.0, %v1994
          %v1996 = vpop.f32.mrf.mxu0
          %1997 = vdwg.mxu0
          %v1999 = vsel %vm733, %v1971, 0
          %2001 = vmatpush.bf16.msra.mxu0 0
          %2002 = vmatpush.bf16.msra.mxu0 0
          %2003 = vmatpush.bf16.msra.mxu0 0
          %2004 = vmatpush.bf16.msra.mxu0 0
          %2005 = vmatpush.bf16.msra.mxu0 %v1665
          %2006 = vmatpush.bf16.msra.mxu0 %v1663
          %2007 = vmatpush.bf16.msra.mxu0 %v1661
          %2008 = vmatpush.bf16.msra.mxu0 %v1659
          %2009 = vmatmul.bf16.gmra.mxu0 %v1999
          %v2010 = vpop.f32.mrf.mxu0
          %v2011 = vadd.f32 %v1982, %v2010
          %v2012 = vpop.f32.mrf.mxu0
          %2013 = vdwg.mxu0
          %2014 = vmatpush.bf16.msra.mxu0 0
          %2015 = vmatpush.bf16.msra.mxu0 0
          %2016 = vmatpush.bf16.msra.mxu0 0
          %2017 = vmatpush.bf16.msra.mxu0 0
          %2018 = vmatpush.bf16.msra.mxu0 %v1666
          %2019 = vmatpush.bf16.msra.mxu0 %v1664
          %2020 = vmatpush.bf16.msra.mxu0 %v1662
          %2021 = vmatpush.bf16.msra.mxu0 %v1660
          %2022 = vmatmul.bf16.gmra.mxu0 %v1999
          %v2023 = vpop.f32.mrf.mxu0
          %v2024 = vadd.f32 %v1995, %v2023
          %v2025 = vpop.f32.mrf.mxu0
          %2026 = vdwg.mxu0
          %v2027 = vadd.f32 %v2011, %v1750
          %v2028 = vadd.f32 %v2024, %v1751
          %v2029 = vxor.u32 %v2027, 2147483648
          %v2030 = vmul.f32 %v2029, 1.442695
          %v2031 = vpow.pop %v2030
          %v2032 = vadd.f32 %v2031, 1.0
          %v2033 = vrcp.pop %v2032
          %v2034 = vmul.f32 %v2032, %v2033
          %v2035 = vsub.f32 1.0, %v2034
          %v2036 = vmul.f32 %v2033, %v2035
          %v2037 = vadd.f32 %v2033, %v2036
          %vm2038 = vweird.f32 %v2032
          %vm2039 = vweird.f32 %v2033
          %vm2040 = vmor %vm2038, %vm2039
          %v2041 = vsel %vm2040, %v2033, %v2037
          %v2042 = vand.u32 2147483647, %v2032
          %vm2043 = vcmp.eq.f32.partialorder %v2042, 8.507059e+37
          %v2044 = vand.u32 %v2032, 2147483648
          %v2045 = vor.u32 1.1754944e-38, %v2044
          %v2046 = vsel %vm2043, %v2045, %v2041
          %v2047 = vmul.f32 1.0, %v2046
          %v2048 = vtanh.pop %v2028
          %v2049 = vxor.u32 %v2028, 2147483648
          %v2050 = vmul.f32 %v2049, 1.442695
          %v2051 = vpow.pop %v2050
          %v2052 = vadd.f32 %v2051, 1.0
          %v2053 = vrcp.pop %v2052
          %v2054 = vmul.f32 %v2052, %v2053
          %v2055 = vsub.f32 1.0, %v2054
          %v2056 = vmul.f32 %v2053, %v2055
          %v2057 = vadd.f32 %v2053, %v2056
          %vm2058 = vweird.f32 %v2052
          %vm2059 = vweird.f32 %v2053
          %vm2060 = vmor %vm2058, %vm2059
          %v2061 = vsel %vm2060, %v2053, %v2057
          %v2062 = vand.u32 2147483647, %v2052
          %vm2063 = vcmp.eq.f32.partialorder %v2062, 8.507059e+37
          %v2064 = vand.u32 %v2052, 2147483648
          %v2065 = vor.u32 1.1754944e-38, %v2064
          %v2066 = vsel %vm2063, %v2065, %v2061
          %v2067 = vmul.f32 1.0, %v2066
          %v2068 = vmul.f32 %v2047, %v1801
          %v2069 = vmul.f32 %v2047, %v2048
          %2071 = vrot.lane.b32.xlu0 %v2069, 64
          %v2072 = vpop.permute.xlu0 %2071
          %v2074 = vadd.f32 %v2068, %v2072
          %v2075 = vtanh.pop %v2074
          %v2076 = vmul.f32 %v2067, %v2075
          %v2077 = vpack.c.bf16 %v2076, %v2076
          %v2078 = vpack.c.bf16 %v1969, %v1969
          %2080 = vrot.lane.b32.xlu0 %v2078, 64
          %v2081 = vpop.permute.xlu0 %2080
          %v2083 = vsel %vm733, %v2081, 0
          %2085 = vmatpush.bf16.msra.mxu0 0
          %2086 = vmatpush.bf16.msra.mxu0 0
          %2087 = vmatpush.bf16.msra.mxu0 0
          %2088 = vmatpush.bf16.msra.mxu0 0
          %2089 = vmatpush.bf16.msra.mxu0 %v1853
          %2090 = vmatpush.bf16.msra.mxu0 %v1851
          %2091 = vmatpush.bf16.msra.mxu0 %v1849
          %2092 = vmatpush.bf16.msra.mxu0 %v1847
          %2093 = vmatmul.bf16.gmra.mxu0 %v2083
          %v2094 = vpop.f32.mrf.mxu0
          %v2095 = vadd.f32 0.0, %v2094
          %v2096 = vpop.f32.mrf.mxu0
          %2097 = vdwg.mxu0
          %2098 = vmatpush.bf16.msra.mxu0 0
          %2099 = vmatpush.bf16.msra.mxu0 0
          %2100 = vmatpush.bf16.msra.mxu0 0
          %2101 = vmatpush.bf16.msra.mxu0 0
          %2102 = vmatpush.bf16.msra.mxu0 %v1854
          %2103 = vmatpush.bf16.msra.mxu0 %v1852
          %2104 = vmatpush.bf16.msra.mxu0 %v1850
          %2105 = vmatpush.bf16.msra.mxu0 %v1848
          %2106 = vmatmul.bf16.gmra.mxu0 %v2083
          %v2107 = vpop.f32.mrf.mxu0
          %v2108 = vadd.f32 0.0, %v2107
          %v2109 = vpop.f32.mrf.mxu0
          %2110 = vdwg.mxu0
          %2112 = vrot.lane.b32.xlu0 %v2077, 64
          %v2113 = vpop.permute.xlu0 %2112
          %v2115 = vsel %vm733, %v2113, 0
          %2117 = vmatpush.bf16.msra.mxu0 0
          %2118 = vmatpush.bf16.msra.mxu0 0
          %2119 = vmatpush.bf16.msra.mxu0 0
          %2120 = vmatpush.bf16.msra.mxu0 0
          %2121 = vmatpush.bf16.msra.mxu0 %v1828
          %2122 = vmatpush.bf16.msra.mxu0 %v1826
          %2123 = vmatpush.bf16.msra.mxu0 %v1824
          %2124 = vmatpush.bf16.msra.mxu0 %v1822
          %2125 = vmatmul.bf16.gmra.mxu0 %v2115
          %v2126 = vpop.f32.mrf.mxu0
          %v2127 = vadd.f32 %v2095, %v2126
          %v2128 = vpop.f32.mrf.mxu0
          %2129 = vdwg.mxu0
          %2130 = vmatpush.bf16.msra.mxu0 0
          %2131 = vmatpush.bf16.msra.mxu0 0
          %2132 = vmatpush.bf16.msra.mxu0 0
          %2133 = vmatpush.bf16.msra.mxu0 0
          %2134 = vmatpush.bf16.msra.mxu0 %v1829
          %2135 = vmatpush.bf16.msra.mxu0 %v1827
          %2136 = vmatpush.bf16.msra.mxu0 %v1825
          %2137 = vmatpush.bf16.msra.mxu0 %v1823
          %2138 = vmatmul.bf16.gmra.mxu0 %v2115
          %v2139 = vpop.f32.mrf.mxu0
          %v2140 = vadd.f32 %v2108, %v2139
          %v2141 = vpop.f32.mrf.mxu0
          %2142 = vdwg.mxu0
          %v2143 = vadd.f32 %v2127, %v1916
          %v2144 = vadd.f32 %v2140, %v1917
          %v2145 = vxor.u32 %v2143, 2147483648
          %v2146 = vmul.f32 %v2145, 1.442695
          %v2147 = vpow.pop %v2146
          %v2148 = vadd.f32 %v2147, 1.0
          %v2149 = vrcp.pop %v2148
          %v2150 = vmul.f32 %v2148, %v2149
          %v2151 = vsub.f32 1.0, %v2150
          %v2152 = vmul.f32 %v2149, %v2151
          %v2153 = vadd.f32 %v2149, %v2152
          %vm2154 = vweird.f32 %v2148
          %vm2155 = vweird.f32 %v2149
          %vm2156 = vmor %vm2154, %vm2155
          %v2157 = vsel %vm2156, %v2149, %v2153
          %v2158 = vand.u32 2147483647, %v2148
          %vm2159 = vcmp.eq.f32.partialorder %v2158, 8.507059e+37
          %v2160 = vand.u32 %v2148, 2147483648
          %v2161 = vor.u32 1.1754944e-38, %v2160
          %v2162 = vsel %vm2159, %v2161, %v2157
          %v2163 = vmul.f32 1.0, %v2162
          %v2164 = vtanh.pop %v2144
          %v2165 = vxor.u32 %v2144, 2147483648
          %v2166 = vmul.f32 %v2165, 1.442695
          %v2167 = vpow.pop %v2166
          %v2168 = vadd.f32 %v2167, 1.0
          %v2169 = vrcp.pop %v2168
          %v2170 = vmul.f32 %v2168, %v2169
          %v2171 = vsub.f32 1.0, %v2170
          %v2172 = vmul.f32 %v2169, %v2171
          %v2173 = vadd.f32 %v2169, %v2172
          %vm2174 = vweird.f32 %v2168
          %vm2175 = vweird.f32 %v2169
          %vm2176 = vmor %vm2174, %vm2175
          %v2177 = vsel %vm2176, %v2169, %v2173
          %v2178 = vand.u32 2147483647, %v2168
          %vm2179 = vcmp.eq.f32.partialorder %v2178, 8.507059e+37
          %v2180 = vand.u32 %v2168, 2147483648
          %v2181 = vor.u32 1.1754944e-38, %v2180
          %v2182 = vsel %vm2179, %v2181, %v2177
          %v2183 = vmul.f32 1.0, %v2182
          %v2184 = vmul.f32 %v2163, %v1967
          %v2185 = vmul.f32 %v2163, %v2164
          %2187 = vrot.lane.b32.xlu0 %v2185, 64
          %v2188 = vpop.permute.xlu0 %2187
          %v2190 = vadd.f32 %v2184, %v2188
          %v2191 = vtanh.pop %v2190
          %v2192 = vmul.f32 %v2183, %v2191
          %v2193 = vadd.f32 %v1970, %v2192
          %v2194 = vmul.f32 %v2193, 0.5
          %2196 = vrot.lane.b32.xlu0 %v2194, 64
          %v2197 = vpop.permute.xlu0 %2196
          %2199 = vst.msk [vmem:[#allocation3] sm:$0xff] %vm733, %v2197
        $region100: #{_lambda_.3} parent=91 // pred_fallthru
          _
        // Predicated region
        $region101: #{_lambda_.3} parent=91 // pred_check
          %p2200 = pneg %p476
        $region102: #{_lambda_.3} parent=91 // pred_check_branch
          %2202 = sbr.rel (%p2200) target = $region104
        $region103: #{_lambda_.3} parent=91 // pred_region
          %2204 = vsyncadd [#allocation4], 0
          %s2206 = sshll.u32 [#allocation3], 4
          %s2207 = int_to_ptr.vmem [resolvable:$true] %s2206
          %s2208 = sshll.u32 %s18, 4
          %s2209 = int_to_ptr.hbm [resolvable:$true] %s2208
          %2211 = dma.vmem_to_hbm [thread:$0]  %s2207, 128, %s2209, [#allocation4]
        $region104: #{_lambda_.3} parent=91 // pred_fallthru
          _
        // Predicated region
        $region105: #{_lambda_.3} parent=91 // pred_check
          %p2212 = pneg %p476
        $region106: #{_lambda_.3} parent=91 // pred_check_branch
          %2214 = sbr.rel (%p2212) target = $region108
        $region107: #{_lambda_.3} parent=91 // pred_region
          %2216 = dma.done [#allocation4], 128
        $region108: #{_lambda_.3} parent=91 // pred_fallthru
          _
      $region92: #{_lambda_.3} parent=5 // pred_fallthru
        _
      %p2217 = scmp.le.s32.totalorder 2, %s25
      // Predicated region
      $region109: #{_lambda_.3} parent=5 // pred_check
        %p2218 = pneg %p2217
      $region110: #{_lambda_.3} parent=5 // pred_check_branch
        %2220 = sbr.rel (%p2218) target = $region112
      $region111: #{_lambda_.3} parent=5 // pred_region
        %s2221 = ssub.s32 %s25, 2
      $region112: #{_lambda_.3} parent=5 // pred_fallthru
        _
    $region6: #{_lambda_.3} parent=1 // loop_footer
      %s29 = sadd.s32 1, %s25
    $region7: #{_lambda_.3} parent=1 // loop_footer_branch
      %24 = sbr.rel target = $region3
    $region8: #{_lambda_.3} parent=1 // loop_exit
      _
    %2222 = vsyncpa [#allocation4], 1
    %s2223 = scalar_lea.sflag [#allocation4], 1
    %2224 = vsyncpa %s2223, 1

</llo_original>
